<compile_context>
chip_gen: v6e
topology: v6e:2x2x1
jax: 0.10.0
libtpu: 0.0.40
codegen_flags: <defaults>
</compile_context>

<pallas_src>
import jax
import jax.numpy as jnp
from jax.experimental import pallas as pl
from jax.experimental.pallas import tpu as pltpu

BN_EPS = 1e-5
KERNEL_SIZES = [8, 4, 3]
STRIDES = [4, 2, 1]
CONV_CHANNELS = [(4, 16), (16, 32), (32, 32)]   # (in, out) per conv layer
NN_SIZE = 512
CONV_OUT_HW = 7                                  # spatial size after the 3 convs on 84x84
LIN_IN = CONV_OUT_HW * CONV_OUT_HW * 32          # 1568
VMEM_LIMIT_BYTES = 32 * 1024 * 1024
ROW_ALIGN = 16                                   # bf16 packs 2 rows/sublane -> min (16,128) tile
_MIN_ROWS_FOR_SPLIT = 256                        # only split into >=2 tiles when there is work


# ---------------------------------------------------------------------------
# small helpers
# ---------------------------------------------------------------------------
def _round_up(n, m):
    return ((n + m - 1) // m) * m


def _pad_axis(x, axis, target):
    pad = target - x.shape[axis]
    if pad <= 0:
        return x
    widths = [(0, 0)] * x.ndim
    widths[axis] = (0, pad)
    return jnp.pad(x, widths)


def _pick_row_tile(M, tm):
    """MXU-aligned row tile minimising padding; >=2 grid steps (v7x megacore) when M is large."""
    n_tiles = -(-M // tm)
    if n_tiles == 1 and M >= _MIN_ROWS_FOR_SPLIT:
        n_tiles = 2
    tm_eff = _round_up(-(-M // n_tiles), ROW_ALIGN)
    n_tiles = -(-M // tm_eff)
    return tm_eff, tm_eff * n_tiles


def _im2col(x, k, s):
    """Conv patch extraction in the wrapper (pure layout work, no compute).

    Feature order is (kh, kw, c) with c fastest, matching fold_params.  For k == 2*s
    (conv1, conv2) patches are assembled from 4 large slices + 2 concats instead of
    k*k tiny C-lane slices.  Returns (B*OH*OW, k*k*C), (OH, OW).
    """
    B, H, W, C = x.shape
    OH = (H - k) // s + 1
    OW = (W - k) // s + 1
    if k == 2 * s and H % s == 0 and W % s == 0:
        xg = x.reshape(B, H // s, s, W, C)
        xh = jnp.concatenate([xg[:, :OH], xg[:, 1:OH + 1]], axis=2)               # (B,OH,k,W,C)
        xg = xh.reshape(B, OH, k, W // s, s, C)
        xw = jnp.concatenate([xg[:, :, :, :OW], xg[:, :, :, 1:OW + 1]], axis=4)   # (B,OH,k,OW,k,C)
        patches = jnp.transpose(xw, (0, 1, 3, 2, 4, 5))                           # (B,OH,OW,k,k,C)
    else:
        cols = [x[:, kh:kh + (OH - 1) * s + 1:s, kw:kw + (OW - 1) * s + 1:s, :]
                for kh in range(k) for kw in range(k)]
        patches = jnp.concatenate(cols, axis=-1)                                  # (B,OH,OW,k*k*C)
    return patches.reshape(B * OH * OW, k * k * C), (OH, OW)


# ---------------------------------------------------------------------------
# Pallas kernels
# ---------------------------------------------------------------------------
def _conv_gemm_kernel(x_ref, w_ref, b_ref, o_ref):
    """Fused conv-as-GEMM + folded-BN bias + ReLU for one row tile (f32 epilogue)."""
    acc = jnp.dot(x_ref[...], w_ref[...], preferred_element_type=jnp.float32)
    o_ref[...] = jnp.maximum(acc + b_ref[...], 0.0).astype(o_ref.dtype)


def _fc_heads_kernel(x_ref, w1_ref, b1_ref, wh_ref, bh_ref, hl_ref, heads_ref):
    """fc1 -> rl_latent, ReLU, then all heads (p|v|a|b|q, Q-combine folded into the weights)."""
    hl = jnp.dot(x_ref[...], w1_ref[...], preferred_element_type=jnp.float32) + b1_ref[...]
    hl_ref[...] = hl.astype(hl_ref.dtype)
    h = jnp.maximum(hl, 0.0).astype(wh_ref.dtype)
    heads_ref[...] = (jnp.dot(h, wh_ref[...], preferred_element_type=jnp.float32)
                      + bh_ref[...]).astype(heads_ref.dtype)


# ---------------------------------------------------------------------------
# pallas_call wrappers (row padding + tiling)
# ---------------------------------------------------------------------------
def _conv_gemm(x, w, b, *, out_dtype, tm):
    M, _ = x.shape
    Kp, Np = w.shape
    x = _pad_axis(x, 1, Kp)                       # lane-dense K
    tm_eff, Mp = _pick_row_tile(M, tm)
    x = _pad_axis(x, 0, Mp)
    out = pl.pallas_call(
        _conv_gemm_kernel,
        out_shape=jax.ShapeDtypeStruct((Mp, Np), out_dtype),
        grid=(Mp // tm_eff,),
        in_specs=[
            pl.BlockSpec((tm_eff, Kp), lambda i: (i, 0)),
            pl.BlockSpec((Kp, Np), lambda i: (0, 0)),     # constant index -> stays resident
            pl.BlockSpec((1, Np), lambda i: (0, 0)),
        ],
        out_specs=pl.BlockSpec((tm_eff, Np), lambda i: (i, 0)),
        compiler_params=pltpu.CompilerParams(
            dimension_semantics=("parallel",), vmem_limit_bytes=VMEM_LIMIT_BYTES),
    )(x, w, b)
    return out[:M]


def _fc_heads(x, w1, b1, wh, bh, *, tm):
    M, _ = x.shape
    Kp, N1 = w1.shape
    _, Nh = wh.shape
    x = _pad_axis(x, 1, Kp)
    tm_eff, Mp = _pick_row_tile(M, tm)
    x = _pad_axis(x, 0, Mp)
    hl, heads = pl.pallas_call(
        _fc_heads_kernel,
        out_shape=(jax.ShapeDtypeStruct((Mp, N1), jnp.float32),
                   jax.ShapeDtypeStruct((Mp, Nh), jnp.float32)),
        grid=(Mp // tm_eff,),
        in_specs=[
            pl.BlockSpec((tm_eff, Kp), lambda i: (i, 0)),
            pl.BlockSpec((Kp, N1), lambda i: (0, 0)),
            pl.BlockSpec((1, N1), lambda i: (0, 0)),
            pl.BlockSpec((N1, Nh), lambda i: (0, 0)),
            pl.BlockSpec((1, Nh), lambda i: (0, 0)),
        ],
        out_specs=(pl.BlockSpec((tm_eff, N1), lambda i: (i, 0)),
                   pl.BlockSpec((tm_eff, Nh), lambda i: (i, 0))),
        compiler_params=pltpu.CompilerParams(
            dimension_semantics=("parallel",), vmem_limit_bytes=VMEM_LIMIT_BYTES),
    )(x, w1, b1, wh, bh)
    return hl[:M], heads[:M]


# ---------------------------------------------------------------------------
# parameters
# ---------------------------------------------------------------------------
def init_params(key, action_num):
    """Deterministic synthetic parameters with the module's shapes (eval-mode BN stats)."""
    keys = iter(jax.random.split(key, 32))
    params = {}
    for i, (cin, cout) in enumerate(CONV_CHANNELS, start=1):
        k = KERNEL_SIZES[i - 1]
        fan_in = cin * k * k
        w = jax.random.normal(next(keys), (cout, cin, k, k), jnp.float32) / jnp.sqrt(fan_in)
        b = 0.1 * jax.random.normal(next(keys), (cout,), jnp.float32)
        gamma = 1.0 + 0.1 * jax.random.normal(next(keys), (cout,), jnp.float32)
        beta = 0.1 * jax.random.normal(next(keys), (cout,), jnp.float32)
        mean = 0.1 * jax.random.normal(next(keys), (cout,), jnp.float32)
        var = jnp.abs(1.0 + 0.1 * jax.random.normal(next(keys), (cout,), jnp.float32))
        params[f'conv{i}'] = (w, b)
        params[f'bn{i}'] = (gamma, beta, mean, var)
    w = jax.random.normal(next(keys), (NN_SIZE, LIN_IN), jnp.float32) / jnp.sqrt(LIN_IN)
    b = 0.1 * jax.random.normal(next(keys), (NN_SIZE,), jnp.float32)
    params['fc1'] = (w, b)
    for name, out in (('head_p', action_num), ('head_v', 1),
                      ('head_a', action_num), ('head_b', 1)):
        w = jax.random.normal(next(keys), (out, NN_SIZE), jnp.float32) / jnp.sqrt(NN_SIZE)
        b = 0.1 * jax.random.normal(next(keys), (out,), jnp.float32)
        params[name] = (w, b)
    return params


def fold_params(params, *, conv_dtype=jnp.bfloat16, fc_dtype=jnp.float32):
    """One-time weight preparation (hoisted out of the forward pass).

      * eval-mode BN folded into each conv GEMM weight + a single fused bias row,
      * conv weights reordered to the (kh, kw, c) im2col order and zero-padded lane-dense,
      * fc1 K rows permuted to NHWC-flatten order (no runtime transpose before fc1),
      * heads packed into one 128-lane slab with the dueling-Q combine folded in
        (q = b + a - sum(a) is linear in the latent -> just extra weight columns).
    """
    folded = {}
    for i in (1, 2, 3):
        w, b = params[f'conv{i}']                         # (O, I, k, k), (O,)
        g, be, m, v = params[f'bn{i}']
        scale = g / jnp.sqrt(v + BN_EPS)
        k = w.shape[-1]
        w2 = jnp.transpose(w, (2, 3, 1, 0)).reshape(k * k * w.shape[1], w.shape[0])
        w2 = w2 * scale[None, :]                          # BN scale folded into weights
        bias = (b - m) * scale + be                       # single fused bias row
        Kp = _round_up(w2.shape[0], 128)
        Np = _round_up(w2.shape[1], 128)
        folded[f'conv{i}'] = (
            _pad_axis(_pad_axis(w2, 0, Kp), 1, Np).astype(conv_dtype),
            _pad_axis(bias[None, :], 1, Np).astype(jnp.float32))

    # fc1: permute K rows from torch NCHW-flatten (c, oh, ow) to NHWC-flatten (oh, ow, c)
    w, b = params['fc1']                                  # (512, 1568)
    wt = w.T.reshape(CONV_CHANNELS[-1][1], CONV_OUT_HW, CONV_OUT_HW, NN_SIZE)
    wt = jnp.transpose(wt, (1, 2, 0, 3)).reshape(LIN_IN, NN_SIZE)
    folded['fc1'] = (_pad_axis(wt, 0, _round_up(LIN_IN, 128)).astype(fc_dtype),
                     b[None, :].astype(jnp.float32))

    # heads packed: [p | v | a | b | q], dueling-Q combine folded into the weights.
    wp, bp = params['head_p']
    wv, bv = params['head_v']
    wa, ba = params['head_a']
    wb, bb = params['head_b']
    wq = wb.T + wa.T - jnp.sum(wa.T, axis=1, keepdims=True)      # (512, A)
    bq = bb + ba - jnp.sum(ba)                                   # (A,)
    wh = jnp.concatenate([wp.T, wv.T, wa.T, wb.T, wq], axis=1)   # (512, 3A+2)
    bh = jnp.concatenate([bp, bv, ba, bb, bq])[None, :]
    Nh = _round_up(wh.shape[1], 128)
    folded['heads'] = (_pad_axis(wh, 1, Nh).astype(fc_dtype),
                       _pad_axis(bh, 1, Nh).astype(jnp.float32))
    return folded


# ---------------------------------------------------------------------------
# forward
# ---------------------------------------------------------------------------
def convnet_forward(o, folded, *, action_num, tm=256):
    """Forward pass matching ConvNet.forward (eval-mode BN); `folded` comes from fold_params."""
    conv_dtype = folded['conv1'][0].dtype
    fc_dtype = folded['fc1'][0].dtype
    B = o.shape[0]
    x = jnp.transpose(o, (0, 2, 3, 1)).astype(conv_dtype)        # NHWC

    for idx in range(3):
        k, s = KERNEL_SIZES[idx], STRIDES[idx]
        c_out = CONV_CHANNELS[idx][1]
        patches, (OH, OW) = _im2col(x, k, s)
        w, b = folded[f'conv{idx + 1}']
        y = _conv_gemm(patches, w, b, out_dtype=conv_dtype, tm=tm)
        x = y[:, :c_out].reshape(B, OH, OW, c_out)

    feat = x.reshape(B, LIN_IN).astype(fc_dtype)                 # NHWC flatten (fc1 rows permuted)
    w1, b1 = folded['fc1']
    wh, bh = folded['heads']
    hl, heads = _fc_heads(feat, w1, b1, wh, bh, tm=tm)

    A = action_num
    return {'policy': heads[:, :A],
            'value': heads[:, A:A + 1],
            'advantage_for_q': heads[:, A + 1:2 * A + 1],
            'qvalue': heads[:, 2 * A + 2:3 * A + 2],
            'rl_latent': hl}


# ---------------------------------------------------------------------------
# pure-JAX reference (eval-mode BN) for validation
# ---------------------------------------------------------------------------
def reference_forward(o, params, action_num):
    x = o
    for i in range(1, 4):
        w, b = params[f'conv{i}']
        g, be, m, v = params[f'bn{i}']
        s = STRIDES[i - 1]
        x = jax.lax.conv_general_dilated(
            x, w, window_strides=(s, s), padding='VALID',
            dimension_numbers=('NCHW', 'OIHW', 'NCHW'),
            precision=jax.lax.Precision.HIGHEST) + b[None, :, None, None]
        x = (x - m[None, :, None, None]) / jnp.sqrt(v[None, :, None, None] + BN_EPS) \
            * g[None, :, None, None] + be[None, :, None, None]
        x = jnp.maximum(x, 0.0)
    feat = x.reshape(x.shape[0], -1)
    w, b = params['fc1']
    hl = feat @ w.T + b
    h = jnp.maximum(hl, 0.0)

    def head(name):
        wn, bn = params[name]
        return h @ wn.T + bn

    p, v, a, bq = head('head_p'), head('head_v'), head('head_a'), head('head_b')
    q = bq + a - jnp.sum(a, axis=-1, keepdims=True)
    return {'policy': p, 'value': v, 'advantage_for_q': a, 'qvalue': q, 'rl_latent': hl}


if __name__ == "__main__":
    key = jax.random.PRNGKey(0)
    k1, k2 = jax.random.split(key)

    B, C, H, W = 2, 4, 84, 84          # C * neighbor_frames = 4, 84x84 frames
    action_num = 2                     # CartPole action count

    o = jax.random.normal(k1, (B, C, H, W), dtype=jnp.float32)
    params = init_params(k2, action_num)

    ref = reference_forward(o, params, action_num)
    keys_out = ('policy', 'value', 'advantage_for_q', 'qvalue', 'rl_latent')

    fwd = jax.jit(convnet_forward, static_argnames=('action_num', 'tm'))

    # f32 everywhere: tight semantic check of the fused kernels.
    folded32 = fold_params(params, conv_dtype=jnp.float32, fc_dtype=jnp.float32)
    out32 = jax.block_until_ready(fwd(o, folded32, action_num=action_num))
    for name in keys_out:
        assert out32[name].shape == ref[name].shape, (name, out32[name].shape, ref[name].shape)
        err = float(jnp.max(jnp.abs(out32[name] - ref[name])))
        assert jnp.allclose(out32[name], ref[name], atol=2e-2, rtol=2e-2), (name, err)

    # Fast path: bf16 conv GEMMs (f32 accumulate/epilogue), f32 fc/head GEMMs.
    folded16 = fold_params(params, conv_dtype=jnp.bfloat16, fc_dtype=jnp.float32)
    out16 = jax.block_until_ready(fwd(o, folded16, action_num=action_num))
    for name in keys_out:
        err = float(jnp.max(jnp.abs(out16[name] - ref[name])))
        assert jnp.allclose(out16[name], ref[name], atol=1.5e-1, rtol=1.5e-1), (name, err)

    print("KERNEL_OK")
</pallas_src>

<mosaic_0001>
module attributes {stable_mosaic.version = 11 : i64} {
  func.func @_conv_gemm_kernel(%arg0: i32, %arg1: memref<208x256xf32, #tpu.memory_space<vmem>>, %arg2: memref<256x128xf32, #tpu.memory_space<vmem>>, %arg3: memref<1x128xf32, #tpu.memory_space<vmem>>, %arg4: memref<208x128xf32, #tpu.memory_space<vmem>>) attributes {dimension_semantics = [#tpu.dimension_semantics<parallel>], iteration_bounds = array<i64: 4>, scalar_prefetch = 0 : i64, scratch_operands = 0 : i64, tpu.core_type = #tpu.core_type<tc>, window_params = [{transform_indices = @transform_0, window_bounds = array<i64: 208, 256>}, {pipeline_mode = #tpu.pipeline_mode<synchronous>, transform_indices = @transform_1, window_bounds = array<i64: 256, 128>}, {pipeline_mode = #tpu.pipeline_mode<synchronous>, transform_indices = @transform_2, window_bounds = array<i64: 1, 128>}, {transform_indices = @transform_3, window_bounds = array<i64: 208, 128>}]} {
    %c0 = arith.constant 0 : index
    %c0_0 = arith.constant 0 : index
    %0 = vector.load %arg1[%c0, %c0_0] : memref<208x256xf32, #tpu.memory_space<vmem>>, vector<208x256xf32>
    %c0_1 = arith.constant 0 : index
    %c0_2 = arith.constant 0 : index
    %1 = vector.load %arg2[%c0_1, %c0_2] : memref<256x128xf32, #tpu.memory_space<vmem>>, vector<256x128xf32>
    %cst = arith.constant dense<0.000000e+00> : vector<208x128xf32>
    %2 = tpu.matmul %0, %1, %cst {dimension_numbers = #tpu.dot_dimension_numbers<[1], [0], [0], [1], [0, 0, 1, 1], [], []>} : vector<208x256xf32>, vector<256x128xf32>, vector<208x128xf32> -> vector<208x128xf32>
    %c0_3 = arith.constant 0 : index
    %c0_4 = arith.constant 0 : index
    %3 = vector.load %arg3[%c0_3, %c0_4] : memref<1x128xf32, #tpu.memory_space<vmem>>, vector<1x128xf32>
    %4 = vector.broadcast %3 : vector<1x128xf32> to vector<208x128xf32>
    %5 = arith.addf %2, %4 : vector<208x128xf32>
    %cst_5 = arith.constant 0.000000e+00 : f32
    %6 = vector.broadcast %cst_5 : f32 to vector<208x128xf32>
    %7 = arith.maximumf %5, %6 : vector<208x128xf32>
    %c0_6 = arith.constant 0 : index
    %c0_7 = arith.constant 0 : index
    %8 = vector.load %arg4[%c0_6, %c0_7] : memref<208x128xf32, #tpu.memory_space<vmem>>, vector<208x128xf32>
    tpu.vector_store %arg4[%c0_6, %c0_7], %7 {strides = array<i32>} : memref<208x128xf32, #tpu.memory_space<vmem>>, vector<208x128xf32>,
    return
  }
  func.func @transform_0(%arg0: i32) -> (i32, i32) {
    %c0_i32 = arith.constant 0 : i32
    %c0_i32_0 = arith.constant 0 : i32
    return %arg0, %c0_i32 : i32, i32
  }
  func.func @transform_1(%arg0: i32) -> (i32, i32) {
    %c0_i32 = arith.constant 0 : i32
    %c0_i32_0 = arith.constant 0 : i32
    %c0_i32_1 = arith.constant 0 : i32
    return %c0_i32, %c0_i32_0 : i32, i32
  }
  func.func @transform_2(%arg0: i32) -> (i32, i32) {
    %c0_i32 = arith.constant 0 : i32
    %c0_i32_0 = arith.constant 0 : i32
    %c0_i32_1 = arith.constant 0 : i32
    return %c0_i32, %c0_i32_0 : i32, i32
  }
  func.func @transform_3(%arg0: i32) -> (i32, i32) {
    %c0_i32 = arith.constant 0 : i32
    %c0_i32_0 = arith.constant 0 : i32
    return %arg0, %c0_i32 : i32, i32
  }
}

module attributes {stable_mosaic.version = 11 : i64} {
  func.func @_conv_gemm_kernel(%arg0: i32, %arg1: memref<176x256xf32, #tpu.memory_space<vmem>>, %arg2: memref<256x128xf32, #tpu.memory_space<vmem>>, %arg3: memref<1x128xf32, #tpu.memory_space<vmem>>, %arg4: memref<176x128xf32, #tpu.memory_space<vmem>>) attributes {dimension_semantics = [#tpu.dimension_semantics<parallel>], iteration_bounds = array<i64: 1>, scalar_prefetch = 0 : i64, scratch_operands = 0 : i64, tpu.core_type = #tpu.core_type<tc>, window_params = [{transform_indices = @transform_0, window_bounds = array<i64: 176, 256>}, {pipeline_mode = #tpu.pipeline_mode<synchronous>, transform_indices = @transform_1, window_bounds = array<i64: 256, 128>}, {pipeline_mode = #tpu.pipeline_mode<synchronous>, transform_indices = @transform_2, window_bounds = array<i64: 1, 128>}, {transform_indices = @transform_3, window_bounds = array<i64: 176, 128>}]} {
    %c0 = arith.constant 0 : index
    %c0_0 = arith.constant 0 : index
    %0 = vector.load %arg1[%c0, %c0_0] : memref<176x256xf32, #tpu.memory_space<vmem>>, vector<176x256xf32>
    %c0_1 = arith.constant 0 : index
    %c0_2 = arith.constant 0 : index
    %1 = vector.load %arg2[%c0_1, %c0_2] : memref<256x128xf32, #tpu.memory_space<vmem>>, vector<256x128xf32>
    %cst = arith.constant dense<0.000000e+00> : vector<176x128xf32>
    %2 = tpu.matmul %0, %1, %cst {dimension_numbers = #tpu.dot_dimension_numbers<[1], [0], [0], [1], [0, 0, 1, 1], [], []>} : vector<176x256xf32>, vector<256x128xf32>, vector<176x128xf32> -> vector<176x128xf32>
    %c0_3 = arith.constant 0 : index
    %c0_4 = arith.constant 0 : index
    %3 = vector.load %arg3[%c0_3, %c0_4] : memref<1x128xf32, #tpu.memory_space<vmem>>, vector<1x128xf32>
    %4 = vector.broadcast %3 : vector<1x128xf32> to vector<176x128xf32>
    %5 = arith.addf %2, %4 : vector<176x128xf32>
    %cst_5 = arith.constant 0.000000e+00 : f32
    %6 = vector.broadcast %cst_5 : f32 to vector<176x128xf32>
    %7 = arith.maximumf %5, %6 : vector<176x128xf32>
    %c0_6 = arith.constant 0 : index
    %c0_7 = arith.constant 0 : index
    %8 = vector.load %arg4[%c0_6, %c0_7] : memref<176x128xf32, #tpu.memory_space<vmem>>, vector<176x128xf32>
    tpu.vector_store %arg4[%c0_6, %c0_7], %7 {strides = array<i32>} : memref<176x128xf32, #tpu.memory_space<vmem>>, vector<176x128xf32>,
    return
  }
  func.func @transform_0(%arg0: i32) -> (i32, i32) {
    %c0_i32 = arith.constant 0 : i32
    %c0_i32_0 = arith.constant 0 : i32
    return %arg0, %c0_i32 : i32, i32
  }
  func.func @transform_1(%arg0: i32) -> (i32, i32) {
    %c0_i32 = arith.constant 0 : i32
    %c0_i32_0 = arith.constant 0 : i32
    %c0_i32_1 = arith.constant 0 : i32
    return %c0_i32, %c0_i32_0 : i32, i32
  }
  func.func @transform_2(%arg0: i32) -> (i32, i32) {
    %c0_i32 = arith.constant 0 : i32
    %c0_i32_0 = arith.constant 0 : i32
    %c0_i32_1 = arith.constant 0 : i32
    return %c0_i32, %c0_i32_0 : i32, i32
  }
  func.func @transform_3(%arg0: i32) -> (i32, i32) {
    %c0_i32 = arith.constant 0 : i32
    %c0_i32_0 = arith.constant 0 : i32
    return %arg0, %c0_i32 : i32, i32
  }
}

module attributes {stable_mosaic.version = 11 : i64} {
  func.func @_conv_gemm_kernel(%arg0: i32, %arg1: memref<112x384xf32, #tpu.memory_space<vmem>>, %arg2: memref<384x128xf32, #tpu.memory_space<vmem>>, %arg3: memref<1x128xf32, #tpu.memory_space<vmem>>, %arg4: memref<112x128xf32, #tpu.memory_space<vmem>>) attributes {dimension_semantics = [#tpu.dimension_semantics<parallel>], iteration_bounds = array<i64: 1>, scalar_prefetch = 0 : i64, scratch_operands = 0 : i64, tpu.core_type = #tpu.core_type<tc>, window_params = [{transform_indices = @transform_0, window_bounds = array<i64: 112, 384>}, {pipeline_mode = #tpu.pipeline_mode<synchronous>, transform_indices = @transform_1, window_bounds = array<i64: 384, 128>}, {pipeline_mode = #tpu.pipeline_mode<synchronous>, transform_indices = @transform_2, window_bounds = array<i64: 1, 128>}, {transform_indices = @transform_3, window_bounds = array<i64: 112, 128>}]} {
    %c0 = arith.constant 0 : index
    %c0_0 = arith.constant 0 : index
    %0 = vector.load %arg1[%c0, %c0_0] : memref<112x384xf32, #tpu.memory_space<vmem>>, vector<112x384xf32>
    %c0_1 = arith.constant 0 : index
    %c0_2 = arith.constant 0 : index
    %1 = vector.load %arg2[%c0_1, %c0_2] : memref<384x128xf32, #tpu.memory_space<vmem>>, vector<384x128xf32>
    %cst = arith.constant dense<0.000000e+00> : vector<112x128xf32>
    %2 = tpu.matmul %0, %1, %cst {dimension_numbers = #tpu.dot_dimension_numbers<[1], [0], [0], [1], [0, 0, 1, 1], [], []>} : vector<112x384xf32>, vector<384x128xf32>, vector<112x128xf32> -> vector<112x128xf32>
    %c0_3 = arith.constant 0 : index
    %c0_4 = arith.constant 0 : index
    %3 = vector.load %arg3[%c0_3, %c0_4] : memref<1x128xf32, #tpu.memory_space<vmem>>, vector<1x128xf32>
    %4 = vector.broadcast %3 : vector<1x128xf32> to vector<112x128xf32>
    %5 = arith.addf %2, %4 : vector<112x128xf32>
    %cst_5 = arith.constant 0.000000e+00 : f32
    %6 = vector.broadcast %cst_5 : f32 to vector<112x128xf32>
    %7 = arith.maximumf %5, %6 : vector<112x128xf32>
    %c0_6 = arith.constant 0 : index
    %c0_7 = arith.constant 0 : index
    %8 = vector.load %arg4[%c0_6, %c0_7] : memref<112x128xf32, #tpu.memory_space<vmem>>, vector<112x128xf32>
    tpu.vector_store %arg4[%c0_6, %c0_7], %7 {strides = array<i32>} : memref<112x128xf32, #tpu.memory_space<vmem>>, vector<112x128xf32>,
    return
  }
  func.func @transform_0(%arg0: i32) -> (i32, i32) {
    %c0_i32 = arith.constant 0 : i32
    %c0_i32_0 = arith.constant 0 : i32
    return %arg0, %c0_i32 : i32, i32
  }
  func.func @transform_1(%arg0: i32) -> (i32, i32) {
    %c0_i32 = arith.constant 0 : i32
    %c0_i32_0 = arith.constant 0 : i32
    %c0_i32_1 = arith.constant 0 : i32
    return %c0_i32, %c0_i32_0 : i32, i32
  }
  func.func @transform_2(%arg0: i32) -> (i32, i32) {
    %c0_i32 = arith.constant 0 : i32
    %c0_i32_0 = arith.constant 0 : i32
    %c0_i32_1 = arith.constant 0 : i32
    return %c0_i32, %c0_i32_0 : i32, i32
  }
  func.func @transform_3(%arg0: i32) -> (i32, i32) {
    %c0_i32 = arith.constant 0 : i32
    %c0_i32_0 = arith.constant 0 : i32
    return %arg0, %c0_i32 : i32, i32
  }
}

module attributes {stable_mosaic.version = 11 : i64} {
  func.func @_fc_heads_kernel(%arg0: i32, %arg1: memref<16x1664xf32, #tpu.memory_space<vmem>>, %arg2: memref<1664x512xf32, #tpu.memory_space<vmem>>, %arg3: memref<1x512xf32, #tpu.memory_space<vmem>>, %arg4: memref<512x128xf32, #tpu.memory_space<vmem>>, %arg5: memref<1x128xf32, #tpu.memory_space<vmem>>, %arg6: memref<16x512xf32, #tpu.memory_space<vmem>>, %arg7: memref<16x128xf32, #tpu.memory_space<vmem>>) attributes {dimension_semantics = [#tpu.dimension_semantics<parallel>], iteration_bounds = array<i64: 1>, scalar_prefetch = 0 : i64, scratch_operands = 0 : i64, tpu.core_type = #tpu.core_type<tc>, window_params = [{transform_indices = @transform_0, window_bounds = array<i64: 16, 1664>}, {pipeline_mode = #tpu.pipeline_mode<synchronous>, transform_indices = @transform_1, window_bounds = array<i64: 1664, 512>}, {pipeline_mode = #tpu.pipeline_mode<synchronous>, transform_indices = @transform_2, window_bounds = array<i64: 1, 512>}, {pipeline_mode = #tpu.pipeline_mode<synchronous>, transform_indices = @transform_3, window_bounds = array<i64: 512, 128>}, {pipeline_mode = #tpu.pipeline_mode<synchronous>, transform_indices = @transform_4, window_bounds = array<i64: 1, 128>}, {transform_indices = @transform_5, window_bounds = array<i64: 16, 512>}, {transform_indices = @transform_6, window_bounds = array<i64: 16, 128>}]} {
    %c0 = arith.constant 0 : index
    %c0_0 = arith.constant 0 : index
    %0 = vector.load %arg1[%c0, %c0_0] : memref<16x1664xf32, #tpu.memory_space<vmem>>, vector<16x1664xf32>
    %c0_1 = arith.constant 0 : index
    %c0_2 = arith.constant 0 : index
    %1 = vector.load %arg2[%c0_1, %c0_2] : memref<1664x512xf32, #tpu.memory_space<vmem>>, vector<1664x512xf32>
    %cst = arith.constant dense<0.000000e+00> : vector<16x512xf32>
    %2 = tpu.matmul %0, %1, %cst {dimension_numbers = #tpu.dot_dimension_numbers<[1], [0], [0], [1], [0, 0, 1, 1], [], []>} : vector<16x1664xf32>, vector<1664x512xf32>, vector<16x512xf32> -> vector<16x512xf32>
    %c0_3 = arith.constant 0 : index
    %c0_4 = arith.constant 0 : index
    %3 = vector.load %arg3[%c0_3, %c0_4] : memref<1x512xf32, #tpu.memory_space<vmem>>, vector<1x512xf32>
    %4 = vector.broadcast %3 : vector<1x512xf32> to vector<16x512xf32>
    %5 = arith.addf %2, %4 : vector<16x512xf32>
    %c0_5 = arith.constant 0 : index
    %c0_6 = arith.constant 0 : index
    %6 = vector.load %arg6[%c0_5, %c0_6] : memref<16x512xf32, #tpu.memory_space<vmem>>, vector<16x512xf32>
    tpu.vector_store %arg6[%c0_5, %c0_6], %5 {strides = array<i32>} : memref<16x512xf32, #tpu.memory_space<vmem>>, vector<16x512xf32>,
    %cst_7 = arith.constant 0.000000e+00 : f32
    %7 = vector.broadcast %cst_7 : f32 to vector<16x512xf32>
    %8 = arith.maximumf %5, %7 : vector<16x512xf32>
    %c0_8 = arith.constant 0 : index
    %c0_9 = arith.constant 0 : index
    %9 = vector.load %arg4[%c0_8, %c0_9] : memref<512x128xf32, #tpu.memory_space<vmem>>, vector<512x128xf32>
    %cst_10 = arith.constant dense<0.000000e+00> : vector<16x128xf32>
    %10 = tpu.matmul %8, %9, %cst_10 {dimension_numbers = #tpu.dot_dimension_numbers<[1], [0], [0], [1], [0, 0, 1, 1], [], []>} : vector<16x512xf32>, vector<512x128xf32>, vector<16x128xf32> -> vector<16x128xf32>
    %c0_11 = arith.constant 0 : index
    %c0_12 = arith.constant 0 : index
    %11 = vector.load %arg5[%c0_11, %c0_12] : memref<1x128xf32, #tpu.memory_space<vmem>>, vector<1x128xf32>
    %12 = vector.broadcast %11 : vector<1x128xf32> to vector<16x128xf32>
    %13 = arith.addf %10, %12 : vector<16x128xf32>
    %c0_13 = arith.constant 0 : index
    %c0_14 = arith.constant 0 : index
    %14 = vector.load %arg7[%c0_13, %c0_14] : memref<16x128xf32, #tpu.memory_space<vmem>>, vector<16x128xf32>
    tpu.vector_store %arg7[%c0_13, %c0_14], %13 {strides = array<i32>} : memref<16x128xf32, #tpu.memory_space<vmem>>, vector<16x128xf32>,
    return
  }
  func.func @transform_0(%arg0: i32) -> (i32, i32) {
    %c0_i32 = arith.constant 0 : i32
    %c0_i32_0 = arith.constant 0 : i32
    return %arg0, %c0_i32 : i32, i32
  }
  func.func @transform_1(%arg0: i32) -> (i32, i32) {
    %c0_i32 = arith.constant 0 : i32
    %c0_i32_0 = arith.constant 0 : i32
    %c0_i32_1 = arith.constant 0 : i32
    return %c0_i32, %c0_i32_0 : i32, i32
  }
  func.func @transform_2(%arg0: i32) -> (i32, i32) {
    %c0_i32 = arith.constant 0 : i32
    %c0_i32_0 = arith.constant 0 : i32
    %c0_i32_1 = arith.constant 0 : i32
    return %c0_i32, %c0_i32_0 : i32, i32
  }
  func.func @transform_3(%arg0: i32) -> (i32, i32) {
    %c0_i32 = arith.constant 0 : i32
    %c0_i32_0 = arith.constant 0 : i32
    %c0_i32_1 = arith.constant 0 : i32
    return %c0_i32, %c0_i32_0 : i32, i32
  }
  func.func @transform_4(%arg0: i32) -> (i32, i32) {
    %c0_i32 = arith.constant 0 : i32
    %c0_i32_0 = arith.constant 0 : i32
    %c0_i32_1 = arith.constant 0 : i32
    return %c0_i32, %c0_i32_0 : i32, i32
  }
  func.func @transform_5(%arg0: i32) -> (i32, i32) {
    %c0_i32 = arith.constant 0 : i32
    %c0_i32_0 = arith.constant 0 : i32
    return %arg0, %c0_i32 : i32, i32
  }
  func.func @transform_6(%arg0: i32) -> (i32, i32) {
    %c0_i32 = arith.constant 0 : i32
    %c0_i32_0 = arith.constant 0 : i32
    return %arg0, %c0_i32 : i32, i32
  }
}

</mosaic_0001>

<llo_original>
// kernel: convnet_forward.4
$region0: #{convnet_forward.4}
  #allocation0 [shape = 'u32[]', space=smem, size = 0x4, offset = 0x4, fixed_abs, tag = 'smem constant byte address 0x4 - core index']
  #allocation1 [shape = 'u32[144,128]{1,0:T(1,128)}', space=vmem, size = 0x12000, scoped, tag = 'internal scratch']
  %s0 = inlined_call_operand.vmem [shape: f32[832,256], index: 0, kind: input, shape index: {}]
  %s1 = inlined_call_operand.vmem [shape: f32[256,128], index: 1, kind: input, shape index: {}]
  %s2 = inlined_call_operand.vmem [shape: f32[1,128], index: 2, kind: input, shape index: {}]
  %s3 = inlined_call_operand.vmem [shape: f32[832,128], index: 3, kind: output, shape index: {}]
  %s4 = sld [smem:[#allocation0]]
  $region45: #{convnet_forward.4} parent=0
    _
  %s6 = ssub.s32 1, %s4
  %s7 = scalar_select 0, %s6, %s4
  loop: start=0, step=1, limit=6
  $region2: #{convnet_forward.4} parent=0 // loop_pre_header
    _
  $region3: #{convnet_forward.4} parent=0 // loop_header
    %s9 = sphi 0, %s13
    %p10 = scmp.ge.s32.totalorder %s9, 6
    %s19 = sphi 0, %s21
    %s22 = sphi 0, %s19
    %s23 = sphi 0, %s22
    %s39 = sphi 0, %s23
    %s43 = sphi 0, %s43
    %s45 = sphi 0, %s43
    %s46 = sphi 0, %s45
    %s60 = sphi 0, %s46
    %s64 = sphi 0, %s64
    %s66 = sphi 0, %s64
    %s67 = sphi 0, %s66
    %s81 = sphi 0, %s67
    %s87 = sphi 0, %s89
    %s90 = sphi 0, %s87
    %s91 = sphi 0, %s90
    %s107 = sphi 0, %s91
  $region4: #{convnet_forward.4} parent=0 // loop_header_branch
    %12 = sbr.rel (%p10) target = $region8
  $region5: #{convnet_forward.4} parent=0 // loop_body
    %s14 = ssub.s32 %s9, 1
    %s15 = ssub.s32 %s9, 2
    %s16 = sadd.s32 %s9, 1
    %s17 = ssub.s32 %s9, %s16
    %p18 = scmp.eq.s32.totalorder %s17, 0
    %s20 = sadd.s32 %s19, 1
    %s21 = scalar_select %p18, %s19, %s20
    %p24 = pneg %p18
    %p25 = scmp.eq.s32.totalorder %s9, 3
    %p26 = por %p24, %p25
    %p27 = scmp.ne.s32.totalorder %s19, %s22
    %p28 = scmp.eq.s32.totalorder %s9, 0
    %p29 = por %p27, %p28
    %p30 = scmp.ne.s32.totalorder %s19, %s22
    %p31 = scmp.eq.s32.totalorder %s14, 3
    %p32 = por %p30, %p31
    %p33 = scmp.ne.s32.totalorder %s22, %s23
    %p34 = scmp.eq.s32.totalorder %s14, 0
    %p35 = por %p33, %p34
    %p36 = scmp.ne.s32.totalorder %s22, %s23
    %p37 = scmp.eq.s32.totalorder %s15, 3
    %p38 = por %p36, %p37
    %p40 = scmp.ne.s32.totalorder %s23, %s39
    %p41 = scmp.eq.s32.totalorder %s15, 0
    %p42 = por %p40, %p41
    %s44 = sadd.s32 %s43, 1
    %p47 = scmp.eq.s32.totalorder %s9, 3
    %p48 = scmp.ne.s32.totalorder %s43, %s45
    %p49 = scmp.eq.s32.totalorder %s9, 0
    %p50 = por %p48, %p49
    %p51 = scmp.ne.s32.totalorder %s43, %s45
    %p52 = scmp.eq.s32.totalorder %s14, 3
    %p53 = por %p51, %p52
    %p54 = scmp.ne.s32.totalorder %s45, %s46
    %p55 = scmp.eq.s32.totalorder %s14, 0
    %p56 = por %p54, %p55
    %p57 = scmp.ne.s32.totalorder %s45, %s46
    %p58 = scmp.eq.s32.totalorder %s15, 3
    %p59 = por %p57, %p58
    %p61 = scmp.ne.s32.totalorder %s46, %s60
    %p62 = scmp.eq.s32.totalorder %s15, 0
    %p63 = por %p61, %p62
    %s65 = sadd.s32 %s64, 1
    %p68 = scmp.eq.s32.totalorder %s9, 3
    %p69 = scmp.ne.s32.totalorder %s64, %s66
    %p70 = scmp.eq.s32.totalorder %s9, 0
    %p71 = por %p69, %p70
    %p72 = scmp.ne.s32.totalorder %s64, %s66
    %p73 = scmp.eq.s32.totalorder %s14, 3
    %p74 = por %p72, %p73
    %p75 = scmp.ne.s32.totalorder %s66, %s67
    %p76 = scmp.eq.s32.totalorder %s14, 0
    %p77 = por %p75, %p76
    %p78 = scmp.ne.s32.totalorder %s66, %s67
    %p79 = scmp.eq.s32.totalorder %s15, 3
    %p80 = por %p78, %p79
    %p82 = scmp.ne.s32.totalorder %s67, %s81
    %p83 = scmp.eq.s32.totalorder %s15, 0
    %p84 = por %p82, %p83
    %s85 = ssub.s32 %s9, %s16
    %p86 = scmp.eq.s32.totalorder %s85, 0
    %s88 = sadd.s32 %s87, 1
    %s89 = scalar_select %p86, %s87, %s88
    %p92 = pneg %p86
    %p93 = scmp.eq.s32.totalorder %s9, 3
    %p94 = por %p92, %p93
    %p95 = scmp.ne.s32.totalorder %s87, %s90
    %p96 = scmp.eq.s32.totalorder %s9, 0
    %p97 = por %p95, %p96
    %p98 = scmp.ne.s32.totalorder %s87, %s90
    %p99 = scmp.eq.s32.totalorder %s14, 3
    %p100 = por %p98, %p99
    %p101 = scmp.ne.s32.totalorder %s90, %s91
    %p102 = scmp.eq.s32.totalorder %s14, 0
    %p103 = por %p101, %p102
    %p104 = scmp.ne.s32.totalorder %s90, %s91
    %p105 = scmp.eq.s32.totalorder %s15, 3
    %p106 = por %p104, %p105
    %p108 = scmp.ne.s32.totalorder %s91, %s107
    %p109 = scmp.eq.s32.totalorder %s15, 0
    %p110 = por %p108, %p109
    %p111 = scmp.le.s32.totalorder 1, %s9
    %p112 = scmp.lt.s32.totalorder %s9, 5
    %p113 = pnand %p111, %p112
    %p114 = pneg %p113
    // Predicated region
    $region9: #{convnet_forward.4} parent=5 // pred_check
      _
    $region10: #{convnet_forward.4} parent=5 // pred_check_branch
      %116 = sbr.rel (%p113) target = $region12
    $region11: #{convnet_forward.4} parent=5 // pred_region
      %s117 = ssub.s32 %s9, 1
      // Predicated region
      $region13: #{convnet_forward.4} parent=11 // pred_check
        %p118 = pneg %p56
      $region14: #{convnet_forward.4} parent=11 // pred_check_branch
        %120 = sbr.rel (%p118) target = $region16
      $region15: #{convnet_forward.4} parent=11 // pred_region
        _
      $region16: #{convnet_forward.4} parent=11 // pred_fallthru
        _
      // Predicated region
      $region17: #{convnet_forward.4} parent=11 // pred_check
        %p121 = pneg %p77
      $region18: #{convnet_forward.4} parent=11 // pred_check_branch
        %123 = sbr.rel (%p121) target = $region20
      $region19: #{convnet_forward.4} parent=11 // pred_region
        _
      $region20: #{convnet_forward.4} parent=11 // pred_fallthru
        _
    $region12: #{convnet_forward.4} parent=5 // pred_fallthru
      _
    %p124 = scmp.lt.s32.totalorder %s9, 4
    // Predicated region
    $region21: #{convnet_forward.4} parent=5 // pred_check
      %p125 = pneg %p124
    $region22: #{convnet_forward.4} parent=5 // pred_check_branch
      %127 = sbr.rel (%p125) target = $region24
    $region23: #{convnet_forward.4} parent=5 // pred_region
      // Predicated region
      $region25: #{convnet_forward.4} parent=23 // pred_check
        %p128 = pneg %p29
      $region26: #{convnet_forward.4} parent=23 // pred_check_branch
        %130 = sbr.rel (%p128) target = $region28
      $region27: #{convnet_forward.4} parent=23 // pred_region
        %s131 = smul.u32 26, %s9
        %p132 = scmp.lt.s32.totalorder %s131, 103
        %s133 = scalar_select %p132, %s131, 103
        %s134 = smul.addr %s133, 2
        %s135 = smul.addr %s134, 8
        %s136 = scalar_lea.vmem %s0, %s135
        %s137 = smul.u32 26, %s9
      $region28: #{convnet_forward.4} parent=23 // pred_fallthru
        _
    $region24: #{convnet_forward.4} parent=5 // pred_fallthru
      _
    %p138 = scmp.le.s32.totalorder 1, %s9
    %p139 = scmp.lt.s32.totalorder %s9, 5
    %p140 = pnand %p138, %p139
    %p141 = pneg %p140
    // Predicated region
    $region29: #{convnet_forward.4} parent=5 // pred_check
      _
    $region30: #{convnet_forward.4} parent=5 // pred_check_branch
      %143 = sbr.rel (%p140) target = $region32
    $region31: #{convnet_forward.4} parent=5 // pred_region
      %s144 = ssub.s32 %s9, 1
      %s145 = smul.u32 26, %s14
      %p146 = scmp.lt.s32.totalorder %s145, 103
      %s147 = scalar_select %p146, %s145, 103
      %s148 = smul.addr %s147, 2
      %s149 = smul.addr %s148, 8
      %s150 = scalar_lea.vmem %s0, %s149
      %p151 = pneg %p35
      %p152 = pneg %p32
      %p153 = pneg %p56
      %p154 = pneg %p53
      %p155 = pneg %p77
      %p156 = pneg %p74
      %p157 = pneg %p103
      %p158 = pneg %p100
      %s159 = smul.u32 26, %s14
      %p160 = scmp.lt.s32.totalorder %s159, 103
      %s161 = scalar_select %p160, %s159, 103
      %s162 = smul.addr %s161, 8
      %s163 = scalar_lea.vmem %s3, %s162
      %s164 = smul.u32 26, %s14
      %p165 = scmp.lt.s32.totalorder %s164, 103
      %s166 = scalar_select %p165, %s164, 103
      %s167 = smul.addr %s166, 2
      %s168 = smul.addr %s167, 8
      %s169 = scalar_lea.vmem %s0, %s168
      %s170 = smul.u32 26, %s14
      %s171 = smul.u32 26, %s14
      %p172 = scmp.lt.s32.totalorder %s171, 103
      %s173 = scalar_select %p172, %s171, 103
      %s174 = smul.addr %s173, 8
      %s175 = scalar_lea.vmem %s3, %s174
      %s176 = smul.u32 26, %s14
      %v177 = vld [vmem:[%s169] sm:$0xff]
      %v178 = vld [vmem:[%s169 + $0x8] sm:$0xff]
      %v179 = vld [vmem:[%s169 + $0x10] sm:$0xff]
      %v180 = vld [vmem:[%s169 + $0x18] sm:$0xff]
      %v181 = vld [vmem:[%s169 + $0x20] sm:$0xff]
      %v182 = vld [vmem:[%s169 + $0x28] sm:$0xff]
      %v183 = vld [vmem:[%s169 + $0x30] sm:$0xff]
      %v184 = vld [vmem:[%s169 + $0x38] sm:$0xff]
      %v185 = vld [vmem:[%s169 + $0x40] sm:$0xff]
      %v186 = vld [vmem:[%s169 + $0x48] sm:$0xff]
      %v187 = vld [vmem:[%s169 + $0x50] sm:$0xff]
      %v188 = vld [vmem:[%s169 + $0x58] sm:$0xff]
      %v189 = vld [vmem:[%s169 + $0x60] sm:$0xff]
      %v190 = vld [vmem:[%s169 + $0x68] sm:$0xff]
      %v191 = vld [vmem:[%s169 + $0x70] sm:$0xff]
      %v192 = vld [vmem:[%s169 + $0x78] sm:$0xff]
      %v193 = vld [vmem:[%s169 + $0x80] sm:$0xff]
      %v194 = vld [vmem:[%s169 + $0x88] sm:$0xff]
      %v195 = vld [vmem:[%s169 + $0x90] sm:$0xff]
      %v196 = vld [vmem:[%s169 + $0x98] sm:$0xff]
      %v197 = vld [vmem:[%s169 + $0xa0] sm:$0xff]
      %v198 = vld [vmem:[%s169 + $0xa8] sm:$0xff]
      %v199 = vld [vmem:[%s169 + $0xb0] sm:$0xff]
      %v200 = vld [vmem:[%s169 + $0xb8] sm:$0xff]
      %v201 = vld [vmem:[%s169 + $0xc0] sm:$0xff]
      %v202 = vld [vmem:[%s169 + $0xc8] sm:$0xff]
      %v203 = vld [vmem:[%s169 + $0xd0] sm:$0xff]
      %v204 = vld [vmem:[%s169 + $0xd8] sm:$0xff]
      %v205 = vld [vmem:[%s169 + $0xe0] sm:$0xff]
      %v206 = vld [vmem:[%s169 + $0xe8] sm:$0xff]
      %v207 = vld [vmem:[%s169 + $0xf0] sm:$0xff]
      %v208 = vld [vmem:[%s169 + $0xf8] sm:$0xff]
      %v209 = vld [vmem:[%s169 + $0x100] sm:$0xff]
      %v210 = vld [vmem:[%s169 + $0x108] sm:$0xff]
      %v211 = vld [vmem:[%s169 + $0x110] sm:$0xff]
      %v212 = vld [vmem:[%s169 + $0x118] sm:$0xff]
      %v213 = vld [vmem:[%s169 + $0x120] sm:$0xff]
      %v214 = vld [vmem:[%s169 + $0x128] sm:$0xff]
      %v215 = vld [vmem:[%s169 + $0x130] sm:$0xff]
      %v216 = vld [vmem:[%s169 + $0x138] sm:$0xff]
      %v217 = vld [vmem:[%s169 + $0x140] sm:$0xff]
      %v218 = vld [vmem:[%s169 + $0x148] sm:$0xff]
      %v219 = vld [vmem:[%s169 + $0x150] sm:$0xff]
      %v220 = vld [vmem:[%s169 + $0x158] sm:$0xff]
      %v221 = vld [vmem:[%s169 + $0x160] sm:$0xff]
      %v222 = vld [vmem:[%s169 + $0x168] sm:$0xff]
      %v223 = vld [vmem:[%s169 + $0x170] sm:$0xff]
      %v224 = vld [vmem:[%s169 + $0x178] sm:$0xff]
      %v225 = vld [vmem:[%s169 + $0x180] sm:$0xff]
      %v226 = vld [vmem:[%s169 + $0x188] sm:$0xff]
      %v227 = vld [vmem:[%s169 + $0x190] sm:$0xff]
      %v228 = vld [vmem:[%s169 + $0x198] sm:$0xff]
      %v229 = vld [vmem:[%s1] sm:$0xff]
      %v230 = vld [vmem:[%s1 + $0x8] sm:$0xff]
      %v231 = vld [vmem:[%s1 + $0x10] sm:$0xff]
      %v232 = vld [vmem:[%s1 + $0x18] sm:$0xff]
      %v233 = vld [vmem:[%s1 + $0x20] sm:$0xff]
      %v234 = vld [vmem:[%s1 + $0x28] sm:$0xff]
      %v235 = vld [vmem:[%s1 + $0x30] sm:$0xff]
      %v236 = vld [vmem:[%s1 + $0x38] sm:$0xff]
      %v237 = vld [vmem:[%s1 + $0x40] sm:$0xff]
      %v238 = vld [vmem:[%s1 + $0x48] sm:$0xff]
      %v239 = vld [vmem:[%s1 + $0x50] sm:$0xff]
      %v240 = vld [vmem:[%s1 + $0x58] sm:$0xff]
      %v241 = vld [vmem:[%s1 + $0x60] sm:$0xff]
      %v242 = vld [vmem:[%s1 + $0x68] sm:$0xff]
      %v243 = vld [vmem:[%s1 + $0x70] sm:$0xff]
      %v244 = vld [vmem:[%s1 + $0x78] sm:$0xff]
      %v245 = vld [vmem:[%s1 + $0x80] sm:$0xff]
      %v246 = vld [vmem:[%s1 + $0x88] sm:$0xff]
      %v247 = vld [vmem:[%s1 + $0x90] sm:$0xff]
      %v248 = vld [vmem:[%s1 + $0x98] sm:$0xff]
      %v249 = vld [vmem:[%s1 + $0xa0] sm:$0xff]
      %v250 = vld [vmem:[%s1 + $0xa8] sm:$0xff]
      %v251 = vld [vmem:[%s1 + $0xb0] sm:$0xff]
      %v252 = vld [vmem:[%s1 + $0xb8] sm:$0xff]
      %v253 = vld [vmem:[%s1 + $0xc0] sm:$0xff]
      %v254 = vld [vmem:[%s1 + $0xc8] sm:$0xff]
      %v255 = vld [vmem:[%s1 + $0xd0] sm:$0xff]
      %v256 = vld [vmem:[%s1 + $0xd8] sm:$0xff]
      %v257 = vld [vmem:[%s1 + $0xe0] sm:$0xff]
      %v258 = vld [vmem:[%s1 + $0xe8] sm:$0xff]
      %v259 = vld [vmem:[%s1 + $0xf0] sm:$0xff]
      %v260 = vld [vmem:[%s1 + $0xf8] sm:$0xff]
      %v261 = vld [vmem:[%s2] sm:$0x1]
      %v263 = vlaneseq
      %v264 = vshrl.u32 %v263, 7
      %v265 = vsub.s32 0, %v264
      %v266 = vrot.slane %v261, %v265
      %268 = vmatprep.subr.mxu0 0.0
      %269 = vmatpush1.msra.mxu0 %v244
      %270 = vmatprep.subr.mxu0 0.0
      %271 = vmatpush1.msra.mxu0 %v243
      %272 = vmatprep.subr.mxu0 0.0
      %273 = vmatpush1.msra.mxu0 %v242
      %274 = vmatprep.subr.mxu0 0.0
      %275 = vmatpush1.msra.mxu0 %v241
      %276 = vmatprep.subr.mxu0 0.0
      %277 = vmatpush1.msra.mxu0 %v240
      %278 = vmatprep.subr.mxu0 0.0
      %279 = vmatpush1.msra.mxu0 %v239
      %280 = vmatprep.subr.mxu0 0.0
      %281 = vmatpush1.msra.mxu0 %v238
      %282 = vmatprep.subr.mxu0 0.0
      %283 = vmatpush1.msra.mxu0 %v237
      %284 = vmatprep.subr.mxu0 0.0
      %285 = vmatpush1.msra.mxu0 %v236
      %286 = vmatprep.subr.mxu0 0.0
      %287 = vmatpush1.msra.mxu0 %v235
      %288 = vmatprep.subr.mxu0 0.0
      %289 = vmatpush1.msra.mxu0 %v234
      %290 = vmatprep.subr.mxu0 0.0
      %291 = vmatpush1.msra.mxu0 %v233
      %292 = vmatprep.subr.mxu0 0.0
      %293 = vmatpush1.msra.mxu0 %v232
      %294 = vmatprep.subr.mxu0 0.0
      %295 = vmatpush1.msra.mxu0 %v231
      %296 = vmatprep.subr.mxu0 0.0
      %297 = vmatpush1.msra.mxu0 %v230
      %298 = vmatprep.subr.mxu0 0.0
      %299 = vmatpush1.msra.mxu0 %v229
      %300 = vmatprep.subr.mxu0 0.0
      %301 = vmatpush2.msra.mxu0 %v260
      %302 = vmatprep.subr.mxu0 0.0
      %303 = vmatpush2.msra.mxu0 %v259
      %304 = vmatprep.subr.mxu0 0.0
      %305 = vmatpush2.msra.mxu0 %v258
      %306 = vmatprep.subr.mxu0 0.0
      %307 = vmatpush2.msra.mxu0 %v257
      %308 = vmatprep.subr.mxu0 0.0
      %309 = vmatpush2.msra.mxu0 %v256
      %310 = vmatprep.subr.mxu0 0.0
      %311 = vmatpush2.msra.mxu0 %v255
      %312 = vmatprep.subr.mxu0 0.0
      %313 = vmatpush2.msra.mxu0 %v254
      %314 = vmatprep.subr.mxu0 0.0
      %315 = vmatpush2.msra.mxu0 %v253
      %316 = vmatprep.subr.mxu0 0.0
      %317 = vmatpush2.msra.mxu0 %v252
      %318 = vmatprep.subr.mxu0 0.0
      %319 = vmatpush2.msra.mxu0 %v251
      %320 = vmatprep.subr.mxu0 0.0
      %321 = vmatpush2.msra.mxu0 %v250
      %322 = vmatprep.subr.mxu0 0.0
      %323 = vmatpush2.msra.mxu0 %v249
      %324 = vmatprep.subr.mxu0 0.0
      %325 = vmatpush2.msra.mxu0 %v248
      %326 = vmatprep.subr.mxu0 0.0
      %327 = vmatpush2.msra.mxu0 %v247
      %328 = vmatprep.subr.mxu0 0.0
      %329 = vmatpush2.msra.mxu0 %v246
      %330 = vmatprep.subr.mxu0 0.0
      %331 = vmatpush2.msra.mxu0 %v245
      %332 = vmatprep.mubr.f32.mxu0 %v178
      %333 = vmatmul.mubr.f32.gmra.mxu0 %v177
      %v334 = vpop.f32.mrf.mxu0
      %v335 = vadd.f32 %v266, %v334
      %v336 = vpop.f32.mrf.mxu0
      %337 = vmatprep.mubr.f32.mxu0 %v180
      %338 = vmatmul.mubr.f32.gmra.mxu0 %v179
      %v339 = vpop.f32.mrf.mxu0
      %v340 = vadd.f32 %v266, %v339
      %v341 = vpop.f32.mrf.mxu0
      %342 = vmatprep.mubr.f32.mxu0 %v182
      %343 = vmatmul.mubr.f32.gmra.mxu0 %v181
      %v344 = vpop.f32.mrf.mxu0
      %v345 = vadd.f32 %v266, %v344
      %v346 = vpop.f32.mrf.mxu0
      %347 = vmatprep.mubr.f32.mxu0 %v184
      %348 = vmatmul.mubr.f32.gmra.mxu0 %v183
      %v349 = vpop.f32.mrf.mxu0
      %v350 = vadd.f32 %v266, %v349
      %v351 = vpop.f32.mrf.mxu0
      %352 = vmatprep.mubr.f32.mxu0 %v186
      %353 = vmatmul.mubr.f32.gmra.mxu0 %v185
      %v354 = vpop.f32.mrf.mxu0
      %v355 = vadd.f32 %v266, %v354
      %v356 = vpop.f32.mrf.mxu0
      %357 = vmatprep.mubr.f32.mxu0 %v188
      %358 = vmatmul.mubr.f32.gmra.mxu0 %v187
      %v359 = vpop.f32.mrf.mxu0
      %v360 = vadd.f32 %v266, %v359
      %v361 = vpop.f32.mrf.mxu0
      %362 = vmatprep.mubr.f32.mxu0 %v190
      %363 = vmatmul.mubr.f32.gmra.mxu0 %v189
      %v364 = vpop.f32.mrf.mxu0
      %v365 = vadd.f32 %v266, %v364
      %v366 = vpop.f32.mrf.mxu0
      %367 = vmatprep.mubr.f32.mxu0 %v192
      %368 = vmatmul.mubr.f32.gmra.mxu0 %v191
      %v369 = vpop.f32.mrf.mxu0
      %v370 = vadd.f32 %v266, %v369
      %v371 = vpop.f32.mrf.mxu0
      %372 = vmatprep.mubr.f32.mxu0 %v194
      %373 = vmatmul.mubr.f32.gmra.mxu0 %v193
      %v374 = vpop.f32.mrf.mxu0
      %v375 = vadd.f32 %v266, %v374
      %v376 = vpop.f32.mrf.mxu0
      %377 = vmatprep.mubr.f32.mxu0 %v196
      %378 = vmatmul.mubr.f32.gmra.mxu0 %v195
      %v379 = vpop.f32.mrf.mxu0
      %v380 = vadd.f32 %v266, %v379
      %v381 = vpop.f32.mrf.mxu0
      %382 = vmatprep.mubr.f32.mxu0 %v198
      %383 = vmatmul.mubr.f32.gmra.mxu0 %v197
      %v384 = vpop.f32.mrf.mxu0
      %v385 = vadd.f32 %v266, %v384
      %v386 = vpop.f32.mrf.mxu0
      %387 = vmatprep.mubr.f32.mxu0 %v200
      %388 = vmatmul.mubr.f32.gmra.mxu0 %v199
      %v389 = vpop.f32.mrf.mxu0
      %v390 = vadd.f32 %v266, %v389
      %v391 = vpop.f32.mrf.mxu0
      %392 = vmatprep.mubr.f32.mxu0 %v202
      %393 = vmatmul.mubr.f32.gmra.mxu0 %v201
      %v394 = vpop.f32.mrf.mxu0
      %v395 = vadd.f32 %v266, %v394
      %v396 = vpop.f32.mrf.mxu0
      %397 = vmatprep.mubr.f32.mxu0 %v204
      %398 = vmatmul.mubr.f32.gmra.mxu0 %v203
      %v399 = vpop.f32.mrf.mxu0
      %v400 = vadd.f32 %v266, %v399
      %v401 = vpop.f32.mrf.mxu0
      %402 = vmatprep.mubr.f32.mxu0 %v206
      %403 = vmatmul.mubr.f32.gmra.mxu0 %v205
      %v404 = vpop.f32.mrf.mxu0
      %v405 = vadd.f32 %v266, %v404
      %v406 = vpop.f32.mrf.mxu0
      %407 = vmatprep.mubr.f32.mxu0 %v208
      %408 = vmatmul.mubr.f32.gmra.mxu0 %v207
      %v409 = vpop.f32.mrf.mxu0
      %v410 = vadd.f32 %v266, %v409
      %v411 = vpop.f32.mrf.mxu0
      %412 = vmatprep.mubr.f32.mxu0 %v210
      %413 = vmatmul.mubr.f32.gmra.mxu0 %v209
      %v414 = vpop.f32.mrf.mxu0
      %v415 = vadd.f32 %v266, %v414
      %v416 = vpop.f32.mrf.mxu0
      %417 = vmatprep.mubr.f32.mxu0 %v212
      %418 = vmatmul.mubr.f32.gmra.mxu0 %v211
      %v419 = vpop.f32.mrf.mxu0
      %v420 = vadd.f32 %v266, %v419
      %v421 = vpop.f32.mrf.mxu0
      %422 = vmatprep.mubr.f32.mxu0 %v214
      %423 = vmatmul.mubr.f32.gmra.mxu0 %v213
      %v424 = vpop.f32.mrf.mxu0
      %v425 = vadd.f32 %v266, %v424
      %v426 = vpop.f32.mrf.mxu0
      %427 = vmatprep.mubr.f32.mxu0 %v216
      %428 = vmatmul.mubr.f32.gmra.mxu0 %v215
      %v429 = vpop.f32.mrf.mxu0
      %v430 = vadd.f32 %v266, %v429
      %v431 = vpop.f32.mrf.mxu0
      %432 = vmatprep.mubr.f32.mxu0 %v218
      %433 = vmatmul.mubr.f32.gmra.mxu0 %v217
      %v434 = vpop.f32.mrf.mxu0
      %v435 = vadd.f32 %v266, %v434
      %v436 = vpop.f32.mrf.mxu0
      %437 = vmatprep.mubr.f32.mxu0 %v220
      %438 = vmatmul.mubr.f32.gmra.mxu0 %v219
      %v439 = vpop.f32.mrf.mxu0
      %v440 = vadd.f32 %v266, %v439
      %v441 = vpop.f32.mrf.mxu0
      %442 = vmatprep.mubr.f32.mxu0 %v222
      %443 = vmatmul.mubr.f32.gmra.mxu0 %v221
      %v444 = vpop.f32.mrf.mxu0
      %v445 = vadd.f32 %v266, %v444
      %v446 = vpop.f32.mrf.mxu0
      %447 = vmatprep.mubr.f32.mxu0 %v224
      %448 = vmatmul.mubr.f32.gmra.mxu0 %v223
      %v449 = vpop.f32.mrf.mxu0
      %v450 = vadd.f32 %v266, %v449
      %v451 = vpop.f32.mrf.mxu0
      %452 = vmatprep.mubr.f32.mxu0 %v226
      %453 = vmatmul.mubr.f32.gmra.mxu0 %v225
      %v454 = vpop.f32.mrf.mxu0
      %v455 = vadd.f32 %v266, %v454
      %v456 = vpop.f32.mrf.mxu0
      %457 = vmatprep.mubr.f32.mxu0 %v228
      %458 = vmatmul.mubr.f32.gmra.mxu0 %v227
      %v459 = vpop.f32.mrf.mxu0
      %v460 = vadd.f32 %v266, %v459
      %v461 = vpop.f32.mrf.mxu0
      %462 = vdwg.mxu0
      %v463 = vmax.f32 %v335, 0.0
      %v464 = vmax.f32 %v340, 0.0
      %v465 = vmax.f32 %v345, 0.0
      %v466 = vmax.f32 %v350, 0.0
      %v467 = vmax.f32 %v355, 0.0
      %v468 = vmax.f32 %v360, 0.0
      %v469 = vmax.f32 %v365, 0.0
      %v470 = vmax.f32 %v370, 0.0
      %v471 = vmax.f32 %v375, 0.0
      %v472 = vmax.f32 %v380, 0.0
      %v473 = vmax.f32 %v385, 0.0
      %v474 = vmax.f32 %v390, 0.0
      %v475 = vmax.f32 %v395, 0.0
      %v476 = vmax.f32 %v400, 0.0
      %v477 = vmax.f32 %v405, 0.0
      %v478 = vmax.f32 %v410, 0.0
      %v479 = vmax.f32 %v415, 0.0
      %v480 = vmax.f32 %v420, 0.0
      %v481 = vmax.f32 %v425, 0.0
      %v482 = vmax.f32 %v430, 0.0
      %v483 = vmax.f32 %v435, 0.0
      %v484 = vmax.f32 %v440, 0.0
      %v485 = vmax.f32 %v445, 0.0
      %v486 = vmax.f32 %v450, 0.0
      %v487 = vmax.f32 %v455, 0.0
      %v488 = vmax.f32 %v460, 0.0
      %489 = vst [vmem:[%s175] sm:$0xff] %v463
      %490 = vst [vmem:[%s175 + $0x8] sm:$0xff] %v464
      %491 = vst [vmem:[%s175 + $0x10] sm:$0xff] %v465
      %492 = vst [vmem:[%s175 + $0x18] sm:$0xff] %v466
      %493 = vst [vmem:[%s175 + $0x20] sm:$0xff] %v467
      %494 = vst [vmem:[%s175 + $0x28] sm:$0xff] %v468
      %495 = vst [vmem:[%s175 + $0x30] sm:$0xff] %v469
      %496 = vst [vmem:[%s175 + $0x38] sm:$0xff] %v470
      %497 = vst [vmem:[%s175 + $0x40] sm:$0xff] %v471
      %498 = vst [vmem:[%s175 + $0x48] sm:$0xff] %v472
      %499 = vst [vmem:[%s175 + $0x50] sm:$0xff] %v473
      %500 = vst [vmem:[%s175 + $0x58] sm:$0xff] %v474
      %501 = vst [vmem:[%s175 + $0x60] sm:$0xff] %v475
      %502 = vst [vmem:[%s175 + $0x68] sm:$0xff] %v476
      %503 = vst [vmem:[%s175 + $0x70] sm:$0xff] %v477
      %504 = vst [vmem:[%s175 + $0x78] sm:$0xff] %v478
      %505 = vst [vmem:[%s175 + $0x80] sm:$0xff] %v479
      %506 = vst [vmem:[%s175 + $0x88] sm:$0xff] %v480
      %507 = vst [vmem:[%s175 + $0x90] sm:$0xff] %v481
      %508 = vst [vmem:[%s175 + $0x98] sm:$0xff] %v482
      %509 = vst [vmem:[%s175 + $0xa0] sm:$0xff] %v483
      %510 = vst [vmem:[%s175 + $0xa8] sm:$0xff] %v484
      %511 = vst [vmem:[%s175 + $0xb0] sm:$0xff] %v485
      %512 = vst [vmem:[%s175 + $0xb8] sm:$0xff] %v486
      %513 = vst [vmem:[%s175 + $0xc0] sm:$0xff] %v487
      %514 = vst [vmem:[%s175 + $0xc8] sm:$0xff] %v488
      %s515 = smul.u32 26, %s14
      %p516 = scmp.lt.s32.totalorder %s515, 103
      %s517 = scalar_select %p516, %s515, 103
      %s518 = smul.addr %s517, 8
      %s519 = scalar_lea.vmem %s3, %s518
      // Predicated region
      $region33: #{convnet_forward.4} parent=31 // pred_check
        %p520 = pneg %p100
      $region34: #{convnet_forward.4} parent=31 // pred_check_branch
        %522 = sbr.rel (%p520) target = $region36
      $region35: #{convnet_forward.4} parent=31 // pred_region
        %s523 = smul.u32 26, %s14
      $region36: #{convnet_forward.4} parent=31 // pred_fallthru
        _
    $region32: #{convnet_forward.4} parent=5 // pred_fallthru
      _
    %p524 = scmp.le.s32.totalorder 2, %s9
    // Predicated region
    $region37: #{convnet_forward.4} parent=5 // pred_check
      %p525 = pneg %p524
    $region38: #{convnet_forward.4} parent=5 // pred_check_branch
      %527 = sbr.rel (%p525) target = $region40
    $region39: #{convnet_forward.4} parent=5 // pred_region
      %s528 = ssub.s32 %s9, 2
      // Predicated region
      $region41: #{convnet_forward.4} parent=39 // pred_check
        %p529 = pneg %p106
      $region42: #{convnet_forward.4} parent=39 // pred_check_branch
        %531 = sbr.rel (%p529) target = $region44
      $region43: #{convnet_forward.4} parent=39 // pred_region
        %s532 = smul.u32 26, %s15
        %p533 = scmp.lt.s32.totalorder %s532, 103
        %s534 = scalar_select %p533, %s532, 103
        %s535 = smul.addr %s534, 8
        %s536 = scalar_lea.vmem %s3, %s535
      $region44: #{convnet_forward.4} parent=39 // pred_fallthru
        _
    $region40: #{convnet_forward.4} parent=5 // pred_fallthru
      _
  $region6: #{convnet_forward.4} parent=0 // loop_footer
    %s13 = sadd.s32 1, %s9
  $region7: #{convnet_forward.4} parent=0 // loop_footer_branch
    %8 = sbr.rel target = $region3
  $region8: #{convnet_forward.4} parent=0 // loop_exit
    _

// kernel: convnet_forward.5
$region0: #{convnet_forward.5}
  #allocation0 [shape = 'u32[]', space=smem, size = 0x4, offset = 0x4, fixed_abs, tag = 'smem constant byte address 0x4 - core index']
  #allocation1 [shape = 'u32[144,128]{1,0:T(1,128)}', space=vmem, size = 0x12000, scoped, tag = 'internal scratch']
  %s0 = inlined_call_operand.vmem [shape: f32[176,256], index: 0, kind: input, shape index: {}]
  %s1 = inlined_call_operand.vmem [shape: f32[256,128], index: 1, kind: input, shape index: {}]
  %s2 = inlined_call_operand.vmem [shape: f32[1,128], index: 2, kind: input, shape index: {}]
  %s3 = inlined_call_operand.vmem [shape: f32[176,128], index: 3, kind: output, shape index: {}]
  %s4 = sld [smem:[#allocation0]]
  $region22: #{convnet_forward.5} parent=0
    _
  %s6 = ssub.s32 1, %s4
  %s7 = scalar_select 0, %s6, %s4
  // Predicated region
  $region2: #{convnet_forward.5} parent=0 // pred_check
    _
  $region3: #{convnet_forward.5} parent=0 // pred_check_branch
    %9 = sbr.rel (0) target = $region5
  $region4: #{convnet_forward.5} parent=0 // pred_region
    _
  $region5: #{convnet_forward.5} parent=0 // pred_fallthru
    _
  // Predicated region
  $region6: #{convnet_forward.5} parent=0 // pred_check
    _
  $region7: #{convnet_forward.5} parent=0 // pred_check_branch
    %11 = sbr.rel (0) target = $region9
  $region8: #{convnet_forward.5} parent=0 // pred_region
    _
  $region9: #{convnet_forward.5} parent=0 // pred_fallthru
    _
  // Predicated region
  $region10: #{convnet_forward.5} parent=0 // pred_check
    _
  $region11: #{convnet_forward.5} parent=0 // pred_check_branch
    %13 = sbr.rel (0) target = $region13
  $region12: #{convnet_forward.5} parent=0 // pred_region
    _
  $region13: #{convnet_forward.5} parent=0 // pred_fallthru
    _
  %v14 = vld [vmem:[%s0] sm:$0xff]
  %v15 = vld [vmem:[%s0 + $0x8] sm:$0xff]
  %v16 = vld [vmem:[%s0 + $0x10] sm:$0xff]
  %v17 = vld [vmem:[%s0 + $0x18] sm:$0xff]
  %v18 = vld [vmem:[%s0 + $0x20] sm:$0xff]
  %v19 = vld [vmem:[%s0 + $0x28] sm:$0xff]
  %v20 = vld [vmem:[%s0 + $0x30] sm:$0xff]
  %v21 = vld [vmem:[%s0 + $0x38] sm:$0xff]
  %v22 = vld [vmem:[%s0 + $0x40] sm:$0xff]
  %v23 = vld [vmem:[%s0 + $0x48] sm:$0xff]
  %v24 = vld [vmem:[%s0 + $0x50] sm:$0xff]
  %v25 = vld [vmem:[%s0 + $0x58] sm:$0xff]
  %v26 = vld [vmem:[%s0 + $0x60] sm:$0xff]
  %v27 = vld [vmem:[%s0 + $0x68] sm:$0xff]
  %v28 = vld [vmem:[%s0 + $0x70] sm:$0xff]
  %v29 = vld [vmem:[%s0 + $0x78] sm:$0xff]
  %v30 = vld [vmem:[%s0 + $0x80] sm:$0xff]
  %v31 = vld [vmem:[%s0 + $0x88] sm:$0xff]
  %v32 = vld [vmem:[%s0 + $0x90] sm:$0xff]
  %v33 = vld [vmem:[%s0 + $0x98] sm:$0xff]
  %v34 = vld [vmem:[%s0 + $0xa0] sm:$0xff]
  %v35 = vld [vmem:[%s0 + $0xa8] sm:$0xff]
  %v36 = vld [vmem:[%s0 + $0xb0] sm:$0xff]
  %v37 = vld [vmem:[%s0 + $0xb8] sm:$0xff]
  %v38 = vld [vmem:[%s0 + $0xc0] sm:$0xff]
  %v39 = vld [vmem:[%s0 + $0xc8] sm:$0xff]
  %v40 = vld [vmem:[%s0 + $0xd0] sm:$0xff]
  %v41 = vld [vmem:[%s0 + $0xd8] sm:$0xff]
  %v42 = vld [vmem:[%s0 + $0xe0] sm:$0xff]
  %v43 = vld [vmem:[%s0 + $0xe8] sm:$0xff]
  %v44 = vld [vmem:[%s0 + $0xf0] sm:$0xff]
  %v45 = vld [vmem:[%s0 + $0xf8] sm:$0xff]
  %v46 = vld [vmem:[%s0 + $0x100] sm:$0xff]
  %v47 = vld [vmem:[%s0 + $0x108] sm:$0xff]
  %v48 = vld [vmem:[%s0 + $0x110] sm:$0xff]
  %v49 = vld [vmem:[%s0 + $0x118] sm:$0xff]
  %v50 = vld [vmem:[%s0 + $0x120] sm:$0xff]
  %v51 = vld [vmem:[%s0 + $0x128] sm:$0xff]
  %v52 = vld [vmem:[%s0 + $0x130] sm:$0xff]
  %v53 = vld [vmem:[%s0 + $0x138] sm:$0xff]
  %v54 = vld [vmem:[%s0 + $0x140] sm:$0xff]
  %v55 = vld [vmem:[%s0 + $0x148] sm:$0xff]
  %v56 = vld [vmem:[%s0 + $0x150] sm:$0xff]
  %v57 = vld [vmem:[%s0 + $0x158] sm:$0xff]
  %v58 = vld [vmem:[%s1] sm:$0xff]
  %v59 = vld [vmem:[%s1 + $0x8] sm:$0xff]
  %v60 = vld [vmem:[%s1 + $0x10] sm:$0xff]
  %v61 = vld [vmem:[%s1 + $0x18] sm:$0xff]
  %v62 = vld [vmem:[%s1 + $0x20] sm:$0xff]
  %v63 = vld [vmem:[%s1 + $0x28] sm:$0xff]
  %v64 = vld [vmem:[%s1 + $0x30] sm:$0xff]
  %v65 = vld [vmem:[%s1 + $0x38] sm:$0xff]
  %v66 = vld [vmem:[%s1 + $0x40] sm:$0xff]
  %v67 = vld [vmem:[%s1 + $0x48] sm:$0xff]
  %v68 = vld [vmem:[%s1 + $0x50] sm:$0xff]
  %v69 = vld [vmem:[%s1 + $0x58] sm:$0xff]
  %v70 = vld [vmem:[%s1 + $0x60] sm:$0xff]
  %v71 = vld [vmem:[%s1 + $0x68] sm:$0xff]
  %v72 = vld [vmem:[%s1 + $0x70] sm:$0xff]
  %v73 = vld [vmem:[%s1 + $0x78] sm:$0xff]
  %v74 = vld [vmem:[%s1 + $0x80] sm:$0xff]
  %v75 = vld [vmem:[%s1 + $0x88] sm:$0xff]
  %v76 = vld [vmem:[%s1 + $0x90] sm:$0xff]
  %v77 = vld [vmem:[%s1 + $0x98] sm:$0xff]
  %v78 = vld [vmem:[%s1 + $0xa0] sm:$0xff]
  %v79 = vld [vmem:[%s1 + $0xa8] sm:$0xff]
  %v80 = vld [vmem:[%s1 + $0xb0] sm:$0xff]
  %v81 = vld [vmem:[%s1 + $0xb8] sm:$0xff]
  %v82 = vld [vmem:[%s1 + $0xc0] sm:$0xff]
  %v83 = vld [vmem:[%s1 + $0xc8] sm:$0xff]
  %v84 = vld [vmem:[%s1 + $0xd0] sm:$0xff]
  %v85 = vld [vmem:[%s1 + $0xd8] sm:$0xff]
  %v86 = vld [vmem:[%s1 + $0xe0] sm:$0xff]
  %v87 = vld [vmem:[%s1 + $0xe8] sm:$0xff]
  %v88 = vld [vmem:[%s1 + $0xf0] sm:$0xff]
  %v89 = vld [vmem:[%s1 + $0xf8] sm:$0xff]
  %v90 = vld [vmem:[%s2] sm:$0x1]
  %v92 = vlaneseq
  %v93 = vshrl.u32 %v92, 7
  %v94 = vsub.s32 0, %v93
  %v95 = vrot.slane %v90, %v94
  %97 = vmatprep.subr.mxu0 0.0
  %98 = vmatpush1.msra.mxu0 %v73
  %99 = vmatprep.subr.mxu0 0.0
  %100 = vmatpush1.msra.mxu0 %v72
  %101 = vmatprep.subr.mxu0 0.0
  %102 = vmatpush1.msra.mxu0 %v71
  %103 = vmatprep.subr.mxu0 0.0
  %104 = vmatpush1.msra.mxu0 %v70
  %105 = vmatprep.subr.mxu0 0.0
  %106 = vmatpush1.msra.mxu0 %v69
  %107 = vmatprep.subr.mxu0 0.0
  %108 = vmatpush1.msra.mxu0 %v68
  %109 = vmatprep.subr.mxu0 0.0
  %110 = vmatpush1.msra.mxu0 %v67
  %111 = vmatprep.subr.mxu0 0.0
  %112 = vmatpush1.msra.mxu0 %v66
  %113 = vmatprep.subr.mxu0 0.0
  %114 = vmatpush1.msra.mxu0 %v65
  %115 = vmatprep.subr.mxu0 0.0
  %116 = vmatpush1.msra.mxu0 %v64
  %117 = vmatprep.subr.mxu0 0.0
  %118 = vmatpush1.msra.mxu0 %v63
  %119 = vmatprep.subr.mxu0 0.0
  %120 = vmatpush1.msra.mxu0 %v62
  %121 = vmatprep.subr.mxu0 0.0
  %122 = vmatpush1.msra.mxu0 %v61
  %123 = vmatprep.subr.mxu0 0.0
  %124 = vmatpush1.msra.mxu0 %v60
  %125 = vmatprep.subr.mxu0 0.0
  %126 = vmatpush1.msra.mxu0 %v59
  %127 = vmatprep.subr.mxu0 0.0
  %128 = vmatpush1.msra.mxu0 %v58
  %129 = vmatprep.subr.mxu0 0.0
  %130 = vmatpush2.msra.mxu0 %v89
  %131 = vmatprep.subr.mxu0 0.0
  %132 = vmatpush2.msra.mxu0 %v88
  %133 = vmatprep.subr.mxu0 0.0
  %134 = vmatpush2.msra.mxu0 %v87
  %135 = vmatprep.subr.mxu0 0.0
  %136 = vmatpush2.msra.mxu0 %v86
  %137 = vmatprep.subr.mxu0 0.0
  %138 = vmatpush2.msra.mxu0 %v85
  %139 = vmatprep.subr.mxu0 0.0
  %140 = vmatpush2.msra.mxu0 %v84
  %141 = vmatprep.subr.mxu0 0.0
  %142 = vmatpush2.msra.mxu0 %v83
  %143 = vmatprep.subr.mxu0 0.0
  %144 = vmatpush2.msra.mxu0 %v82
  %145 = vmatprep.subr.mxu0 0.0
  %146 = vmatpush2.msra.mxu0 %v81
  %147 = vmatprep.subr.mxu0 0.0
  %148 = vmatpush2.msra.mxu0 %v80
  %149 = vmatprep.subr.mxu0 0.0
  %150 = vmatpush2.msra.mxu0 %v79
  %151 = vmatprep.subr.mxu0 0.0
  %152 = vmatpush2.msra.mxu0 %v78
  %153 = vmatprep.subr.mxu0 0.0
  %154 = vmatpush2.msra.mxu0 %v77
  %155 = vmatprep.subr.mxu0 0.0
  %156 = vmatpush2.msra.mxu0 %v76
  %157 = vmatprep.subr.mxu0 0.0
  %158 = vmatpush2.msra.mxu0 %v75
  %159 = vmatprep.subr.mxu0 0.0
  %160 = vmatpush2.msra.mxu0 %v74
  %161 = vmatprep.mubr.f32.mxu0 %v15
  %162 = vmatmul.mubr.f32.gmra.mxu0 %v14
  %v163 = vpop.f32.mrf.mxu0
  %v164 = vadd.f32 %v95, %v163
  %v165 = vpop.f32.mrf.mxu0
  %166 = vmatprep.mubr.f32.mxu0 %v17
  %167 = vmatmul.mubr.f32.gmra.mxu0 %v16
  %v168 = vpop.f32.mrf.mxu0
  %v169 = vadd.f32 %v95, %v168
  %v170 = vpop.f32.mrf.mxu0
  %171 = vmatprep.mubr.f32.mxu0 %v19
  %172 = vmatmul.mubr.f32.gmra.mxu0 %v18
  %v173 = vpop.f32.mrf.mxu0
  %v174 = vadd.f32 %v95, %v173
  %v175 = vpop.f32.mrf.mxu0
  %176 = vmatprep.mubr.f32.mxu0 %v21
  %177 = vmatmul.mubr.f32.gmra.mxu0 %v20
  %v178 = vpop.f32.mrf.mxu0
  %v179 = vadd.f32 %v95, %v178
  %v180 = vpop.f32.mrf.mxu0
  %181 = vmatprep.mubr.f32.mxu0 %v23
  %182 = vmatmul.mubr.f32.gmra.mxu0 %v22
  %v183 = vpop.f32.mrf.mxu0
  %v184 = vadd.f32 %v95, %v183
  %v185 = vpop.f32.mrf.mxu0
  %186 = vmatprep.mubr.f32.mxu0 %v25
  %187 = vmatmul.mubr.f32.gmra.mxu0 %v24
  %v188 = vpop.f32.mrf.mxu0
  %v189 = vadd.f32 %v95, %v188
  %v190 = vpop.f32.mrf.mxu0
  %191 = vmatprep.mubr.f32.mxu0 %v27
  %192 = vmatmul.mubr.f32.gmra.mxu0 %v26
  %v193 = vpop.f32.mrf.mxu0
  %v194 = vadd.f32 %v95, %v193
  %v195 = vpop.f32.mrf.mxu0
  %196 = vmatprep.mubr.f32.mxu0 %v29
  %197 = vmatmul.mubr.f32.gmra.mxu0 %v28
  %v198 = vpop.f32.mrf.mxu0
  %v199 = vadd.f32 %v95, %v198
  %v200 = vpop.f32.mrf.mxu0
  %201 = vmatprep.mubr.f32.mxu0 %v31
  %202 = vmatmul.mubr.f32.gmra.mxu0 %v30
  %v203 = vpop.f32.mrf.mxu0
  %v204 = vadd.f32 %v95, %v203
  %v205 = vpop.f32.mrf.mxu0
  %206 = vmatprep.mubr.f32.mxu0 %v33
  %207 = vmatmul.mubr.f32.gmra.mxu0 %v32
  %v208 = vpop.f32.mrf.mxu0
  %v209 = vadd.f32 %v95, %v208
  %v210 = vpop.f32.mrf.mxu0
  %211 = vmatprep.mubr.f32.mxu0 %v35
  %212 = vmatmul.mubr.f32.gmra.mxu0 %v34
  %v213 = vpop.f32.mrf.mxu0
  %v214 = vadd.f32 %v95, %v213
  %v215 = vpop.f32.mrf.mxu0
  %216 = vmatprep.mubr.f32.mxu0 %v37
  %217 = vmatmul.mubr.f32.gmra.mxu0 %v36
  %v218 = vpop.f32.mrf.mxu0
  %v219 = vadd.f32 %v95, %v218
  %v220 = vpop.f32.mrf.mxu0
  %221 = vmatprep.mubr.f32.mxu0 %v39
  %222 = vmatmul.mubr.f32.gmra.mxu0 %v38
  %v223 = vpop.f32.mrf.mxu0
  %v224 = vadd.f32 %v95, %v223
  %v225 = vpop.f32.mrf.mxu0
  %226 = vmatprep.mubr.f32.mxu0 %v41
  %227 = vmatmul.mubr.f32.gmra.mxu0 %v40
  %v228 = vpop.f32.mrf.mxu0
  %v229 = vadd.f32 %v95, %v228
  %v230 = vpop.f32.mrf.mxu0
  %231 = vmatprep.mubr.f32.mxu0 %v43
  %232 = vmatmul.mubr.f32.gmra.mxu0 %v42
  %v233 = vpop.f32.mrf.mxu0
  %v234 = vadd.f32 %v95, %v233
  %v235 = vpop.f32.mrf.mxu0
  %236 = vmatprep.mubr.f32.mxu0 %v45
  %237 = vmatmul.mubr.f32.gmra.mxu0 %v44
  %v238 = vpop.f32.mrf.mxu0
  %v239 = vadd.f32 %v95, %v238
  %v240 = vpop.f32.mrf.mxu0
  %241 = vmatprep.mubr.f32.mxu0 %v47
  %242 = vmatmul.mubr.f32.gmra.mxu0 %v46
  %v243 = vpop.f32.mrf.mxu0
  %v244 = vadd.f32 %v95, %v243
  %v245 = vpop.f32.mrf.mxu0
  %246 = vmatprep.mubr.f32.mxu0 %v49
  %247 = vmatmul.mubr.f32.gmra.mxu0 %v48
  %v248 = vpop.f32.mrf.mxu0
  %v249 = vadd.f32 %v95, %v248
  %v250 = vpop.f32.mrf.mxu0
  %251 = vmatprep.mubr.f32.mxu0 %v51
  %252 = vmatmul.mubr.f32.gmra.mxu0 %v50
  %v253 = vpop.f32.mrf.mxu0
  %v254 = vadd.f32 %v95, %v253
  %v255 = vpop.f32.mrf.mxu0
  %256 = vmatprep.mubr.f32.mxu0 %v53
  %257 = vmatmul.mubr.f32.gmra.mxu0 %v52
  %v258 = vpop.f32.mrf.mxu0
  %v259 = vadd.f32 %v95, %v258
  %v260 = vpop.f32.mrf.mxu0
  %261 = vmatprep.mubr.f32.mxu0 %v55
  %262 = vmatmul.mubr.f32.gmra.mxu0 %v54
  %v263 = vpop.f32.mrf.mxu0
  %v264 = vadd.f32 %v95, %v263
  %v265 = vpop.f32.mrf.mxu0
  %266 = vmatprep.mubr.f32.mxu0 %v57
  %267 = vmatmul.mubr.f32.gmra.mxu0 %v56
  %v268 = vpop.f32.mrf.mxu0
  %v269 = vadd.f32 %v95, %v268
  %v270 = vpop.f32.mrf.mxu0
  %271 = vdwg.mxu0
  %v272 = vmax.f32 %v164, 0.0
  %v273 = vmax.f32 %v169, 0.0
  %v274 = vmax.f32 %v174, 0.0
  %v275 = vmax.f32 %v179, 0.0
  %v276 = vmax.f32 %v184, 0.0
  %v277 = vmax.f32 %v189, 0.0
  %v278 = vmax.f32 %v194, 0.0
  %v279 = vmax.f32 %v199, 0.0
  %v280 = vmax.f32 %v204, 0.0
  %v281 = vmax.f32 %v209, 0.0
  %v282 = vmax.f32 %v214, 0.0
  %v283 = vmax.f32 %v219, 0.0
  %v284 = vmax.f32 %v224, 0.0
  %v285 = vmax.f32 %v229, 0.0
  %v286 = vmax.f32 %v234, 0.0
  %v287 = vmax.f32 %v239, 0.0
  %v288 = vmax.f32 %v244, 0.0
  %v289 = vmax.f32 %v249, 0.0
  %v290 = vmax.f32 %v254, 0.0
  %v291 = vmax.f32 %v259, 0.0
  %v292 = vmax.f32 %v264, 0.0
  %v293 = vmax.f32 %v269, 0.0
  %294 = vst [vmem:[%s3] sm:$0xff] %v272
  %295 = vst [vmem:[%s3 + $0x8] sm:$0xff] %v273
  %296 = vst [vmem:[%s3 + $0x10] sm:$0xff] %v274
  %297 = vst [vmem:[%s3 + $0x18] sm:$0xff] %v275
  %298 = vst [vmem:[%s3 + $0x20] sm:$0xff] %v276
  %299 = vst [vmem:[%s3 + $0x28] sm:$0xff] %v277
  %300 = vst [vmem:[%s3 + $0x30] sm:$0xff] %v278
  %301 = vst [vmem:[%s3 + $0x38] sm:$0xff] %v279
  %302 = vst [vmem:[%s3 + $0x40] sm:$0xff] %v280
  %303 = vst [vmem:[%s3 + $0x48] sm:$0xff] %v281
  %304 = vst [vmem:[%s3 + $0x50] sm:$0xff] %v282
  %305 = vst [vmem:[%s3 + $0x58] sm:$0xff] %v283
  %306 = vst [vmem:[%s3 + $0x60] sm:$0xff] %v284
  %307 = vst [vmem:[%s3 + $0x68] sm:$0xff] %v285
  %308 = vst [vmem:[%s3 + $0x70] sm:$0xff] %v286
  %309 = vst [vmem:[%s3 + $0x78] sm:$0xff] %v287
  %310 = vst [vmem:[%s3 + $0x80] sm:$0xff] %v288
  %311 = vst [vmem:[%s3 + $0x88] sm:$0xff] %v289
  %312 = vst [vmem:[%s3 + $0x90] sm:$0xff] %v290
  %313 = vst [vmem:[%s3 + $0x98] sm:$0xff] %v291
  %314 = vst [vmem:[%s3 + $0xa0] sm:$0xff] %v292
  %315 = vst [vmem:[%s3 + $0xa8] sm:$0xff] %v293
  // Predicated region
  $region14: #{convnet_forward.5} parent=0 // pred_check
    _
  $region15: #{convnet_forward.5} parent=0 // pred_check_branch
    %317 = sbr.rel (0) target = $region17
  $region16: #{convnet_forward.5} parent=0 // pred_region
    _
  $region17: #{convnet_forward.5} parent=0 // pred_fallthru
    _
  // Predicated region
  $region18: #{convnet_forward.5} parent=0 // pred_check
    _
  $region19: #{convnet_forward.5} parent=0 // pred_check_branch
    %319 = sbr.rel (0) target = $region21
  $region20: #{convnet_forward.5} parent=0 // pred_region
    _
  $region21: #{convnet_forward.5} parent=0 // pred_fallthru
    _

// kernel: convnet_forward.6
$region0: #{convnet_forward.6}
  #allocation0 [shape = 'u32[]', space=smem, size = 0x4, offset = 0x4, fixed_abs, tag = 'smem constant byte address 0x4 - core index']
  #allocation1 [shape = 'u32[144,128]{1,0:T(1,128)}', space=vmem, size = 0x12000, scoped, tag = 'internal scratch']
  %s0 = inlined_call_operand.vmem [shape: f32[112,384], index: 0, kind: input, shape index: {}]
  %s1 = inlined_call_operand.vmem [shape: f32[384,128], index: 1, kind: input, shape index: {}]
  %s2 = inlined_call_operand.vmem [shape: f32[1,128], index: 2, kind: input, shape index: {}]
  %s3 = inlined_call_operand.vmem [shape: f32[112,128], index: 3, kind: output, shape index: {}]
  %s4 = sld [smem:[#allocation0]]
  $region22: #{convnet_forward.6} parent=0
    _
  %s6 = ssub.s32 1, %s4
  %s7 = scalar_select 0, %s6, %s4
  // Predicated region
  $region2: #{convnet_forward.6} parent=0 // pred_check
    _
  $region3: #{convnet_forward.6} parent=0 // pred_check_branch
    %9 = sbr.rel (0) target = $region5
  $region4: #{convnet_forward.6} parent=0 // pred_region
    _
  $region5: #{convnet_forward.6} parent=0 // pred_fallthru
    _
  // Predicated region
  $region6: #{convnet_forward.6} parent=0 // pred_check
    _
  $region7: #{convnet_forward.6} parent=0 // pred_check_branch
    %11 = sbr.rel (0) target = $region9
  $region8: #{convnet_forward.6} parent=0 // pred_region
    _
  $region9: #{convnet_forward.6} parent=0 // pred_fallthru
    _
  // Predicated region
  $region10: #{convnet_forward.6} parent=0 // pred_check
    _
  $region11: #{convnet_forward.6} parent=0 // pred_check_branch
    %13 = sbr.rel (0) target = $region13
  $region12: #{convnet_forward.6} parent=0 // pred_region
    _
  $region13: #{convnet_forward.6} parent=0 // pred_fallthru
    _
  %v14 = vld [vmem:[%s0] sm:$0xff]
  %v15 = vld [vmem:[%s0 + $0x8] sm:$0xff]
  %v16 = vld [vmem:[%s0 + $0x10] sm:$0xff]
  %v17 = vld [vmem:[%s0 + $0x18] sm:$0xff]
  %v18 = vld [vmem:[%s0 + $0x20] sm:$0xff]
  %v19 = vld [vmem:[%s0 + $0x28] sm:$0xff]
  %v20 = vld [vmem:[%s0 + $0x30] sm:$0xff]
  %v21 = vld [vmem:[%s0 + $0x38] sm:$0xff]
  %v22 = vld [vmem:[%s0 + $0x40] sm:$0xff]
  %v23 = vld [vmem:[%s0 + $0x48] sm:$0xff]
  %v24 = vld [vmem:[%s0 + $0x50] sm:$0xff]
  %v25 = vld [vmem:[%s0 + $0x58] sm:$0xff]
  %v26 = vld [vmem:[%s0 + $0x60] sm:$0xff]
  %v27 = vld [vmem:[%s0 + $0x68] sm:$0xff]
  %v28 = vld [vmem:[%s0 + $0x70] sm:$0xff]
  %v29 = vld [vmem:[%s0 + $0x78] sm:$0xff]
  %v30 = vld [vmem:[%s0 + $0x80] sm:$0xff]
  %v31 = vld [vmem:[%s0 + $0x88] sm:$0xff]
  %v32 = vld [vmem:[%s0 + $0x90] sm:$0xff]
  %v33 = vld [vmem:[%s0 + $0x98] sm:$0xff]
  %v34 = vld [vmem:[%s0 + $0xa0] sm:$0xff]
  %v35 = vld [vmem:[%s0 + $0xa8] sm:$0xff]
  %v36 = vld [vmem:[%s0 + $0xb0] sm:$0xff]
  %v37 = vld [vmem:[%s0 + $0xb8] sm:$0xff]
  %v38 = vld [vmem:[%s0 + $0xc0] sm:$0xff]
  %v39 = vld [vmem:[%s0 + $0xc8] sm:$0xff]
  %v40 = vld [vmem:[%s0 + $0xd0] sm:$0xff]
  %v41 = vld [vmem:[%s0 + $0xd8] sm:$0xff]
  %v42 = vld [vmem:[%s0 + $0xe0] sm:$0xff]
  %v43 = vld [vmem:[%s0 + $0xe8] sm:$0xff]
  %v44 = vld [vmem:[%s0 + $0xf0] sm:$0xff]
  %v45 = vld [vmem:[%s0 + $0xf8] sm:$0xff]
  %v46 = vld [vmem:[%s0 + $0x100] sm:$0xff]
  %v47 = vld [vmem:[%s0 + $0x108] sm:$0xff]
  %v48 = vld [vmem:[%s0 + $0x110] sm:$0xff]
  %v49 = vld [vmem:[%s0 + $0x118] sm:$0xff]
  %v50 = vld [vmem:[%s0 + $0x120] sm:$0xff]
  %v51 = vld [vmem:[%s0 + $0x128] sm:$0xff]
  %v52 = vld [vmem:[%s0 + $0x130] sm:$0xff]
  %v53 = vld [vmem:[%s0 + $0x138] sm:$0xff]
  %v54 = vld [vmem:[%s0 + $0x140] sm:$0xff]
  %v55 = vld [vmem:[%s0 + $0x148] sm:$0xff]
  %v56 = vld [vmem:[%s1] sm:$0xff]
  %v57 = vld [vmem:[%s1 + $0x8] sm:$0xff]
  %v58 = vld [vmem:[%s1 + $0x10] sm:$0xff]
  %v59 = vld [vmem:[%s1 + $0x18] sm:$0xff]
  %v60 = vld [vmem:[%s1 + $0x20] sm:$0xff]
  %v61 = vld [vmem:[%s1 + $0x28] sm:$0xff]
  %v62 = vld [vmem:[%s1 + $0x30] sm:$0xff]
  %v63 = vld [vmem:[%s1 + $0x38] sm:$0xff]
  %v64 = vld [vmem:[%s1 + $0x40] sm:$0xff]
  %v65 = vld [vmem:[%s1 + $0x48] sm:$0xff]
  %v66 = vld [vmem:[%s1 + $0x50] sm:$0xff]
  %v67 = vld [vmem:[%s1 + $0x58] sm:$0xff]
  %v68 = vld [vmem:[%s1 + $0x60] sm:$0xff]
  %v69 = vld [vmem:[%s1 + $0x68] sm:$0xff]
  %v70 = vld [vmem:[%s1 + $0x70] sm:$0xff]
  %v71 = vld [vmem:[%s1 + $0x78] sm:$0xff]
  %v72 = vld [vmem:[%s1 + $0x80] sm:$0xff]
  %v73 = vld [vmem:[%s1 + $0x88] sm:$0xff]
  %v74 = vld [vmem:[%s1 + $0x90] sm:$0xff]
  %v75 = vld [vmem:[%s1 + $0x98] sm:$0xff]
  %v76 = vld [vmem:[%s1 + $0xa0] sm:$0xff]
  %v77 = vld [vmem:[%s1 + $0xa8] sm:$0xff]
  %v78 = vld [vmem:[%s1 + $0xb0] sm:$0xff]
  %v79 = vld [vmem:[%s1 + $0xb8] sm:$0xff]
  %v80 = vld [vmem:[%s1 + $0xc0] sm:$0xff]
  %v81 = vld [vmem:[%s1 + $0xc8] sm:$0xff]
  %v82 = vld [vmem:[%s1 + $0xd0] sm:$0xff]
  %v83 = vld [vmem:[%s1 + $0xd8] sm:$0xff]
  %v84 = vld [vmem:[%s1 + $0xe0] sm:$0xff]
  %v85 = vld [vmem:[%s1 + $0xe8] sm:$0xff]
  %v86 = vld [vmem:[%s1 + $0xf0] sm:$0xff]
  %v87 = vld [vmem:[%s1 + $0xf8] sm:$0xff]
  %v88 = vld [vmem:[%s1 + $0x100] sm:$0xff]
  %v89 = vld [vmem:[%s1 + $0x108] sm:$0xff]
  %v90 = vld [vmem:[%s1 + $0x110] sm:$0xff]
  %v91 = vld [vmem:[%s1 + $0x118] sm:$0xff]
  %v92 = vld [vmem:[%s1 + $0x120] sm:$0xff]
  %v93 = vld [vmem:[%s1 + $0x128] sm:$0xff]
  %v94 = vld [vmem:[%s1 + $0x130] sm:$0xff]
  %v95 = vld [vmem:[%s1 + $0x138] sm:$0xff]
  %v96 = vld [vmem:[%s1 + $0x140] sm:$0xff]
  %v97 = vld [vmem:[%s1 + $0x148] sm:$0xff]
  %v98 = vld [vmem:[%s1 + $0x150] sm:$0xff]
  %v99 = vld [vmem:[%s1 + $0x158] sm:$0xff]
  %v100 = vld [vmem:[%s1 + $0x160] sm:$0xff]
  %v101 = vld [vmem:[%s1 + $0x168] sm:$0xff]
  %v102 = vld [vmem:[%s1 + $0x170] sm:$0xff]
  %v103 = vld [vmem:[%s1 + $0x178] sm:$0xff]
  %v104 = vld [vmem:[%s2] sm:$0x1]
  %v106 = vlaneseq
  %v107 = vshrl.u32 %v106, 7
  %v108 = vsub.s32 0, %v107
  %v109 = vrot.slane %v104, %v108
  %111 = vmatprep.subr.mxu0 0.0
  %112 = vmatpush1.msra.mxu0 %v71
  %113 = vmatprep.subr.mxu0 0.0
  %114 = vmatpush1.msra.mxu0 %v70
  %115 = vmatprep.subr.mxu0 0.0
  %116 = vmatpush1.msra.mxu0 %v69
  %117 = vmatprep.subr.mxu0 0.0
  %118 = vmatpush1.msra.mxu0 %v68
  %119 = vmatprep.subr.mxu0 0.0
  %120 = vmatpush1.msra.mxu0 %v67
  %121 = vmatprep.subr.mxu0 0.0
  %122 = vmatpush1.msra.mxu0 %v66
  %123 = vmatprep.subr.mxu0 0.0
  %124 = vmatpush1.msra.mxu0 %v65
  %125 = vmatprep.subr.mxu0 0.0
  %126 = vmatpush1.msra.mxu0 %v64
  %127 = vmatprep.subr.mxu0 0.0
  %128 = vmatpush1.msra.mxu0 %v63
  %129 = vmatprep.subr.mxu0 0.0
  %130 = vmatpush1.msra.mxu0 %v62
  %131 = vmatprep.subr.mxu0 0.0
  %132 = vmatpush1.msra.mxu0 %v61
  %133 = vmatprep.subr.mxu0 0.0
  %134 = vmatpush1.msra.mxu0 %v60
  %135 = vmatprep.subr.mxu0 0.0
  %136 = vmatpush1.msra.mxu0 %v59
  %137 = vmatprep.subr.mxu0 0.0
  %138 = vmatpush1.msra.mxu0 %v58
  %139 = vmatprep.subr.mxu0 0.0
  %140 = vmatpush1.msra.mxu0 %v57
  %141 = vmatprep.subr.mxu0 0.0
  %142 = vmatpush1.msra.mxu0 %v56
  %143 = vmatprep.subr.mxu0 0.0
  %144 = vmatpush2.msra.mxu0 %v87
  %145 = vmatprep.subr.mxu0 0.0
  %146 = vmatpush2.msra.mxu0 %v86
  %147 = vmatprep.subr.mxu0 0.0
  %148 = vmatpush2.msra.mxu0 %v85
  %149 = vmatprep.subr.mxu0 0.0
  %150 = vmatpush2.msra.mxu0 %v84
  %151 = vmatprep.subr.mxu0 0.0
  %152 = vmatpush2.msra.mxu0 %v83
  %153 = vmatprep.subr.mxu0 0.0
  %154 = vmatpush2.msra.mxu0 %v82
  %155 = vmatprep.subr.mxu0 0.0
  %156 = vmatpush2.msra.mxu0 %v81
  %157 = vmatprep.subr.mxu0 0.0
  %158 = vmatpush2.msra.mxu0 %v80
  %159 = vmatprep.subr.mxu0 0.0
  %160 = vmatpush2.msra.mxu0 %v79
  %161 = vmatprep.subr.mxu0 0.0
  %162 = vmatpush2.msra.mxu0 %v78
  %163 = vmatprep.subr.mxu0 0.0
  %164 = vmatpush2.msra.mxu0 %v77
  %165 = vmatprep.subr.mxu0 0.0
  %166 = vmatpush2.msra.mxu0 %v76
  %167 = vmatprep.subr.mxu0 0.0
  %168 = vmatpush2.msra.mxu0 %v75
  %169 = vmatprep.subr.mxu0 0.0
  %170 = vmatpush2.msra.mxu0 %v74
  %171 = vmatprep.subr.mxu0 0.0
  %172 = vmatpush2.msra.mxu0 %v73
  %173 = vmatprep.subr.mxu0 0.0
  %174 = vmatpush2.msra.mxu0 %v72
  %175 = vmatprep.mubr.f32.mxu0 %v15
  %176 = vmatmul.mubr.f32.gmra.mxu0 %v14
  %v177 = vpop.f32.mrf.mxu0
  %v178 = vadd.f32 %v109, %v177
  %v179 = vpop.f32.mrf.mxu0
  %180 = vmatprep.mubr.f32.mxu0 %v18
  %181 = vmatmul.mubr.f32.gmra.mxu0 %v17
  %v182 = vpop.f32.mrf.mxu0
  %v183 = vadd.f32 %v109, %v182
  %v184 = vpop.f32.mrf.mxu0
  %185 = vmatprep.mubr.f32.mxu0 %v21
  %186 = vmatmul.mubr.f32.gmra.mxu0 %v20
  %v187 = vpop.f32.mrf.mxu0
  %v188 = vadd.f32 %v109, %v187
  %v189 = vpop.f32.mrf.mxu0
  %190 = vmatprep.mubr.f32.mxu0 %v24
  %191 = vmatmul.mubr.f32.gmra.mxu0 %v23
  %v192 = vpop.f32.mrf.mxu0
  %v193 = vadd.f32 %v109, %v192
  %v194 = vpop.f32.mrf.mxu0
  %195 = vmatprep.mubr.f32.mxu0 %v27
  %196 = vmatmul.mubr.f32.gmra.mxu0 %v26
  %v197 = vpop.f32.mrf.mxu0
  %v198 = vadd.f32 %v109, %v197
  %v199 = vpop.f32.mrf.mxu0
  %200 = vmatprep.mubr.f32.mxu0 %v30
  %201 = vmatmul.mubr.f32.gmra.mxu0 %v29
  %v202 = vpop.f32.mrf.mxu0
  %v203 = vadd.f32 %v109, %v202
  %v204 = vpop.f32.mrf.mxu0
  %205 = vmatprep.mubr.f32.mxu0 %v33
  %206 = vmatmul.mubr.f32.gmra.mxu0 %v32
  %v207 = vpop.f32.mrf.mxu0
  %v208 = vadd.f32 %v109, %v207
  %v209 = vpop.f32.mrf.mxu0
  %210 = vmatprep.mubr.f32.mxu0 %v36
  %211 = vmatmul.mubr.f32.gmra.mxu0 %v35
  %v212 = vpop.f32.mrf.mxu0
  %v213 = vadd.f32 %v109, %v212
  %v214 = vpop.f32.mrf.mxu0
  %215 = vmatprep.mubr.f32.mxu0 %v39
  %216 = vmatmul.mubr.f32.gmra.mxu0 %v38
  %v217 = vpop.f32.mrf.mxu0
  %v218 = vadd.f32 %v109, %v217
  %v219 = vpop.f32.mrf.mxu0
  %220 = vmatprep.mubr.f32.mxu0 %v42
  %221 = vmatmul.mubr.f32.gmra.mxu0 %v41
  %v222 = vpop.f32.mrf.mxu0
  %v223 = vadd.f32 %v109, %v222
  %v224 = vpop.f32.mrf.mxu0
  %225 = vmatprep.mubr.f32.mxu0 %v45
  %226 = vmatmul.mubr.f32.gmra.mxu0 %v44
  %v227 = vpop.f32.mrf.mxu0
  %v228 = vadd.f32 %v109, %v227
  %v229 = vpop.f32.mrf.mxu0
  %230 = vmatprep.mubr.f32.mxu0 %v48
  %231 = vmatmul.mubr.f32.gmra.mxu0 %v47
  %v232 = vpop.f32.mrf.mxu0
  %v233 = vadd.f32 %v109, %v232
  %v234 = vpop.f32.mrf.mxu0
  %235 = vmatprep.mubr.f32.mxu0 %v51
  %236 = vmatmul.mubr.f32.gmra.mxu0 %v50
  %v237 = vpop.f32.mrf.mxu0
  %v238 = vadd.f32 %v109, %v237
  %v239 = vpop.f32.mrf.mxu0
  %240 = vmatprep.mubr.f32.mxu0 %v54
  %241 = vmatmul.mubr.f32.gmra.mxu0 %v53
  %v242 = vpop.f32.mrf.mxu0
  %v243 = vadd.f32 %v109, %v242
  %v244 = vpop.f32.mrf.mxu0
  %245 = vdwg.mxu0
  %246 = vmatprep.subr.mxu0 0.0
  %247 = vmatpush1.msra.mxu0 %v103
  %248 = vmatprep.subr.mxu0 0.0
  %249 = vmatpush1.msra.mxu0 %v102
  %250 = vmatprep.subr.mxu0 0.0
  %251 = vmatpush1.msra.mxu0 %v101
  %252 = vmatprep.subr.mxu0 0.0
  %253 = vmatpush1.msra.mxu0 %v100
  %254 = vmatprep.subr.mxu0 0.0
  %255 = vmatpush1.msra.mxu0 %v99
  %256 = vmatprep.subr.mxu0 0.0
  %257 = vmatpush1.msra.mxu0 %v98
  %258 = vmatprep.subr.mxu0 0.0
  %259 = vmatpush1.msra.mxu0 %v97
  %260 = vmatprep.subr.mxu0 0.0
  %261 = vmatpush1.msra.mxu0 %v96
  %262 = vmatprep.subr.mxu0 0.0
  %263 = vmatpush1.msra.mxu0 %v95
  %264 = vmatprep.subr.mxu0 0.0
  %265 = vmatpush1.msra.mxu0 %v94
  %266 = vmatprep.subr.mxu0 0.0
  %267 = vmatpush1.msra.mxu0 %v93
  %268 = vmatprep.subr.mxu0 0.0
  %269 = vmatpush1.msra.mxu0 %v92
  %270 = vmatprep.subr.mxu0 0.0
  %271 = vmatpush1.msra.mxu0 %v91
  %272 = vmatprep.subr.mxu0 0.0
  %273 = vmatpush1.msra.mxu0 %v90
  %274 = vmatprep.subr.mxu0 0.0
  %275 = vmatpush1.msra.mxu0 %v89
  %276 = vmatprep.subr.mxu0 0.0
  %277 = vmatpush1.msra.mxu0 %v88
  %278 = vmatprep.subr.mxu0 0.0
  %279 = vmatpush2.msra.mxu0 0.0
  %280 = vmatprep.subr.mxu0 0.0
  %281 = vmatpush2.msra.mxu0 0.0
  %282 = vmatprep.subr.mxu0 0.0
  %283 = vmatpush2.msra.mxu0 0.0
  %284 = vmatprep.subr.mxu0 0.0
  %285 = vmatpush2.msra.mxu0 0.0
  %286 = vmatprep.subr.mxu0 0.0
  %287 = vmatpush2.msra.mxu0 0.0
  %288 = vmatprep.subr.mxu0 0.0
  %289 = vmatpush2.msra.mxu0 0.0
  %290 = vmatprep.subr.mxu0 0.0
  %291 = vmatpush2.msra.mxu0 0.0
  %292 = vmatprep.subr.mxu0 0.0
  %293 = vmatpush2.msra.mxu0 0.0
  %294 = vmatprep.subr.mxu0 0.0
  %295 = vmatpush2.msra.mxu0 0.0
  %296 = vmatprep.subr.mxu0 0.0
  %297 = vmatpush2.msra.mxu0 0.0
  %298 = vmatprep.subr.mxu0 0.0
  %299 = vmatpush2.msra.mxu0 0.0
  %300 = vmatprep.subr.mxu0 0.0
  %301 = vmatpush2.msra.mxu0 0.0
  %302 = vmatprep.subr.mxu0 0.0
  %303 = vmatpush2.msra.mxu0 0.0
  %304 = vmatprep.subr.mxu0 0.0
  %305 = vmatpush2.msra.mxu0 0.0
  %306 = vmatprep.subr.mxu0 0.0
  %307 = vmatpush2.msra.mxu0 0.0
  %308 = vmatprep.subr.mxu0 0.0
  %309 = vmatpush2.msra.mxu0 0.0
  %310 = vmatprep.mubr.f32.mxu0 0.0
  %311 = vmatmul.mubr.f32.gmra.mxu0 %v16
  %v312 = vpop.f32.mrf.mxu0
  %v313 = vadd.f32 %v178, %v312
  %v314 = vpop.f32.mrf.mxu0
  %315 = vmatprep.mubr.f32.mxu0 0.0
  %316 = vmatmul.mubr.f32.gmra.mxu0 %v19
  %v317 = vpop.f32.mrf.mxu0
  %v318 = vadd.f32 %v183, %v317
  %v319 = vpop.f32.mrf.mxu0
  %320 = vmatprep.mubr.f32.mxu0 0.0
  %321 = vmatmul.mubr.f32.gmra.mxu0 %v22
  %v322 = vpop.f32.mrf.mxu0
  %v323 = vadd.f32 %v188, %v322
  %v324 = vpop.f32.mrf.mxu0
  %325 = vmatprep.mubr.f32.mxu0 0.0
  %326 = vmatmul.mubr.f32.gmra.mxu0 %v25
  %v327 = vpop.f32.mrf.mxu0
  %v328 = vadd.f32 %v193, %v327
  %v329 = vpop.f32.mrf.mxu0
  %330 = vmatprep.mubr.f32.mxu0 0.0
  %331 = vmatmul.mubr.f32.gmra.mxu0 %v28
  %v332 = vpop.f32.mrf.mxu0
  %v333 = vadd.f32 %v198, %v332
  %v334 = vpop.f32.mrf.mxu0
  %335 = vmatprep.mubr.f32.mxu0 0.0
  %336 = vmatmul.mubr.f32.gmra.mxu0 %v31
  %v337 = vpop.f32.mrf.mxu0
  %v338 = vadd.f32 %v203, %v337
  %v339 = vpop.f32.mrf.mxu0
  %340 = vmatprep.mubr.f32.mxu0 0.0
  %341 = vmatmul.mubr.f32.gmra.mxu0 %v34
  %v342 = vpop.f32.mrf.mxu0
  %v343 = vadd.f32 %v208, %v342
  %v344 = vpop.f32.mrf.mxu0
  %345 = vmatprep.mubr.f32.mxu0 0.0
  %346 = vmatmul.mubr.f32.gmra.mxu0 %v37
  %v347 = vpop.f32.mrf.mxu0
  %v348 = vadd.f32 %v213, %v347
  %v349 = vpop.f32.mrf.mxu0
  %350 = vmatprep.mubr.f32.mxu0 0.0
  %351 = vmatmul.mubr.f32.gmra.mxu0 %v40
  %v352 = vpop.f32.mrf.mxu0
  %v353 = vadd.f32 %v218, %v352
  %v354 = vpop.f32.mrf.mxu0
  %355 = vmatprep.mubr.f32.mxu0 0.0
  %356 = vmatmul.mubr.f32.gmra.mxu0 %v43
  %v357 = vpop.f32.mrf.mxu0
  %v358 = vadd.f32 %v223, %v357
  %v359 = vpop.f32.mrf.mxu0
  %360 = vmatprep.mubr.f32.mxu0 0.0
  %361 = vmatmul.mubr.f32.gmra.mxu0 %v46
  %v362 = vpop.f32.mrf.mxu0
  %v363 = vadd.f32 %v228, %v362
  %v364 = vpop.f32.mrf.mxu0
  %365 = vmatprep.mubr.f32.mxu0 0.0
  %366 = vmatmul.mubr.f32.gmra.mxu0 %v49
  %v367 = vpop.f32.mrf.mxu0
  %v368 = vadd.f32 %v233, %v367
  %v369 = vpop.f32.mrf.mxu0
  %370 = vmatprep.mubr.f32.mxu0 0.0
  %371 = vmatmul.mubr.f32.gmra.mxu0 %v52
  %v372 = vpop.f32.mrf.mxu0
  %v373 = vadd.f32 %v238, %v372
  %v374 = vpop.f32.mrf.mxu0
  %375 = vmatprep.mubr.f32.mxu0 0.0
  %376 = vmatmul.mubr.f32.gmra.mxu0 %v55
  %v377 = vpop.f32.mrf.mxu0
  %v378 = vadd.f32 %v243, %v377
  %v379 = vpop.f32.mrf.mxu0
  %380 = vdwg.mxu0
  %v381 = vmax.f32 %v313, 0.0
  %v382 = vmax.f32 %v318, 0.0
  %v383 = vmax.f32 %v323, 0.0
  %v384 = vmax.f32 %v328, 0.0
  %v385 = vmax.f32 %v333, 0.0
  %v386 = vmax.f32 %v338, 0.0
  %v387 = vmax.f32 %v343, 0.0
  %v388 = vmax.f32 %v348, 0.0
  %v389 = vmax.f32 %v353, 0.0
  %v390 = vmax.f32 %v358, 0.0
  %v391 = vmax.f32 %v363, 0.0
  %v392 = vmax.f32 %v368, 0.0
  %v393 = vmax.f32 %v373, 0.0
  %v394 = vmax.f32 %v378, 0.0
  %395 = vst [vmem:[%s3] sm:$0xff] %v381
  %396 = vst [vmem:[%s3 + $0x8] sm:$0xff] %v382
  %397 = vst [vmem:[%s3 + $0x10] sm:$0xff] %v383
  %398 = vst [vmem:[%s3 + $0x18] sm:$0xff] %v384
  %399 = vst [vmem:[%s3 + $0x20] sm:$0xff] %v385
  %400 = vst [vmem:[%s3 + $0x28] sm:$0xff] %v386
  %401 = vst [vmem:[%s3 + $0x30] sm:$0xff] %v387
  %402 = vst [vmem:[%s3 + $0x38] sm:$0xff] %v388
  %403 = vst [vmem:[%s3 + $0x40] sm:$0xff] %v389
  %404 = vst [vmem:[%s3 + $0x48] sm:$0xff] %v390
  %405 = vst [vmem:[%s3 + $0x50] sm:$0xff] %v391
  %406 = vst [vmem:[%s3 + $0x58] sm:$0xff] %v392
  %407 = vst [vmem:[%s3 + $0x60] sm:$0xff] %v393
  %408 = vst [vmem:[%s3 + $0x68] sm:$0xff] %v394
  // Predicated region
  $region14: #{convnet_forward.6} parent=0 // pred_check
    _
  $region15: #{convnet_forward.6} parent=0 // pred_check_branch
    %410 = sbr.rel (0) target = $region17
  $region16: #{convnet_forward.6} parent=0 // pred_region
    _
  $region17: #{convnet_forward.6} parent=0 // pred_fallthru
    _
  // Predicated region
  $region18: #{convnet_forward.6} parent=0 // pred_check
    _
  $region19: #{convnet_forward.6} parent=0 // pred_check_branch
    %412 = sbr.rel (0) target = $region21
  $region20: #{convnet_forward.6} parent=0 // pred_region
    _
  $region21: #{convnet_forward.6} parent=0 // pred_fallthru
    _

// kernel: convnet_forward.7
$region0: #{convnet_forward.7}
  #allocation0 [shape = 'u32[]', space=smem, size = 0x4, offset = 0x4, fixed_abs, tag = 'smem constant byte address 0x4 - core index']
  #allocation1 [shape = 'u32[144,128]{1,0:T(1,128)}', space=vmem, size = 0x12000, scoped, tag = 'internal scratch']
  %s0 = inlined_call_operand.vmem [shape: f32[16,1664], index: 0, kind: input, shape index: {}]
  %s1 = inlined_call_operand.vmem [shape: f32[1664,512], index: 1, kind: input, shape index: {}]
  %s2 = inlined_call_operand.vmem [shape: f32[1,512], index: 2, kind: input, shape index: {}]
  %s3 = inlined_call_operand.vmem [shape: f32[512,128], index: 3, kind: input, shape index: {}]
  %s4 = inlined_call_operand.vmem [shape: f32[1,128], index: 4, kind: input, shape index: {}]
  %s5 = inlined_call_operand.vmem [shape: f32[16,512], index: 5, kind: output, shape index: {0}]
  %s6 = inlined_call_operand.vmem [shape: f32[16,128], index: 6, kind: output, shape index: {1}]
  %7 = xla_tuple %s5, %s6
  %s8 = sld [smem:[#allocation0]]
  $region38: #{convnet_forward.7} parent=0
    _
  %s10 = ssub.s32 1, %s8
  %s11 = scalar_select 0, %s10, %s8
  // Predicated region
  $region2: #{convnet_forward.7} parent=0 // pred_check
    _
  $region3: #{convnet_forward.7} parent=0 // pred_check_branch
    %13 = sbr.rel (0) target = $region5
  $region4: #{convnet_forward.7} parent=0 // pred_region
    _
  $region5: #{convnet_forward.7} parent=0 // pred_fallthru
    _
  // Predicated region
  $region6: #{convnet_forward.7} parent=0 // pred_check
    _
  $region7: #{convnet_forward.7} parent=0 // pred_check_branch
    %15 = sbr.rel (0) target = $region9
  $region8: #{convnet_forward.7} parent=0 // pred_region
    _
  $region9: #{convnet_forward.7} parent=0 // pred_fallthru
    _
  // Predicated region
  $region10: #{convnet_forward.7} parent=0 // pred_check
    _
  $region11: #{convnet_forward.7} parent=0 // pred_check_branch
    %17 = sbr.rel (0) target = $region13
  $region12: #{convnet_forward.7} parent=0 // pred_region
    _
  $region13: #{convnet_forward.7} parent=0 // pred_fallthru
    _
  // Predicated region
  $region14: #{convnet_forward.7} parent=0 // pred_check
    _
  $region15: #{convnet_forward.7} parent=0 // pred_check_branch
    %19 = sbr.rel (0) target = $region17
  $region16: #{convnet_forward.7} parent=0 // pred_region
    _
  $region17: #{convnet_forward.7} parent=0 // pred_fallthru
    _
  // Predicated region
  $region18: #{convnet_forward.7} parent=0 // pred_check
    _
  $region19: #{convnet_forward.7} parent=0 // pred_check_branch
    %21 = sbr.rel (0) target = $region21
  $region20: #{convnet_forward.7} parent=0 // pred_region
    _
  $region21: #{convnet_forward.7} parent=0 // pred_fallthru
    _
  %v22 = vld [vmem:[%s0] sm:$0xff]
  %v23 = vld [vmem:[%s0 + $0x8] sm:$0xff]
  %v24 = vld [vmem:[%s0 + $0x10] sm:$0xff]
  %v25 = vld [vmem:[%s0 + $0x18] sm:$0xff]
  %v26 = vld [vmem:[%s0 + $0x20] sm:$0xff]
  %v27 = vld [vmem:[%s0 + $0x28] sm:$0xff]
  %v28 = vld [vmem:[%s0 + $0x30] sm:$0xff]
  %v29 = vld [vmem:[%s0 + $0x38] sm:$0xff]
  %v30 = vld [vmem:[%s0 + $0x40] sm:$0xff]
  %v31 = vld [vmem:[%s0 + $0x48] sm:$0xff]
  %v32 = vld [vmem:[%s0 + $0x50] sm:$0xff]
  %v33 = vld [vmem:[%s0 + $0x58] sm:$0xff]
  %v34 = vld [vmem:[%s0 + $0x60] sm:$0xff]
  %v35 = vld [vmem:[%s0 + $0x68] sm:$0xff]
  %v36 = vld [vmem:[%s0 + $0x70] sm:$0xff]
  %v37 = vld [vmem:[%s0 + $0x78] sm:$0xff]
  %v38 = vld [vmem:[%s0 + $0x80] sm:$0xff]
  %v39 = vld [vmem:[%s0 + $0x88] sm:$0xff]
  %v40 = vld [vmem:[%s0 + $0x90] sm:$0xff]
  %v41 = vld [vmem:[%s0 + $0x98] sm:$0xff]
  %v42 = vld [vmem:[%s0 + $0xa0] sm:$0xff]
  %v43 = vld [vmem:[%s0 + $0xa8] sm:$0xff]
  %v44 = vld [vmem:[%s0 + $0xb0] sm:$0xff]
  %v45 = vld [vmem:[%s0 + $0xb8] sm:$0xff]
  %v46 = vld [vmem:[%s0 + $0xc0] sm:$0xff]
  %v47 = vld [vmem:[%s0 + $0xc8] sm:$0xff]
  %v48 = vld [vmem:[%s1] sm:$0xff]
  %v49 = vld [vmem:[%s1 + $0x8] sm:$0xff]
  %v50 = vld [vmem:[%s1 + $0x10] sm:$0xff]
  %v51 = vld [vmem:[%s1 + $0x18] sm:$0xff]
  %v52 = vld [vmem:[%s1 + $0x20] sm:$0xff]
  %v53 = vld [vmem:[%s1 + $0x28] sm:$0xff]
  %v54 = vld [vmem:[%s1 + $0x30] sm:$0xff]
  %v55 = vld [vmem:[%s1 + $0x38] sm:$0xff]
  %v56 = vld [vmem:[%s1 + $0x40] sm:$0xff]
  %v57 = vld [vmem:[%s1 + $0x48] sm:$0xff]
  %v58 = vld [vmem:[%s1 + $0x50] sm:$0xff]
  %v59 = vld [vmem:[%s1 + $0x58] sm:$0xff]
  %v60 = vld [vmem:[%s1 + $0x60] sm:$0xff]
  %v61 = vld [vmem:[%s1 + $0x68] sm:$0xff]
  %v62 = vld [vmem:[%s1 + $0x70] sm:$0xff]
  %v63 = vld [vmem:[%s1 + $0x78] sm:$0xff]
  %v64 = vld [vmem:[%s1 + $0x80] sm:$0xff]
  %v65 = vld [vmem:[%s1 + $0x88] sm:$0xff]
  %v66 = vld [vmem:[%s1 + $0x90] sm:$0xff]
  %v67 = vld [vmem:[%s1 + $0x98] sm:$0xff]
  %v68 = vld [vmem:[%s1 + $0xa0] sm:$0xff]
  %v69 = vld [vmem:[%s1 + $0xa8] sm:$0xff]
  %v70 = vld [vmem:[%s1 + $0xb0] sm:$0xff]
  %v71 = vld [vmem:[%s1 + $0xb8] sm:$0xff]
  %v72 = vld [vmem:[%s1 + $0xc0] sm:$0xff]
  %v73 = vld [vmem:[%s1 + $0xc8] sm:$0xff]
  %v74 = vld [vmem:[%s1 + $0xd0] sm:$0xff]
  %v75 = vld [vmem:[%s1 + $0xd8] sm:$0xff]
  %v76 = vld [vmem:[%s1 + $0xe0] sm:$0xff]
  %v77 = vld [vmem:[%s1 + $0xe8] sm:$0xff]
  %v78 = vld [vmem:[%s1 + $0xf0] sm:$0xff]
  %v79 = vld [vmem:[%s1 + $0xf8] sm:$0xff]
  %v80 = vld [vmem:[%s1 + $0x100] sm:$0xff]
  %v81 = vld [vmem:[%s1 + $0x108] sm:$0xff]
  %v82 = vld [vmem:[%s1 + $0x110] sm:$0xff]
  %v83 = vld [vmem:[%s1 + $0x118] sm:$0xff]
  %v84 = vld [vmem:[%s1 + $0x120] sm:$0xff]
  %v85 = vld [vmem:[%s1 + $0x128] sm:$0xff]
  %v86 = vld [vmem:[%s1 + $0x130] sm:$0xff]
  %v87 = vld [vmem:[%s1 + $0x138] sm:$0xff]
  %v88 = vld [vmem:[%s1 + $0x140] sm:$0xff]
  %v89 = vld [vmem:[%s1 + $0x148] sm:$0xff]
  %v90 = vld [vmem:[%s1 + $0x150] sm:$0xff]
  %v91 = vld [vmem:[%s1 + $0x158] sm:$0xff]
  %v92 = vld [vmem:[%s1 + $0x160] sm:$0xff]
  %v93 = vld [vmem:[%s1 + $0x168] sm:$0xff]
  %v94 = vld [vmem:[%s1 + $0x170] sm:$0xff]
  %v95 = vld [vmem:[%s1 + $0x178] sm:$0xff]
  %v96 = vld [vmem:[%s1 + $0x180] sm:$0xff]
  %v97 = vld [vmem:[%s1 + $0x188] sm:$0xff]
  %v98 = vld [vmem:[%s1 + $0x190] sm:$0xff]
  %v99 = vld [vmem:[%s1 + $0x198] sm:$0xff]
  %v100 = vld [vmem:[%s1 + $0x1a0] sm:$0xff]
  %v101 = vld [vmem:[%s1 + $0x1a8] sm:$0xff]
  %v102 = vld [vmem:[%s1 + $0x1b0] sm:$0xff]
  %v103 = vld [vmem:[%s1 + $0x1b8] sm:$0xff]
  %v104 = vld [vmem:[%s1 + $0x1c0] sm:$0xff]
  %v105 = vld [vmem:[%s1 + $0x1c8] sm:$0xff]
  %v106 = vld [vmem:[%s1 + $0x1d0] sm:$0xff]
  %v107 = vld [vmem:[%s1 + $0x1d8] sm:$0xff]
  %v108 = vld [vmem:[%s1 + $0x1e0] sm:$0xff]
  %v109 = vld [vmem:[%s1 + $0x1e8] sm:$0xff]
  %v110 = vld [vmem:[%s1 + $0x1f0] sm:$0xff]
  %v111 = vld [vmem:[%s1 + $0x1f8] sm:$0xff]
  %v112 = vld [vmem:[%s1 + $0x200] sm:$0xff]
  %v113 = vld [vmem:[%s1 + $0x208] sm:$0xff]
  %v114 = vld [vmem:[%s1 + $0x210] sm:$0xff]
  %v115 = vld [vmem:[%s1 + $0x218] sm:$0xff]
  %v116 = vld [vmem:[%s1 + $0x220] sm:$0xff]
  %v117 = vld [vmem:[%s1 + $0x228] sm:$0xff]
  %v118 = vld [vmem:[%s1 + $0x230] sm:$0xff]
  %v119 = vld [vmem:[%s1 + $0x238] sm:$0xff]
  %v120 = vld [vmem:[%s1 + $0x240] sm:$0xff]
  %v121 = vld [vmem:[%s1 + $0x248] sm:$0xff]
  %v122 = vld [vmem:[%s1 + $0x250] sm:$0xff]
  %v123 = vld [vmem:[%s1 + $0x258] sm:$0xff]
  %v124 = vld [vmem:[%s1 + $0x260] sm:$0xff]
  %v125 = vld [vmem:[%s1 + $0x268] sm:$0xff]
  %v126 = vld [vmem:[%s1 + $0x270] sm:$0xff]
  %v127 = vld [vmem:[%s1 + $0x278] sm:$0xff]
  %v128 = vld [vmem:[%s1 + $0x280] sm:$0xff]
  %v129 = vld [vmem:[%s1 + $0x288] sm:$0xff]
  %v130 = vld [vmem:[%s1 + $0x290] sm:$0xff]
  %v131 = vld [vmem:[%s1 + $0x298] sm:$0xff]
  %v132 = vld [vmem:[%s1 + $0x2a0] sm:$0xff]
  %v133 = vld [vmem:[%s1 + $0x2a8] sm:$0xff]
  %v134 = vld [vmem:[%s1 + $0x2b0] sm:$0xff]
  %v135 = vld [vmem:[%s1 + $0x2b8] sm:$0xff]
  %v136 = vld [vmem:[%s1 + $0x2c0] sm:$0xff]
  %v137 = vld [vmem:[%s1 + $0x2c8] sm:$0xff]
  %v138 = vld [vmem:[%s1 + $0x2d0] sm:$0xff]
  %v139 = vld [vmem:[%s1 + $0x2d8] sm:$0xff]
  %v140 = vld [vmem:[%s1 + $0x2e0] sm:$0xff]
  %v141 = vld [vmem:[%s1 + $0x2e8] sm:$0xff]
  %v142 = vld [vmem:[%s1 + $0x2f0] sm:$0xff]
  %v143 = vld [vmem:[%s1 + $0x2f8] sm:$0xff]
  %v144 = vld [vmem:[%s1 + $0x300] sm:$0xff]
  %v145 = vld [vmem:[%s1 + $0x308] sm:$0xff]
  %v146 = vld [vmem:[%s1 + $0x310] sm:$0xff]
  %v147 = vld [vmem:[%s1 + $0x318] sm:$0xff]
  %v148 = vld [vmem:[%s1 + $0x320] sm:$0xff]
  %v149 = vld [vmem:[%s1 + $0x328] sm:$0xff]
  %v150 = vld [vmem:[%s1 + $0x330] sm:$0xff]
  %v151 = vld [vmem:[%s1 + $0x338] sm:$0xff]
  %v152 = vld [vmem:[%s1 + $0x340] sm:$0xff]
  %v153 = vld [vmem:[%s1 + $0x348] sm:$0xff]
  %v154 = vld [vmem:[%s1 + $0x350] sm:$0xff]
  %v155 = vld [vmem:[%s1 + $0x358] sm:$0xff]
  %v156 = vld [vmem:[%s1 + $0x360] sm:$0xff]
  %v157 = vld [vmem:[%s1 + $0x368] sm:$0xff]
  %v158 = vld [vmem:[%s1 + $0x370] sm:$0xff]
  %v159 = vld [vmem:[%s1 + $0x378] sm:$0xff]
  %v160 = vld [vmem:[%s1 + $0x380] sm:$0xff]
  %v161 = vld [vmem:[%s1 + $0x388] sm:$0xff]
  %v162 = vld [vmem:[%s1 + $0x390] sm:$0xff]
  %v163 = vld [vmem:[%s1 + $0x398] sm:$0xff]
  %v164 = vld [vmem:[%s1 + $0x3a0] sm:$0xff]
  %v165 = vld [vmem:[%s1 + $0x3a8] sm:$0xff]
  %v166 = vld [vmem:[%s1 + $0x3b0] sm:$0xff]
  %v167 = vld [vmem:[%s1 + $0x3b8] sm:$0xff]
  %v168 = vld [vmem:[%s1 + $0x3c0] sm:$0xff]
  %v169 = vld [vmem:[%s1 + $0x3c8] sm:$0xff]
  %v170 = vld [vmem:[%s1 + $0x3d0] sm:$0xff]
  %v171 = vld [vmem:[%s1 + $0x3d8] sm:$0xff]
  %v172 = vld [vmem:[%s1 + $0x3e0] sm:$0xff]
  %v173 = vld [vmem:[%s1 + $0x3e8] sm:$0xff]
  %v174 = vld [vmem:[%s1 + $0x3f0] sm:$0xff]
  %v175 = vld [vmem:[%s1 + $0x3f8] sm:$0xff]
  %v176 = vld [vmem:[%s1 + $0x400] sm:$0xff]
  %v177 = vld [vmem:[%s1 + $0x408] sm:$0xff]
  %v178 = vld [vmem:[%s1 + $0x410] sm:$0xff]
  %v179 = vld [vmem:[%s1 + $0x418] sm:$0xff]
  %v180 = vld [vmem:[%s1 + $0x420] sm:$0xff]
  %v181 = vld [vmem:[%s1 + $0x428] sm:$0xff]
  %v182 = vld [vmem:[%s1 + $0x430] sm:$0xff]
  %v183 = vld [vmem:[%s1 + $0x438] sm:$0xff]
  %v184 = vld [vmem:[%s1 + $0x440] sm:$0xff]
  %v185 = vld [vmem:[%s1 + $0x448] sm:$0xff]
  %v186 = vld [vmem:[%s1 + $0x450] sm:$0xff]
  %v187 = vld [vmem:[%s1 + $0x458] sm:$0xff]
  %v188 = vld [vmem:[%s1 + $0x460] sm:$0xff]
  %v189 = vld [vmem:[%s1 + $0x468] sm:$0xff]
  %v190 = vld [vmem:[%s1 + $0x470] sm:$0xff]
  %v191 = vld [vmem:[%s1 + $0x478] sm:$0xff]
  %v192 = vld [vmem:[%s1 + $0x480] sm:$0xff]
  %v193 = vld [vmem:[%s1 + $0x488] sm:$0xff]
  %v194 = vld [vmem:[%s1 + $0x490] sm:$0xff]
  %v195 = vld [vmem:[%s1 + $0x498] sm:$0xff]
  %v196 = vld [vmem:[%s1 + $0x4a0] sm:$0xff]
  %v197 = vld [vmem:[%s1 + $0x4a8] sm:$0xff]
  %v198 = vld [vmem:[%s1 + $0x4b0] sm:$0xff]
  %v199 = vld [vmem:[%s1 + $0x4b8] sm:$0xff]
  %v200 = vld [vmem:[%s1 + $0x4c0] sm:$0xff]
  %v201 = vld [vmem:[%s1 + $0x4c8] sm:$0xff]
  %v202 = vld [vmem:[%s1 + $0x4d0] sm:$0xff]
  %v203 = vld [vmem:[%s1 + $0x4d8] sm:$0xff]
  %v204 = vld [vmem:[%s1 + $0x4e0] sm:$0xff]
  %v205 = vld [vmem:[%s1 + $0x4e8] sm:$0xff]
  %v206 = vld [vmem:[%s1 + $0x4f0] sm:$0xff]
  %v207 = vld [vmem:[%s1 + $0x4f8] sm:$0xff]
  %v208 = vld [vmem:[%s1 + $0x500] sm:$0xff]
  %v209 = vld [vmem:[%s1 + $0x508] sm:$0xff]
  %v210 = vld [vmem:[%s1 + $0x510] sm:$0xff]
  %v211 = vld [vmem:[%s1 + $0x518] sm:$0xff]
  %v212 = vld [vmem:[%s1 + $0x520] sm:$0xff]
  %v213 = vld [vmem:[%s1 + $0x528] sm:$0xff]
  %v214 = vld [vmem:[%s1 + $0x530] sm:$0xff]
  %v215 = vld [vmem:[%s1 + $0x538] sm:$0xff]
  %v216 = vld [vmem:[%s1 + $0x540] sm:$0xff]
  %v217 = vld [vmem:[%s1 + $0x548] sm:$0xff]
  %v218 = vld [vmem:[%s1 + $0x550] sm:$0xff]
  %v219 = vld [vmem:[%s1 + $0x558] sm:$0xff]
  %v220 = vld [vmem:[%s1 + $0x560] sm:$0xff]
  %v221 = vld [vmem:[%s1 + $0x568] sm:$0xff]
  %v222 = vld [vmem:[%s1 + $0x570] sm:$0xff]
  %v223 = vld [vmem:[%s1 + $0x578] sm:$0xff]
  %v224 = vld [vmem:[%s1 + $0x580] sm:$0xff]
  %v225 = vld [vmem:[%s1 + $0x588] sm:$0xff]
  %v226 = vld [vmem:[%s1 + $0x590] sm:$0xff]
  %v227 = vld [vmem:[%s1 + $0x598] sm:$0xff]
  %v228 = vld [vmem:[%s1 + $0x5a0] sm:$0xff]
  %v229 = vld [vmem:[%s1 + $0x5a8] sm:$0xff]
  %v230 = vld [vmem:[%s1 + $0x5b0] sm:$0xff]
  %v231 = vld [vmem:[%s1 + $0x5b8] sm:$0xff]
  %v232 = vld [vmem:[%s1 + $0x5c0] sm:$0xff]
  %v233 = vld [vmem:[%s1 + $0x5c8] sm:$0xff]
  %v234 = vld [vmem:[%s1 + $0x5d0] sm:$0xff]
  %v235 = vld [vmem:[%s1 + $0x5d8] sm:$0xff]
  %v236 = vld [vmem:[%s1 + $0x5e0] sm:$0xff]
  %v237 = vld [vmem:[%s1 + $0x5e8] sm:$0xff]
  %v238 = vld [vmem:[%s1 + $0x5f0] sm:$0xff]
  %v239 = vld [vmem:[%s1 + $0x5f8] sm:$0xff]
  %v240 = vld [vmem:[%s1 + $0x600] sm:$0xff]
  %v241 = vld [vmem:[%s1 + $0x608] sm:$0xff]
  %v242 = vld [vmem:[%s1 + $0x610] sm:$0xff]
  %v243 = vld [vmem:[%s1 + $0x618] sm:$0xff]
  %v244 = vld [vmem:[%s1 + $0x620] sm:$0xff]
  %v245 = vld [vmem:[%s1 + $0x628] sm:$0xff]
  %v246 = vld [vmem:[%s1 + $0x630] sm:$0xff]
  %v247 = vld [vmem:[%s1 + $0x638] sm:$0xff]
  %v248 = vld [vmem:[%s1 + $0x640] sm:$0xff]
  %v249 = vld [vmem:[%s1 + $0x648] sm:$0xff]
  %v250 = vld [vmem:[%s1 + $0x650] sm:$0xff]
  %v251 = vld [vmem:[%s1 + $0x658] sm:$0xff]
  %v252 = vld [vmem:[%s1 + $0x660] sm:$0xff]
  %v253 = vld [vmem:[%s1 + $0x668] sm:$0xff]
  %v254 = vld [vmem:[%s1 + $0x670] sm:$0xff]
  %v255 = vld [vmem:[%s1 + $0x678] sm:$0xff]
  %v256 = vld [vmem:[%s1 + $0x680] sm:$0xff]
  %v257 = vld [vmem:[%s1 + $0x688] sm:$0xff]
  %v258 = vld [vmem:[%s1 + $0x690] sm:$0xff]
  %v259 = vld [vmem:[%s1 + $0x698] sm:$0xff]
  %v260 = vld [vmem:[%s1 + $0x6a0] sm:$0xff]
  %v261 = vld [vmem:[%s1 + $0x6a8] sm:$0xff]
  %v262 = vld [vmem:[%s1 + $0x6b0] sm:$0xff]
  %v263 = vld [vmem:[%s1 + $0x6b8] sm:$0xff]
  %v264 = vld [vmem:[%s1 + $0x6c0] sm:$0xff]
  %v265 = vld [vmem:[%s1 + $0x6c8] sm:$0xff]
  %v266 = vld [vmem:[%s1 + $0x6d0] sm:$0xff]
  %v267 = vld [vmem:[%s1 + $0x6d8] sm:$0xff]
  %v268 = vld [vmem:[%s1 + $0x6e0] sm:$0xff]
  %v269 = vld [vmem:[%s1 + $0x6e8] sm:$0xff]
  %v270 = vld [vmem:[%s1 + $0x6f0] sm:$0xff]
  %v271 = vld [vmem:[%s1 + $0x6f8] sm:$0xff]
  %v272 = vld [vmem:[%s1 + $0x700] sm:$0xff]
  %v273 = vld [vmem:[%s1 + $0x708] sm:$0xff]
  %v274 = vld [vmem:[%s1 + $0x710] sm:$0xff]
  %v275 = vld [vmem:[%s1 + $0x718] sm:$0xff]
  %v276 = vld [vmem:[%s1 + $0x720] sm:$0xff]
  %v277 = vld [vmem:[%s1 + $0x728] sm:$0xff]
  %v278 = vld [vmem:[%s1 + $0x730] sm:$0xff]
  %v279 = vld [vmem:[%s1 + $0x738] sm:$0xff]
  %v280 = vld [vmem:[%s1 + $0x740] sm:$0xff]
  %v281 = vld [vmem:[%s1 + $0x748] sm:$0xff]
  %v282 = vld [vmem:[%s1 + $0x750] sm:$0xff]
  %v283 = vld [vmem:[%s1 + $0x758] sm:$0xff]
  %v284 = vld [vmem:[%s1 + $0x760] sm:$0xff]
  %v285 = vld [vmem:[%s1 + $0x768] sm:$0xff]
  %v286 = vld [vmem:[%s1 + $0x770] sm:$0xff]
  %v287 = vld [vmem:[%s1 + $0x778] sm:$0xff]
  %v288 = vld [vmem:[%s1 + $0x780] sm:$0xff]
  %v289 = vld [vmem:[%s1 + $0x788] sm:$0xff]
  %v290 = vld [vmem:[%s1 + $0x790] sm:$0xff]
  %v291 = vld [vmem:[%s1 + $0x798] sm:$0xff]
  %v292 = vld [vmem:[%s1 + $0x7a0] sm:$0xff]
  %v293 = vld [vmem:[%s1 + $0x7a8] sm:$0xff]
  %v294 = vld [vmem:[%s1 + $0x7b0] sm:$0xff]
  %v295 = vld [vmem:[%s1 + $0x7b8] sm:$0xff]
  %v296 = vld [vmem:[%s1 + $0x7c0] sm:$0xff]
  %v297 = vld [vmem:[%s1 + $0x7c8] sm:$0xff]
  %v298 = vld [vmem:[%s1 + $0x7d0] sm:$0xff]
  %v299 = vld [vmem:[%s1 + $0x7d8] sm:$0xff]
  %v300 = vld [vmem:[%s1 + $0x7e0] sm:$0xff]
  %v301 = vld [vmem:[%s1 + $0x7e8] sm:$0xff]
  %v302 = vld [vmem:[%s1 + $0x7f0] sm:$0xff]
  %v303 = vld [vmem:[%s1 + $0x7f8] sm:$0xff]
  %v304 = vld [vmem:[%s1 + $0x800] sm:$0xff]
  %v305 = vld [vmem:[%s1 + $0x808] sm:$0xff]
  %v306 = vld [vmem:[%s1 + $0x810] sm:$0xff]
  %v307 = vld [vmem:[%s1 + $0x818] sm:$0xff]
  %v308 = vld [vmem:[%s1 + $0x820] sm:$0xff]
  %v309 = vld [vmem:[%s1 + $0x828] sm:$0xff]
  %v310 = vld [vmem:[%s1 + $0x830] sm:$0xff]
  %v311 = vld [vmem:[%s1 + $0x838] sm:$0xff]
  %v312 = vld [vmem:[%s1 + $0x840] sm:$0xff]
  %v313 = vld [vmem:[%s1 + $0x848] sm:$0xff]
  %v314 = vld [vmem:[%s1 + $0x850] sm:$0xff]
  %v315 = vld [vmem:[%s1 + $0x858] sm:$0xff]
  %v316 = vld [vmem:[%s1 + $0x860] sm:$0xff]
  %v317 = vld [vmem:[%s1 + $0x868] sm:$0xff]
  %v318 = vld [vmem:[%s1 + $0x870] sm:$0xff]
  %v319 = vld [vmem:[%s1 + $0x878] sm:$0xff]
  %v320 = vld [vmem:[%s1 + $0x880] sm:$0xff]
  %v321 = vld [vmem:[%s1 + $0x888] sm:$0xff]
  %v322 = vld [vmem:[%s1 + $0x890] sm:$0xff]
  %v323 = vld [vmem:[%s1 + $0x898] sm:$0xff]
  %v324 = vld [vmem:[%s1 + $0x8a0] sm:$0xff]
  %v325 = vld [vmem:[%s1 + $0x8a8] sm:$0xff]
  %v326 = vld [vmem:[%s1 + $0x8b0] sm:$0xff]
  %v327 = vld [vmem:[%s1 + $0x8b8] sm:$0xff]
  %v328 = vld [vmem:[%s1 + $0x8c0] sm:$0xff]
  %v329 = vld [vmem:[%s1 + $0x8c8] sm:$0xff]
  %v330 = vld [vmem:[%s1 + $0x8d0] sm:$0xff]
  %v331 = vld [vmem:[%s1 + $0x8d8] sm:$0xff]
  %v332 = vld [vmem:[%s1 + $0x8e0] sm:$0xff]
  %v333 = vld [vmem:[%s1 + $0x8e8] sm:$0xff]
  %v334 = vld [vmem:[%s1 + $0x8f0] sm:$0xff]
  %v335 = vld [vmem:[%s1 + $0x8f8] sm:$0xff]
  %v336 = vld [vmem:[%s1 + $0x900] sm:$0xff]
  %v337 = vld [vmem:[%s1 + $0x908] sm:$0xff]
  %v338 = vld [vmem:[%s1 + $0x910] sm:$0xff]
  %v339 = vld [vmem:[%s1 + $0x918] sm:$0xff]
  %v340 = vld [vmem:[%s1 + $0x920] sm:$0xff]
  %v341 = vld [vmem:[%s1 + $0x928] sm:$0xff]
  %v342 = vld [vmem:[%s1 + $0x930] sm:$0xff]
  %v343 = vld [vmem:[%s1 + $0x938] sm:$0xff]
  %v344 = vld [vmem:[%s1 + $0x940] sm:$0xff]
  %v345 = vld [vmem:[%s1 + $0x948] sm:$0xff]
  %v346 = vld [vmem:[%s1 + $0x950] sm:$0xff]
  %v347 = vld [vmem:[%s1 + $0x958] sm:$0xff]
  %v348 = vld [vmem:[%s1 + $0x960] sm:$0xff]
  %v349 = vld [vmem:[%s1 + $0x968] sm:$0xff]
  %v350 = vld [vmem:[%s1 + $0x970] sm:$0xff]
  %v351 = vld [vmem:[%s1 + $0x978] sm:$0xff]
  %v352 = vld [vmem:[%s1 + $0x980] sm:$0xff]
  %v353 = vld [vmem:[%s1 + $0x988] sm:$0xff]
  %v354 = vld [vmem:[%s1 + $0x990] sm:$0xff]
  %v355 = vld [vmem:[%s1 + $0x998] sm:$0xff]
  %v356 = vld [vmem:[%s1 + $0x9a0] sm:$0xff]
  %v357 = vld [vmem:[%s1 + $0x9a8] sm:$0xff]
  %v358 = vld [vmem:[%s1 + $0x9b0] sm:$0xff]
  %v359 = vld [vmem:[%s1 + $0x9b8] sm:$0xff]
  %v360 = vld [vmem:[%s1 + $0x9c0] sm:$0xff]
  %v361 = vld [vmem:[%s1 + $0x9c8] sm:$0xff]
  %v362 = vld [vmem:[%s1 + $0x9d0] sm:$0xff]
  %v363 = vld [vmem:[%s1 + $0x9d8] sm:$0xff]
  %v364 = vld [vmem:[%s1 + $0x9e0] sm:$0xff]
  %v365 = vld [vmem:[%s1 + $0x9e8] sm:$0xff]
  %v366 = vld [vmem:[%s1 + $0x9f0] sm:$0xff]
  %v367 = vld [vmem:[%s1 + $0x9f8] sm:$0xff]
  %v368 = vld [vmem:[%s1 + $0xa00] sm:$0xff]
  %v369 = vld [vmem:[%s1 + $0xa08] sm:$0xff]
  %v370 = vld [vmem:[%s1 + $0xa10] sm:$0xff]
  %v371 = vld [vmem:[%s1 + $0xa18] sm:$0xff]
  %v372 = vld [vmem:[%s1 + $0xa20] sm:$0xff]
  %v373 = vld [vmem:[%s1 + $0xa28] sm:$0xff]
  %v374 = vld [vmem:[%s1 + $0xa30] sm:$0xff]
  %v375 = vld [vmem:[%s1 + $0xa38] sm:$0xff]
  %v376 = vld [vmem:[%s1 + $0xa40] sm:$0xff]
  %v377 = vld [vmem:[%s1 + $0xa48] sm:$0xff]
  %v378 = vld [vmem:[%s1 + $0xa50] sm:$0xff]
  %v379 = vld [vmem:[%s1 + $0xa58] sm:$0xff]
  %v380 = vld [vmem:[%s1 + $0xa60] sm:$0xff]
  %v381 = vld [vmem:[%s1 + $0xa68] sm:$0xff]
  %v382 = vld [vmem:[%s1 + $0xa70] sm:$0xff]
  %v383 = vld [vmem:[%s1 + $0xa78] sm:$0xff]
  %v384 = vld [vmem:[%s1 + $0xa80] sm:$0xff]
  %v385 = vld [vmem:[%s1 + $0xa88] sm:$0xff]
  %v386 = vld [vmem:[%s1 + $0xa90] sm:$0xff]
  %v387 = vld [vmem:[%s1 + $0xa98] sm:$0xff]
  %v388 = vld [vmem:[%s1 + $0xaa0] sm:$0xff]
  %v389 = vld [vmem:[%s1 + $0xaa8] sm:$0xff]
  %v390 = vld [vmem:[%s1 + $0xab0] sm:$0xff]
  %v391 = vld [vmem:[%s1 + $0xab8] sm:$0xff]
  %v392 = vld [vmem:[%s1 + $0xac0] sm:$0xff]
  %v393 = vld [vmem:[%s1 + $0xac8] sm:$0xff]
  %v394 = vld [vmem:[%s1 + $0xad0] sm:$0xff]
  %v395 = vld [vmem:[%s1 + $0xad8] sm:$0xff]
  %v396 = vld [vmem:[%s1 + $0xae0] sm:$0xff]
  %v397 = vld [vmem:[%s1 + $0xae8] sm:$0xff]
  %v398 = vld [vmem:[%s1 + $0xaf0] sm:$0xff]
  %v399 = vld [vmem:[%s1 + $0xaf8] sm:$0xff]
  %v400 = vld [vmem:[%s1 + $0xb00] sm:$0xff]
  %v401 = vld [vmem:[%s1 + $0xb08] sm:$0xff]
  %v402 = vld [vmem:[%s1 + $0xb10] sm:$0xff]
  %v403 = vld [vmem:[%s1 + $0xb18] sm:$0xff]
  %v404 = vld [vmem:[%s1 + $0xb20] sm:$0xff]
  %v405 = vld [vmem:[%s1 + $0xb28] sm:$0xff]
  %v406 = vld [vmem:[%s1 + $0xb30] sm:$0xff]
  %v407 = vld [vmem:[%s1 + $0xb38] sm:$0xff]
  %v408 = vld [vmem:[%s1 + $0xb40] sm:$0xff]
  %v409 = vld [vmem:[%s1 + $0xb48] sm:$0xff]
  %v410 = vld [vmem:[%s1 + $0xb50] sm:$0xff]
  %v411 = vld [vmem:[%s1 + $0xb58] sm:$0xff]
  %v412 = vld [vmem:[%s1 + $0xb60] sm:$0xff]
  %v413 = vld [vmem:[%s1 + $0xb68] sm:$0xff]
  %v414 = vld [vmem:[%s1 + $0xb70] sm:$0xff]
  %v415 = vld [vmem:[%s1 + $0xb78] sm:$0xff]
  %v416 = vld [vmem:[%s1 + $0xb80] sm:$0xff]
  %v417 = vld [vmem:[%s1 + $0xb88] sm:$0xff]
  %v418 = vld [vmem:[%s1 + $0xb90] sm:$0xff]
  %v419 = vld [vmem:[%s1 + $0xb98] sm:$0xff]
  %v420 = vld [vmem:[%s1 + $0xba0] sm:$0xff]
  %v421 = vld [vmem:[%s1 + $0xba8] sm:$0xff]
  %v422 = vld [vmem:[%s1 + $0xbb0] sm:$0xff]
  %v423 = vld [vmem:[%s1 + $0xbb8] sm:$0xff]
  %v424 = vld [vmem:[%s1 + $0xbc0] sm:$0xff]
  %v425 = vld [vmem:[%s1 + $0xbc8] sm:$0xff]
  %v426 = vld [vmem:[%s1 + $0xbd0] sm:$0xff]
  %v427 = vld [vmem:[%s1 + $0xbd8] sm:$0xff]
  %v428 = vld [vmem:[%s1 + $0xbe0] sm:$0xff]
  %v429 = vld [vmem:[%s1 + $0xbe8] sm:$0xff]
  %v430 = vld [vmem:[%s1 + $0xbf0] sm:$0xff]
  %v431 = vld [vmem:[%s1 + $0xbf8] sm:$0xff]
  %v432 = vld [vmem:[%s1 + $0xc00] sm:$0xff]
  %v433 = vld [vmem:[%s1 + $0xc08] sm:$0xff]
  %v434 = vld [vmem:[%s1 + $0xc10] sm:$0xff]
  %v435 = vld [vmem:[%s1 + $0xc18] sm:$0xff]
  %v436 = vld [vmem:[%s1 + $0xc20] sm:$0xff]
  %v437 = vld [vmem:[%s1 + $0xc28] sm:$0xff]
  %v438 = vld [vmem:[%s1 + $0xc30] sm:$0xff]
  %v439 = vld [vmem:[%s1 + $0xc38] sm:$0xff]
  %v440 = vld [vmem:[%s1 + $0xc40] sm:$0xff]
  %v441 = vld [vmem:[%s1 + $0xc48] sm:$0xff]
  %v442 = vld [vmem:[%s1 + $0xc50] sm:$0xff]
  %v443 = vld [vmem:[%s1 + $0xc58] sm:$0xff]
  %v444 = vld [vmem:[%s1 + $0xc60] sm:$0xff]
  %v445 = vld [vmem:[%s1 + $0xc68] sm:$0xff]
  %v446 = vld [vmem:[%s1 + $0xc70] sm:$0xff]
  %v447 = vld [vmem:[%s1 + $0xc78] sm:$0xff]
  %v448 = vld [vmem:[%s1 + $0xc80] sm:$0xff]
  %v449 = vld [vmem:[%s1 + $0xc88] sm:$0xff]
  %v450 = vld [vmem:[%s1 + $0xc90] sm:$0xff]
  %v451 = vld [vmem:[%s1 + $0xc98] sm:$0xff]
  %v452 = vld [vmem:[%s1 + $0xca0] sm:$0xff]
  %v453 = vld [vmem:[%s1 + $0xca8] sm:$0xff]
  %v454 = vld [vmem:[%s1 + $0xcb0] sm:$0xff]
  %v455 = vld [vmem:[%s1 + $0xcb8] sm:$0xff]
  %v456 = vld [vmem:[%s1 + $0xcc0] sm:$0xff]
  %v457 = vld [vmem:[%s1 + $0xcc8] sm:$0xff]
  %v458 = vld [vmem:[%s1 + $0xcd0] sm:$0xff]
  %v459 = vld [vmem:[%s1 + $0xcd8] sm:$0xff]
  %v460 = vld [vmem:[%s1 + $0xce0] sm:$0xff]
  %v461 = vld [vmem:[%s1 + $0xce8] sm:$0xff]
  %v462 = vld [vmem:[%s1 + $0xcf0] sm:$0xff]
  %v463 = vld [vmem:[%s1 + $0xcf8] sm:$0xff]
  %v464 = vld [vmem:[%s1 + $0xd00] sm:$0xff]
  %v465 = vld [vmem:[%s1 + $0xd08] sm:$0xff]
  %v466 = vld [vmem:[%s1 + $0xd10] sm:$0xff]
  %v467 = vld [vmem:[%s1 + $0xd18] sm:$0xff]
  %v468 = vld [vmem:[%s1 + $0xd20] sm:$0xff]
  %v469 = vld [vmem:[%s1 + $0xd28] sm:$0xff]
  %v470 = vld [vmem:[%s1 + $0xd30] sm:$0xff]
  %v471 = vld [vmem:[%s1 + $0xd38] sm:$0xff]
  %v472 = vld [vmem:[%s1 + $0xd40] sm:$0xff]
  %v473 = vld [vmem:[%s1 + $0xd48] sm:$0xff]
  %v474 = vld [vmem:[%s1 + $0xd50] sm:$0xff]
  %v475 = vld [vmem:[%s1 + $0xd58] sm:$0xff]
  %v476 = vld [vmem:[%s1 + $0xd60] sm:$0xff]
  %v477 = vld [vmem:[%s1 + $0xd68] sm:$0xff]
  %v478 = vld [vmem:[%s1 + $0xd70] sm:$0xff]
  %v479 = vld [vmem:[%s1 + $0xd78] sm:$0xff]
  %v480 = vld [vmem:[%s1 + $0xd80] sm:$0xff]
  %v481 = vld [vmem:[%s1 + $0xd88] sm:$0xff]
  %v482 = vld [vmem:[%s1 + $0xd90] sm:$0xff]
  %v483 = vld [vmem:[%s1 + $0xd98] sm:$0xff]
  %v484 = vld [vmem:[%s1 + $0xda0] sm:$0xff]
  %v485 = vld [vmem:[%s1 + $0xda8] sm:$0xff]
  %v486 = vld [vmem:[%s1 + $0xdb0] sm:$0xff]
  %v487 = vld [vmem:[%s1 + $0xdb8] sm:$0xff]
  %v488 = vld [vmem:[%s1 + $0xdc0] sm:$0xff]
  %v489 = vld [vmem:[%s1 + $0xdc8] sm:$0xff]
  %v490 = vld [vmem:[%s1 + $0xdd0] sm:$0xff]
  %v491 = vld [vmem:[%s1 + $0xdd8] sm:$0xff]
  %v492 = vld [vmem:[%s1 + $0xde0] sm:$0xff]
  %v493 = vld [vmem:[%s1 + $0xde8] sm:$0xff]
  %v494 = vld [vmem:[%s1 + $0xdf0] sm:$0xff]
  %v495 = vld [vmem:[%s1 + $0xdf8] sm:$0xff]
  %v496 = vld [vmem:[%s1 + $0xe00] sm:$0xff]
  %v497 = vld [vmem:[%s1 + $0xe08] sm:$0xff]
  %v498 = vld [vmem:[%s1 + $0xe10] sm:$0xff]
  %v499 = vld [vmem:[%s1 + $0xe18] sm:$0xff]
  %v500 = vld [vmem:[%s1 + $0xe20] sm:$0xff]
  %v501 = vld [vmem:[%s1 + $0xe28] sm:$0xff]
  %v502 = vld [vmem:[%s1 + $0xe30] sm:$0xff]
  %v503 = vld [vmem:[%s1 + $0xe38] sm:$0xff]
  %v504 = vld [vmem:[%s1 + $0xe40] sm:$0xff]
  %v505 = vld [vmem:[%s1 + $0xe48] sm:$0xff]
  %v506 = vld [vmem:[%s1 + $0xe50] sm:$0xff]
  %v507 = vld [vmem:[%s1 + $0xe58] sm:$0xff]
  %v508 = vld [vmem:[%s1 + $0xe60] sm:$0xff]
  %v509 = vld [vmem:[%s1 + $0xe68] sm:$0xff]
  %v510 = vld [vmem:[%s1 + $0xe70] sm:$0xff]
  %v511 = vld [vmem:[%s1 + $0xe78] sm:$0xff]
  %v512 = vld [vmem:[%s1 + $0xe80] sm:$0xff]
  %v513 = vld [vmem:[%s1 + $0xe88] sm:$0xff]
  %v514 = vld [vmem:[%s1 + $0xe90] sm:$0xff]
  %v515 = vld [vmem:[%s1 + $0xe98] sm:$0xff]
  %v516 = vld [vmem:[%s1 + $0xea0] sm:$0xff]
  %v517 = vld [vmem:[%s1 + $0xea8] sm:$0xff]
  %v518 = vld [vmem:[%s1 + $0xeb0] sm:$0xff]
  %v519 = vld [vmem:[%s1 + $0xeb8] sm:$0xff]
  %v520 = vld [vmem:[%s1 + $0xec0] sm:$0xff]
  %v521 = vld [vmem:[%s1 + $0xec8] sm:$0xff]
  %v522 = vld [vmem:[%s1 + $0xed0] sm:$0xff]
  %v523 = vld [vmem:[%s1 + $0xed8] sm:$0xff]
  %v524 = vld [vmem:[%s1 + $0xee0] sm:$0xff]
  %v525 = vld [vmem:[%s1 + $0xee8] sm:$0xff]
  %v526 = vld [vmem:[%s1 + $0xef0] sm:$0xff]
  %v527 = vld [vmem:[%s1 + $0xef8] sm:$0xff]
  %v528 = vld [vmem:[%s1 + $0xf00] sm:$0xff]
  %v529 = vld [vmem:[%s1 + $0xf08] sm:$0xff]
  %v530 = vld [vmem:[%s1 + $0xf10] sm:$0xff]
  %v531 = vld [vmem:[%s1 + $0xf18] sm:$0xff]
  %v532 = vld [vmem:[%s1 + $0xf20] sm:$0xff]
  %v533 = vld [vmem:[%s1 + $0xf28] sm:$0xff]
  %v534 = vld [vmem:[%s1 + $0xf30] sm:$0xff]
  %v535 = vld [vmem:[%s1 + $0xf38] sm:$0xff]
  %v536 = vld [vmem:[%s1 + $0xf40] sm:$0xff]
  %v537 = vld [vmem:[%s1 + $0xf48] sm:$0xff]
  %v538 = vld [vmem:[%s1 + $0xf50] sm:$0xff]
  %v539 = vld [vmem:[%s1 + $0xf58] sm:$0xff]
  %v540 = vld [vmem:[%s1 + $0xf60] sm:$0xff]
  %v541 = vld [vmem:[%s1 + $0xf68] sm:$0xff]
  %v542 = vld [vmem:[%s1 + $0xf70] sm:$0xff]
  %v543 = vld [vmem:[%s1 + $0xf78] sm:$0xff]
  %v544 = vld [vmem:[%s1 + $0xf80] sm:$0xff]
  %v545 = vld [vmem:[%s1 + $0xf88] sm:$0xff]
  %v546 = vld [vmem:[%s1 + $0xf90] sm:$0xff]
  %v547 = vld [vmem:[%s1 + $0xf98] sm:$0xff]
  %v548 = vld [vmem:[%s1 + $0xfa0] sm:$0xff]
  %v549 = vld [vmem:[%s1 + $0xfa8] sm:$0xff]
  %v550 = vld [vmem:[%s1 + $0xfb0] sm:$0xff]
  %v551 = vld [vmem:[%s1 + $0xfb8] sm:$0xff]
  %v552 = vld [vmem:[%s1 + $0xfc0] sm:$0xff]
  %v553 = vld [vmem:[%s1 + $0xfc8] sm:$0xff]
  %v554 = vld [vmem:[%s1 + $0xfd0] sm:$0xff]
  %v555 = vld [vmem:[%s1 + $0xfd8] sm:$0xff]
  %v556 = vld [vmem:[%s1 + $0xfe0] sm:$0xff]
  %v557 = vld [vmem:[%s1 + $0xfe8] sm:$0xff]
  %v558 = vld [vmem:[%s1 + $0xff0] sm:$0xff]
  %v559 = vld [vmem:[%s1 + $0xff8] sm:$0xff]
  %v560 = vld [vmem:[%s1 + $0x1000] sm:$0xff]
  %v561 = vld [vmem:[%s1 + $0x1008] sm:$0xff]
  %v562 = vld [vmem:[%s1 + $0x1010] sm:$0xff]
  %v563 = vld [vmem:[%s1 + $0x1018] sm:$0xff]
  %v564 = vld [vmem:[%s1 + $0x1020] sm:$0xff]
  %v565 = vld [vmem:[%s1 + $0x1028] sm:$0xff]
  %v566 = vld [vmem:[%s1 + $0x1030] sm:$0xff]
  %v567 = vld [vmem:[%s1 + $0x1038] sm:$0xff]
  %v568 = vld [vmem:[%s1 + $0x1040] sm:$0xff]
  %v569 = vld [vmem:[%s1 + $0x1048] sm:$0xff]
  %v570 = vld [vmem:[%s1 + $0x1050] sm:$0xff]
  %v571 = vld [vmem:[%s1 + $0x1058] sm:$0xff]
  %v572 = vld [vmem:[%s1 + $0x1060] sm:$0xff]
  %v573 = vld [vmem:[%s1 + $0x1068] sm:$0xff]
  %v574 = vld [vmem:[%s1 + $0x1070] sm:$0xff]
  %v575 = vld [vmem:[%s1 + $0x1078] sm:$0xff]
  %v576 = vld [vmem:[%s1 + $0x1080] sm:$0xff]
  %v577 = vld [vmem:[%s1 + $0x1088] sm:$0xff]
  %v578 = vld [vmem:[%s1 + $0x1090] sm:$0xff]
  %v579 = vld [vmem:[%s1 + $0x1098] sm:$0xff]
  %v580 = vld [vmem:[%s1 + $0x10a0] sm:$0xff]
  %v581 = vld [vmem:[%s1 + $0x10a8] sm:$0xff]
  %v582 = vld [vmem:[%s1 + $0x10b0] sm:$0xff]
  %v583 = vld [vmem:[%s1 + $0x10b8] sm:$0xff]
  %v584 = vld [vmem:[%s1 + $0x10c0] sm:$0xff]
  %v585 = vld [vmem:[%s1 + $0x10c8] sm:$0xff]
  %v586 = vld [vmem:[%s1 + $0x10d0] sm:$0xff]
  %v587 = vld [vmem:[%s1 + $0x10d8] sm:$0xff]
  %v588 = vld [vmem:[%s1 + $0x10e0] sm:$0xff]
  %v589 = vld [vmem:[%s1 + $0x10e8] sm:$0xff]
  %v590 = vld [vmem:[%s1 + $0x10f0] sm:$0xff]
  %v591 = vld [vmem:[%s1 + $0x10f8] sm:$0xff]
  %v592 = vld [vmem:[%s1 + $0x1100] sm:$0xff]
  %v593 = vld [vmem:[%s1 + $0x1108] sm:$0xff]
  %v594 = vld [vmem:[%s1 + $0x1110] sm:$0xff]
  %v595 = vld [vmem:[%s1 + $0x1118] sm:$0xff]
  %v596 = vld [vmem:[%s1 + $0x1120] sm:$0xff]
  %v597 = vld [vmem:[%s1 + $0x1128] sm:$0xff]
  %v598 = vld [vmem:[%s1 + $0x1130] sm:$0xff]
  %v599 = vld [vmem:[%s1 + $0x1138] sm:$0xff]
  %v600 = vld [vmem:[%s1 + $0x1140] sm:$0xff]
  %v601 = vld [vmem:[%s1 + $0x1148] sm:$0xff]
  %v602 = vld [vmem:[%s1 + $0x1150] sm:$0xff]
  %v603 = vld [vmem:[%s1 + $0x1158] sm:$0xff]
  %v604 = vld [vmem:[%s1 + $0x1160] sm:$0xff]
  %v605 = vld [vmem:[%s1 + $0x1168] sm:$0xff]
  %v606 = vld [vmem:[%s1 + $0x1170] sm:$0xff]
  %v607 = vld [vmem:[%s1 + $0x1178] sm:$0xff]
  %v608 = vld [vmem:[%s1 + $0x1180] sm:$0xff]
  %v609 = vld [vmem:[%s1 + $0x1188] sm:$0xff]
  %v610 = vld [vmem:[%s1 + $0x1190] sm:$0xff]
  %v611 = vld [vmem:[%s1 + $0x1198] sm:$0xff]
  %v612 = vld [vmem:[%s1 + $0x11a0] sm:$0xff]
  %v613 = vld [vmem:[%s1 + $0x11a8] sm:$0xff]
  %v614 = vld [vmem:[%s1 + $0x11b0] sm:$0xff]
  %v615 = vld [vmem:[%s1 + $0x11b8] sm:$0xff]
  %v616 = vld [vmem:[%s1 + $0x11c0] sm:$0xff]
  %v617 = vld [vmem:[%s1 + $0x11c8] sm:$0xff]
  %v618 = vld [vmem:[%s1 + $0x11d0] sm:$0xff]
  %v619 = vld [vmem:[%s1 + $0x11d8] sm:$0xff]
  %v620 = vld [vmem:[%s1 + $0x11e0] sm:$0xff]
  %v621 = vld [vmem:[%s1 + $0x11e8] sm:$0xff]
  %v622 = vld [vmem:[%s1 + $0x11f0] sm:$0xff]
  %v623 = vld [vmem:[%s1 + $0x11f8] sm:$0xff]
  %v624 = vld [vmem:[%s1 + $0x1200] sm:$0xff]
  %v625 = vld [vmem:[%s1 + $0x1208] sm:$0xff]
  %v626 = vld [vmem:[%s1 + $0x1210] sm:$0xff]
  %v627 = vld [vmem:[%s1 + $0x1218] sm:$0xff]
  %v628 = vld [vmem:[%s1 + $0x1220] sm:$0xff]
  %v629 = vld [vmem:[%s1 + $0x1228] sm:$0xff]
  %v630 = vld [vmem:[%s1 + $0x1230] sm:$0xff]
  %v631 = vld [vmem:[%s1 + $0x1238] sm:$0xff]
  %v632 = vld [vmem:[%s1 + $0x1240] sm:$0xff]
  %v633 = vld [vmem:[%s1 + $0x1248] sm:$0xff]
  %v634 = vld [vmem:[%s1 + $0x1250] sm:$0xff]
  %v635 = vld [vmem:[%s1 + $0x1258] sm:$0xff]
  %v636 = vld [vmem:[%s1 + $0x1260] sm:$0xff]
  %v637 = vld [vmem:[%s1 + $0x1268] sm:$0xff]
  %v638 = vld [vmem:[%s1 + $0x1270] sm:$0xff]
  %v639 = vld [vmem:[%s1 + $0x1278] sm:$0xff]
  %v640 = vld [vmem:[%s1 + $0x1280] sm:$0xff]
  %v641 = vld [vmem:[%s1 + $0x1288] sm:$0xff]
  %v642 = vld [vmem:[%s1 + $0x1290] sm:$0xff]
  %v643 = vld [vmem:[%s1 + $0x1298] sm:$0xff]
  %v644 = vld [vmem:[%s1 + $0x12a0] sm:$0xff]
  %v645 = vld [vmem:[%s1 + $0x12a8] sm:$0xff]
  %v646 = vld [vmem:[%s1 + $0x12b0] sm:$0xff]
  %v647 = vld [vmem:[%s1 + $0x12b8] sm:$0xff]
  %v648 = vld [vmem:[%s1 + $0x12c0] sm:$0xff]
  %v649 = vld [vmem:[%s1 + $0x12c8] sm:$0xff]
  %v650 = vld [vmem:[%s1 + $0x12d0] sm:$0xff]
  %v651 = vld [vmem:[%s1 + $0x12d8] sm:$0xff]
  %v652 = vld [vmem:[%s1 + $0x12e0] sm:$0xff]
  %v653 = vld [vmem:[%s1 + $0x12e8] sm:$0xff]
  %v654 = vld [vmem:[%s1 + $0x12f0] sm:$0xff]
  %v655 = vld [vmem:[%s1 + $0x12f8] sm:$0xff]
  %v656 = vld [vmem:[%s1 + $0x1300] sm:$0xff]
  %v657 = vld [vmem:[%s1 + $0x1308] sm:$0xff]
  %v658 = vld [vmem:[%s1 + $0x1310] sm:$0xff]
  %v659 = vld [vmem:[%s1 + $0x1318] sm:$0xff]
  %v660 = vld [vmem:[%s1 + $0x1320] sm:$0xff]
  %v661 = vld [vmem:[%s1 + $0x1328] sm:$0xff]
  %v662 = vld [vmem:[%s1 + $0x1330] sm:$0xff]
  %v663 = vld [vmem:[%s1 + $0x1338] sm:$0xff]
  %v664 = vld [vmem:[%s1 + $0x1340] sm:$0xff]
  %v665 = vld [vmem:[%s1 + $0x1348] sm:$0xff]
  %v666 = vld [vmem:[%s1 + $0x1350] sm:$0xff]
  %v667 = vld [vmem:[%s1 + $0x1358] sm:$0xff]
  %v668 = vld [vmem:[%s1 + $0x1360] sm:$0xff]
  %v669 = vld [vmem:[%s1 + $0x1368] sm:$0xff]
  %v670 = vld [vmem:[%s1 + $0x1370] sm:$0xff]
  %v671 = vld [vmem:[%s1 + $0x1378] sm:$0xff]
  %v672 = vld [vmem:[%s1 + $0x1380] sm:$0xff]
  %v673 = vld [vmem:[%s1 + $0x1388] sm:$0xff]
  %v674 = vld [vmem:[%s1 + $0x1390] sm:$0xff]
  %v675 = vld [vmem:[%s1 + $0x1398] sm:$0xff]
  %v676 = vld [vmem:[%s1 + $0x13a0] sm:$0xff]
  %v677 = vld [vmem:[%s1 + $0x13a8] sm:$0xff]
  %v678 = vld [vmem:[%s1 + $0x13b0] sm:$0xff]
  %v679 = vld [vmem:[%s1 + $0x13b8] sm:$0xff]
  %v680 = vld [vmem:[%s1 + $0x13c0] sm:$0xff]
  %v681 = vld [vmem:[%s1 + $0x13c8] sm:$0xff]
  %v682 = vld [vmem:[%s1 + $0x13d0] sm:$0xff]
  %v683 = vld [vmem:[%s1 + $0x13d8] sm:$0xff]
  %v684 = vld [vmem:[%s1 + $0x13e0] sm:$0xff]
  %v685 = vld [vmem:[%s1 + $0x13e8] sm:$0xff]
  %v686 = vld [vmem:[%s1 + $0x13f0] sm:$0xff]
  %v687 = vld [vmem:[%s1 + $0x13f8] sm:$0xff]
  %v688 = vld [vmem:[%s1 + $0x1400] sm:$0xff]
  %v689 = vld [vmem:[%s1 + $0x1408] sm:$0xff]
  %v690 = vld [vmem:[%s1 + $0x1410] sm:$0xff]
  %v691 = vld [vmem:[%s1 + $0x1418] sm:$0xff]
  %v692 = vld [vmem:[%s1 + $0x1420] sm:$0xff]
  %v693 = vld [vmem:[%s1 + $0x1428] sm:$0xff]
  %v694 = vld [vmem:[%s1 + $0x1430] sm:$0xff]
  %v695 = vld [vmem:[%s1 + $0x1438] sm:$0xff]
  %v696 = vld [vmem:[%s1 + $0x1440] sm:$0xff]
  %v697 = vld [vmem:[%s1 + $0x1448] sm:$0xff]
  %v698 = vld [vmem:[%s1 + $0x1450] sm:$0xff]
  %v699 = vld [vmem:[%s1 + $0x1458] sm:$0xff]
  %v700 = vld [vmem:[%s1 + $0x1460] sm:$0xff]
  %v701 = vld [vmem:[%s1 + $0x1468] sm:$0xff]
  %v702 = vld [vmem:[%s1 + $0x1470] sm:$0xff]
  %v703 = vld [vmem:[%s1 + $0x1478] sm:$0xff]
  %v704 = vld [vmem:[%s1 + $0x1480] sm:$0xff]
  %v705 = vld [vmem:[%s1 + $0x1488] sm:$0xff]
  %v706 = vld [vmem:[%s1 + $0x1490] sm:$0xff]
  %v707 = vld [vmem:[%s1 + $0x1498] sm:$0xff]
  %v708 = vld [vmem:[%s1 + $0x14a0] sm:$0xff]
  %v709 = vld [vmem:[%s1 + $0x14a8] sm:$0xff]
  %v710 = vld [vmem:[%s1 + $0x14b0] sm:$0xff]
  %v711 = vld [vmem:[%s1 + $0x14b8] sm:$0xff]
  %v712 = vld [vmem:[%s1 + $0x14c0] sm:$0xff]
  %v713 = vld [vmem:[%s1 + $0x14c8] sm:$0xff]
  %v714 = vld [vmem:[%s1 + $0x14d0] sm:$0xff]
  %v715 = vld [vmem:[%s1 + $0x14d8] sm:$0xff]
  %v716 = vld [vmem:[%s1 + $0x14e0] sm:$0xff]
  %v717 = vld [vmem:[%s1 + $0x14e8] sm:$0xff]
  %v718 = vld [vmem:[%s1 + $0x14f0] sm:$0xff]
  %v719 = vld [vmem:[%s1 + $0x14f8] sm:$0xff]
  %v720 = vld [vmem:[%s1 + $0x1500] sm:$0xff]
  %v721 = vld [vmem:[%s1 + $0x1508] sm:$0xff]
  %v722 = vld [vmem:[%s1 + $0x1510] sm:$0xff]
  %v723 = vld [vmem:[%s1 + $0x1518] sm:$0xff]
  %v724 = vld [vmem:[%s1 + $0x1520] sm:$0xff]
  %v725 = vld [vmem:[%s1 + $0x1528] sm:$0xff]
  %v726 = vld [vmem:[%s1 + $0x1530] sm:$0xff]
  %v727 = vld [vmem:[%s1 + $0x1538] sm:$0xff]
  %v728 = vld [vmem:[%s1 + $0x1540] sm:$0xff]
  %v729 = vld [vmem:[%s1 + $0x1548] sm:$0xff]
  %v730 = vld [vmem:[%s1 + $0x1550] sm:$0xff]
  %v731 = vld [vmem:[%s1 + $0x1558] sm:$0xff]
  %v732 = vld [vmem:[%s1 + $0x1560] sm:$0xff]
  %v733 = vld [vmem:[%s1 + $0x1568] sm:$0xff]
  %v734 = vld [vmem:[%s1 + $0x1570] sm:$0xff]
  %v735 = vld [vmem:[%s1 + $0x1578] sm:$0xff]
  %v736 = vld [vmem:[%s1 + $0x1580] sm:$0xff]
  %v737 = vld [vmem:[%s1 + $0x1588] sm:$0xff]
  %v738 = vld [vmem:[%s1 + $0x1590] sm:$0xff]
  %v739 = vld [vmem:[%s1 + $0x1598] sm:$0xff]
  %v740 = vld [vmem:[%s1 + $0x15a0] sm:$0xff]
  %v741 = vld [vmem:[%s1 + $0x15a8] sm:$0xff]
  %v742 = vld [vmem:[%s1 + $0x15b0] sm:$0xff]
  %v743 = vld [vmem:[%s1 + $0x15b8] sm:$0xff]
  %v744 = vld [vmem:[%s1 + $0x15c0] sm:$0xff]
  %v745 = vld [vmem:[%s1 + $0x15c8] sm:$0xff]
  %v746 = vld [vmem:[%s1 + $0x15d0] sm:$0xff]
  %v747 = vld [vmem:[%s1 + $0x15d8] sm:$0xff]
  %v748 = vld [vmem:[%s1 + $0x15e0] sm:$0xff]
  %v749 = vld [vmem:[%s1 + $0x15e8] sm:$0xff]
  %v750 = vld [vmem:[%s1 + $0x15f0] sm:$0xff]
  %v751 = vld [vmem:[%s1 + $0x15f8] sm:$0xff]
  %v752 = vld [vmem:[%s1 + $0x1600] sm:$0xff]
  %v753 = vld [vmem:[%s1 + $0x1608] sm:$0xff]
  %v754 = vld [vmem:[%s1 + $0x1610] sm:$0xff]
  %v755 = vld [vmem:[%s1 + $0x1618] sm:$0xff]
  %v756 = vld [vmem:[%s1 + $0x1620] sm:$0xff]
  %v757 = vld [vmem:[%s1 + $0x1628] sm:$0xff]
  %v758 = vld [vmem:[%s1 + $0x1630] sm:$0xff]
  %v759 = vld [vmem:[%s1 + $0x1638] sm:$0xff]
  %v760 = vld [vmem:[%s1 + $0x1640] sm:$0xff]
  %v761 = vld [vmem:[%s1 + $0x1648] sm:$0xff]
  %v762 = vld [vmem:[%s1 + $0x1650] sm:$0xff]
  %v763 = vld [vmem:[%s1 + $0x1658] sm:$0xff]
  %v764 = vld [vmem:[%s1 + $0x1660] sm:$0xff]
  %v765 = vld [vmem:[%s1 + $0x1668] sm:$0xff]
  %v766 = vld [vmem:[%s1 + $0x1670] sm:$0xff]
  %v767 = vld [vmem:[%s1 + $0x1678] sm:$0xff]
  %v768 = vld [vmem:[%s1 + $0x1680] sm:$0xff]
  %v769 = vld [vmem:[%s1 + $0x1688] sm:$0xff]
  %v770 = vld [vmem:[%s1 + $0x1690] sm:$0xff]
  %v771 = vld [vmem:[%s1 + $0x1698] sm:$0xff]
  %v772 = vld [vmem:[%s1 + $0x16a0] sm:$0xff]
  %v773 = vld [vmem:[%s1 + $0x16a8] sm:$0xff]
  %v774 = vld [vmem:[%s1 + $0x16b0] sm:$0xff]
  %v775 = vld [vmem:[%s1 + $0x16b8] sm:$0xff]
  %v776 = vld [vmem:[%s1 + $0x16c0] sm:$0xff]
  %v777 = vld [vmem:[%s1 + $0x16c8] sm:$0xff]
  %v778 = vld [vmem:[%s1 + $0x16d0] sm:$0xff]
  %v779 = vld [vmem:[%s1 + $0x16d8] sm:$0xff]
  %v780 = vld [vmem:[%s1 + $0x16e0] sm:$0xff]
  %v781 = vld [vmem:[%s1 + $0x16e8] sm:$0xff]
  %v782 = vld [vmem:[%s1 + $0x16f0] sm:$0xff]
  %v783 = vld [vmem:[%s1 + $0x16f8] sm:$0xff]
  %v784 = vld [vmem:[%s1 + $0x1700] sm:$0xff]
  %v785 = vld [vmem:[%s1 + $0x1708] sm:$0xff]
  %v786 = vld [vmem:[%s1 + $0x1710] sm:$0xff]
  %v787 = vld [vmem:[%s1 + $0x1718] sm:$0xff]
  %v788 = vld [vmem:[%s1 + $0x1720] sm:$0xff]
  %v789 = vld [vmem:[%s1 + $0x1728] sm:$0xff]
  %v790 = vld [vmem:[%s1 + $0x1730] sm:$0xff]
  %v791 = vld [vmem:[%s1 + $0x1738] sm:$0xff]
  %v792 = vld [vmem:[%s1 + $0x1740] sm:$0xff]
  %v793 = vld [vmem:[%s1 + $0x1748] sm:$0xff]
  %v794 = vld [vmem:[%s1 + $0x1750] sm:$0xff]
  %v795 = vld [vmem:[%s1 + $0x1758] sm:$0xff]
  %v796 = vld [vmem:[%s1 + $0x1760] sm:$0xff]
  %v797 = vld [vmem:[%s1 + $0x1768] sm:$0xff]
  %v798 = vld [vmem:[%s1 + $0x1770] sm:$0xff]
  %v799 = vld [vmem:[%s1 + $0x1778] sm:$0xff]
  %v800 = vld [vmem:[%s1 + $0x1780] sm:$0xff]
  %v801 = vld [vmem:[%s1 + $0x1788] sm:$0xff]
  %v802 = vld [vmem:[%s1 + $0x1790] sm:$0xff]
  %v803 = vld [vmem:[%s1 + $0x1798] sm:$0xff]
  %v804 = vld [vmem:[%s1 + $0x17a0] sm:$0xff]
  %v805 = vld [vmem:[%s1 + $0x17a8] sm:$0xff]
  %v806 = vld [vmem:[%s1 + $0x17b0] sm:$0xff]
  %v807 = vld [vmem:[%s1 + $0x17b8] sm:$0xff]
  %v808 = vld [vmem:[%s1 + $0x17c0] sm:$0xff]
  %v809 = vld [vmem:[%s1 + $0x17c8] sm:$0xff]
  %v810 = vld [vmem:[%s1 + $0x17d0] sm:$0xff]
  %v811 = vld [vmem:[%s1 + $0x17d8] sm:$0xff]
  %v812 = vld [vmem:[%s1 + $0x17e0] sm:$0xff]
  %v813 = vld [vmem:[%s1 + $0x17e8] sm:$0xff]
  %v814 = vld [vmem:[%s1 + $0x17f0] sm:$0xff]
  %v815 = vld [vmem:[%s1 + $0x17f8] sm:$0xff]
  %v816 = vld [vmem:[%s1 + $0x1800] sm:$0xff]
  %v817 = vld [vmem:[%s1 + $0x1808] sm:$0xff]
  %v818 = vld [vmem:[%s1 + $0x1810] sm:$0xff]
  %v819 = vld [vmem:[%s1 + $0x1818] sm:$0xff]
  %v820 = vld [vmem:[%s1 + $0x1820] sm:$0xff]
  %v821 = vld [vmem:[%s1 + $0x1828] sm:$0xff]
  %v822 = vld [vmem:[%s1 + $0x1830] sm:$0xff]
  %v823 = vld [vmem:[%s1 + $0x1838] sm:$0xff]
  %v824 = vld [vmem:[%s1 + $0x1840] sm:$0xff]
  %v825 = vld [vmem:[%s1 + $0x1848] sm:$0xff]
  %v826 = vld [vmem:[%s1 + $0x1850] sm:$0xff]
  %v827 = vld [vmem:[%s1 + $0x1858] sm:$0xff]
  %v828 = vld [vmem:[%s1 + $0x1860] sm:$0xff]
  %v829 = vld [vmem:[%s1 + $0x1868] sm:$0xff]
  %v830 = vld [vmem:[%s1 + $0x1870] sm:$0xff]
  %v831 = vld [vmem:[%s1 + $0x1878] sm:$0xff]
  %v832 = vld [vmem:[%s1 + $0x1880] sm:$0xff]
  %v833 = vld [vmem:[%s1 + $0x1888] sm:$0xff]
  %v834 = vld [vmem:[%s1 + $0x1890] sm:$0xff]
  %v835 = vld [vmem:[%s1 + $0x1898] sm:$0xff]
  %v836 = vld [vmem:[%s1 + $0x18a0] sm:$0xff]
  %v837 = vld [vmem:[%s1 + $0x18a8] sm:$0xff]
  %v838 = vld [vmem:[%s1 + $0x18b0] sm:$0xff]
  %v839 = vld [vmem:[%s1 + $0x18b8] sm:$0xff]
  %v840 = vld [vmem:[%s1 + $0x18c0] sm:$0xff]
  %v841 = vld [vmem:[%s1 + $0x18c8] sm:$0xff]
  %v842 = vld [vmem:[%s1 + $0x18d0] sm:$0xff]
  %v843 = vld [vmem:[%s1 + $0x18d8] sm:$0xff]
  %v844 = vld [vmem:[%s1 + $0x18e0] sm:$0xff]
  %v845 = vld [vmem:[%s1 + $0x18e8] sm:$0xff]
  %v846 = vld [vmem:[%s1 + $0x18f0] sm:$0xff]
  %v847 = vld [vmem:[%s1 + $0x18f8] sm:$0xff]
  %v848 = vld [vmem:[%s1 + $0x1900] sm:$0xff]
  %v849 = vld [vmem:[%s1 + $0x1908] sm:$0xff]
  %v850 = vld [vmem:[%s1 + $0x1910] sm:$0xff]
  %v851 = vld [vmem:[%s1 + $0x1918] sm:$0xff]
  %v852 = vld [vmem:[%s1 + $0x1920] sm:$0xff]
  %v853 = vld [vmem:[%s1 + $0x1928] sm:$0xff]
  %v854 = vld [vmem:[%s1 + $0x1930] sm:$0xff]
  %v855 = vld [vmem:[%s1 + $0x1938] sm:$0xff]
  %v856 = vld [vmem:[%s1 + $0x1940] sm:$0xff]
  %v857 = vld [vmem:[%s1 + $0x1948] sm:$0xff]
  %v858 = vld [vmem:[%s1 + $0x1950] sm:$0xff]
  %v859 = vld [vmem:[%s1 + $0x1958] sm:$0xff]
  %v860 = vld [vmem:[%s1 + $0x1960] sm:$0xff]
  %v861 = vld [vmem:[%s1 + $0x1968] sm:$0xff]
  %v862 = vld [vmem:[%s1 + $0x1970] sm:$0xff]
  %v863 = vld [vmem:[%s1 + $0x1978] sm:$0xff]
  %v864 = vld [vmem:[%s1 + $0x1980] sm:$0xff]
  %v865 = vld [vmem:[%s1 + $0x1988] sm:$0xff]
  %v866 = vld [vmem:[%s1 + $0x1990] sm:$0xff]
  %v867 = vld [vmem:[%s1 + $0x1998] sm:$0xff]
  %v868 = vld [vmem:[%s1 + $0x19a0] sm:$0xff]
  %v869 = vld [vmem:[%s1 + $0x19a8] sm:$0xff]
  %v870 = vld [vmem:[%s1 + $0x19b0] sm:$0xff]
  %v871 = vld [vmem:[%s1 + $0x19b8] sm:$0xff]
  %v872 = vld [vmem:[%s1 + $0x19c0] sm:$0xff]
  %v873 = vld [vmem:[%s1 + $0x19c8] sm:$0xff]
  %v874 = vld [vmem:[%s1 + $0x19d0] sm:$0xff]
  %v875 = vld [vmem:[%s1 + $0x19d8] sm:$0xff]
  %v876 = vld [vmem:[%s1 + $0x19e0] sm:$0xff]
  %v877 = vld [vmem:[%s1 + $0x19e8] sm:$0xff]
  %v878 = vld [vmem:[%s1 + $0x19f0] sm:$0xff]
  %v879 = vld [vmem:[%s1 + $0x19f8] sm:$0xff]
  %v880 = vld [vmem:[%s2] sm:$0xf]
  %v882 = vlaneseq
  %v883 = vshrl.u32 %v882, 7
  %v884 = vsub.s32 0, %v883
  %v885 = vrot.slane %v880, %v884
  %v886 = vlaneseq
  %v887 = vshrl.u32 %v886, 7
  %v888 = vsub.s32 1, %v887
  %v889 = vrot.slane %v880, %v888
  %v890 = vlaneseq
  %v891 = vshrl.u32 %v890, 7
  %v892 = vsub.s32 2, %v891
  %v893 = vrot.slane %v880, %v892
  %v894 = vlaneseq
  %v895 = vshrl.u32 %v894, 7
  %v896 = vsub.s32 3, %v895
  %v897 = vrot.slane %v880, %v896
  %902 = vmatprep.subr.mxu0 %v109
  %903 = vmatpush1.msra.mxu0 %v108
  %904 = vmatprep.subr.mxu0 %v105
  %905 = vmatpush1.msra.mxu0 %v104
  %906 = vmatprep.subr.mxu0 %v101
  %907 = vmatpush1.msra.mxu0 %v100
  %908 = vmatprep.subr.mxu0 %v97
  %909 = vmatpush1.msra.mxu0 %v96
  %910 = vmatprep.subr.mxu0 %v93
  %911 = vmatpush1.msra.mxu0 %v92
  %912 = vmatprep.subr.mxu0 %v89
  %913 = vmatpush1.msra.mxu0 %v88
  %914 = vmatprep.subr.mxu0 %v85
  %915 = vmatpush1.msra.mxu0 %v84
  %916 = vmatprep.subr.mxu0 %v81
  %917 = vmatpush1.msra.mxu0 %v80
  %918 = vmatprep.subr.mxu0 %v77
  %919 = vmatpush1.msra.mxu0 %v76
  %920 = vmatprep.subr.mxu0 %v73
  %921 = vmatpush1.msra.mxu0 %v72
  %922 = vmatprep.subr.mxu0 %v69
  %923 = vmatpush1.msra.mxu0 %v68
  %924 = vmatprep.subr.mxu0 %v65
  %925 = vmatpush1.msra.mxu0 %v64
  %926 = vmatprep.subr.mxu0 %v61
  %927 = vmatpush1.msra.mxu0 %v60
  %928 = vmatprep.subr.mxu0 %v57
  %929 = vmatpush1.msra.mxu0 %v56
  %930 = vmatprep.subr.mxu0 %v53
  %931 = vmatpush1.msra.mxu0 %v52
  %932 = vmatprep.subr.mxu0 %v49
  %933 = vmatpush1.msra.mxu0 %v48
  %934 = vmatprep.subr.mxu0 %v173
  %935 = vmatpush2.msra.mxu0 %v172
  %936 = vmatprep.subr.mxu0 %v169
  %937 = vmatpush2.msra.mxu0 %v168
  %938 = vmatprep.subr.mxu0 %v165
  %939 = vmatpush2.msra.mxu0 %v164
  %940 = vmatprep.subr.mxu0 %v161
  %941 = vmatpush2.msra.mxu0 %v160
  %942 = vmatprep.subr.mxu0 %v157
  %943 = vmatpush2.msra.mxu0 %v156
  %944 = vmatprep.subr.mxu0 %v153
  %945 = vmatpush2.msra.mxu0 %v152
  %946 = vmatprep.subr.mxu0 %v149
  %947 = vmatpush2.msra.mxu0 %v148
  %948 = vmatprep.subr.mxu0 %v145
  %949 = vmatpush2.msra.mxu0 %v144
  %950 = vmatprep.subr.mxu0 %v141
  %951 = vmatpush2.msra.mxu0 %v140
  %952 = vmatprep.subr.mxu0 %v137
  %953 = vmatpush2.msra.mxu0 %v136
  %954 = vmatprep.subr.mxu0 %v133
  %955 = vmatpush2.msra.mxu0 %v132
  %956 = vmatprep.subr.mxu0 %v129
  %957 = vmatpush2.msra.mxu0 %v128
  %958 = vmatprep.subr.mxu0 %v125
  %959 = vmatpush2.msra.mxu0 %v124
  %960 = vmatprep.subr.mxu0 %v121
  %961 = vmatpush2.msra.mxu0 %v120
  %962 = vmatprep.subr.mxu0 %v117
  %963 = vmatpush2.msra.mxu0 %v116
  %964 = vmatprep.subr.mxu0 %v113
  %965 = vmatpush2.msra.mxu0 %v112
  %966 = vmatprep.mubr.f32.mxu0 %v23
  %967 = vmatmul.mubr.f32.gmra.mxu0 %v22
  %v968 = vpop.f32.mrf.mxu0
  %v969 = vadd.f32 %v885, %v968
  %v970 = vpop.f32.mrf.mxu0
  %v971 = vadd.f32 %v889, %v970
  %972 = vmatprep.mubr.f32.mxu0 %v36
  %973 = vmatmul.mubr.f32.gmra.mxu0 %v35
  %v974 = vpop.f32.mrf.mxu0
  %v975 = vadd.f32 %v885, %v974
  %v976 = vpop.f32.mrf.mxu0
  %v977 = vadd.f32 %v889, %v976
  %978 = vdwg.mxu0
  %979 = vmatprep.subr.mxu0 %v237
  %980 = vmatpush1.msra.mxu0 %v236
  %981 = vmatprep.subr.mxu0 %v233
  %982 = vmatpush1.msra.mxu0 %v232
  %983 = vmatprep.subr.mxu0 %v229
  %984 = vmatpush1.msra.mxu0 %v228
  %985 = vmatprep.subr.mxu0 %v225
  %986 = vmatpush1.msra.mxu0 %v224
  %987 = vmatprep.subr.mxu0 %v221
  %988 = vmatpush1.msra.mxu0 %v220
  %989 = vmatprep.subr.mxu0 %v217
  %990 = vmatpush1.msra.mxu0 %v216
  %991 = vmatprep.subr.mxu0 %v213
  %992 = vmatpush1.msra.mxu0 %v212
  %993 = vmatprep.subr.mxu0 %v209
  %994 = vmatpush1.msra.mxu0 %v208
  %995 = vmatprep.subr.mxu0 %v205
  %996 = vmatpush1.msra.mxu0 %v204
  %997 = vmatprep.subr.mxu0 %v201
  %998 = vmatpush1.msra.mxu0 %v200
  %999 = vmatprep.subr.mxu0 %v197
  %1000 = vmatpush1.msra.mxu0 %v196
  %1001 = vmatprep.subr.mxu0 %v193
  %1002 = vmatpush1.msra.mxu0 %v192
  %1003 = vmatprep.subr.mxu0 %v189
  %1004 = vmatpush1.msra.mxu0 %v188
  %1005 = vmatprep.subr.mxu0 %v185
  %1006 = vmatpush1.msra.mxu0 %v184
  %1007 = vmatprep.subr.mxu0 %v181
  %1008 = vmatpush1.msra.mxu0 %v180
  %1009 = vmatprep.subr.mxu0 %v177
  %1010 = vmatpush1.msra.mxu0 %v176
  %1011 = vmatprep.subr.mxu0 %v301
  %1012 = vmatpush2.msra.mxu0 %v300
  %1013 = vmatprep.subr.mxu0 %v297
  %1014 = vmatpush2.msra.mxu0 %v296
  %1015 = vmatprep.subr.mxu0 %v293
  %1016 = vmatpush2.msra.mxu0 %v292
  %1017 = vmatprep.subr.mxu0 %v289
  %1018 = vmatpush2.msra.mxu0 %v288
  %1019 = vmatprep.subr.mxu0 %v285
  %1020 = vmatpush2.msra.mxu0 %v284
  %1021 = vmatprep.subr.mxu0 %v281
  %1022 = vmatpush2.msra.mxu0 %v280
  %1023 = vmatprep.subr.mxu0 %v277
  %1024 = vmatpush2.msra.mxu0 %v276
  %1025 = vmatprep.subr.mxu0 %v273
  %1026 = vmatpush2.msra.mxu0 %v272
  %1027 = vmatprep.subr.mxu0 %v269
  %1028 = vmatpush2.msra.mxu0 %v268
  %1029 = vmatprep.subr.mxu0 %v265
  %1030 = vmatpush2.msra.mxu0 %v264
  %1031 = vmatprep.subr.mxu0 %v261
  %1032 = vmatpush2.msra.mxu0 %v260
  %1033 = vmatprep.subr.mxu0 %v257
  %1034 = vmatpush2.msra.mxu0 %v256
  %1035 = vmatprep.subr.mxu0 %v253
  %1036 = vmatpush2.msra.mxu0 %v252
  %1037 = vmatprep.subr.mxu0 %v249
  %1038 = vmatpush2.msra.mxu0 %v248
  %1039 = vmatprep.subr.mxu0 %v245
  %1040 = vmatpush2.msra.mxu0 %v244
  %1041 = vmatprep.subr.mxu0 %v241
  %1042 = vmatpush2.msra.mxu0 %v240
  %1043 = vmatprep.mubr.f32.mxu0 %v25
  %1044 = vmatmul.mubr.f32.gmra.mxu0 %v24
  %v1045 = vpop.f32.mrf.mxu0
  %v1046 = vadd.f32 %v969, %v1045
  %v1047 = vpop.f32.mrf.mxu0
  %v1048 = vadd.f32 %v971, %v1047
  %1049 = vmatprep.mubr.f32.mxu0 %v38
  %1050 = vmatmul.mubr.f32.gmra.mxu0 %v37
  %v1051 = vpop.f32.mrf.mxu0
  %v1052 = vadd.f32 %v975, %v1051
  %v1053 = vpop.f32.mrf.mxu0
  %v1054 = vadd.f32 %v977, %v1053
  %1055 = vdwg.mxu0
  %1056 = vmatprep.subr.mxu0 %v365
  %1057 = vmatpush1.msra.mxu0 %v364
  %1058 = vmatprep.subr.mxu0 %v361
  %1059 = vmatpush1.msra.mxu0 %v360
  %1060 = vmatprep.subr.mxu0 %v357
  %1061 = vmatpush1.msra.mxu0 %v356
  %1062 = vmatprep.subr.mxu0 %v353
  %1063 = vmatpush1.msra.mxu0 %v352
  %1064 = vmatprep.subr.mxu0 %v349
  %1065 = vmatpush1.msra.mxu0 %v348
  %1066 = vmatprep.subr.mxu0 %v345
  %1067 = vmatpush1.msra.mxu0 %v344
  %1068 = vmatprep.subr.mxu0 %v341
  %1069 = vmatpush1.msra.mxu0 %v340
  %1070 = vmatprep.subr.mxu0 %v337
  %1071 = vmatpush1.msra.mxu0 %v336
  %1072 = vmatprep.subr.mxu0 %v333
  %1073 = vmatpush1.msra.mxu0 %v332
  %1074 = vmatprep.subr.mxu0 %v329
  %1075 = vmatpush1.msra.mxu0 %v328
  %1076 = vmatprep.subr.mxu0 %v325
  %1077 = vmatpush1.msra.mxu0 %v324
  %1078 = vmatprep.subr.mxu0 %v321
  %1079 = vmatpush1.msra.mxu0 %v320
  %1080 = vmatprep.subr.mxu0 %v317
  %1081 = vmatpush1.msra.mxu0 %v316
  %1082 = vmatprep.subr.mxu0 %v313
  %1083 = vmatpush1.msra.mxu0 %v312
  %1084 = vmatprep.subr.mxu0 %v309
  %1085 = vmatpush1.msra.mxu0 %v308
  %1086 = vmatprep.subr.mxu0 %v305
  %1087 = vmatpush1.msra.mxu0 %v304
  %1088 = vmatprep.subr.mxu0 %v429
  %1089 = vmatpush2.msra.mxu0 %v428
  %1090 = vmatprep.subr.mxu0 %v425
  %1091 = vmatpush2.msra.mxu0 %v424
  %1092 = vmatprep.subr.mxu0 %v421
  %1093 = vmatpush2.msra.mxu0 %v420
  %1094 = vmatprep.subr.mxu0 %v417
  %1095 = vmatpush2.msra.mxu0 %v416
  %1096 = vmatprep.subr.mxu0 %v413
  %1097 = vmatpush2.msra.mxu0 %v412
  %1098 = vmatprep.subr.mxu0 %v409
  %1099 = vmatpush2.msra.mxu0 %v408
  %1100 = vmatprep.subr.mxu0 %v405
  %1101 = vmatpush2.msra.mxu0 %v404
  %1102 = vmatprep.subr.mxu0 %v401
  %1103 = vmatpush2.msra.mxu0 %v400
  %1104 = vmatprep.subr.mxu0 %v397
  %1105 = vmatpush2.msra.mxu0 %v396
  %1106 = vmatprep.subr.mxu0 %v393
  %1107 = vmatpush2.msra.mxu0 %v392
  %1108 = vmatprep.subr.mxu0 %v389
  %1109 = vmatpush2.msra.mxu0 %v388
  %1110 = vmatprep.subr.mxu0 %v385
  %1111 = vmatpush2.msra.mxu0 %v384
  %1112 = vmatprep.subr.mxu0 %v381
  %1113 = vmatpush2.msra.mxu0 %v380
  %1114 = vmatprep.subr.mxu0 %v377
  %1115 = vmatpush2.msra.mxu0 %v376
  %1116 = vmatprep.subr.mxu0 %v373
  %1117 = vmatpush2.msra.mxu0 %v372
  %1118 = vmatprep.subr.mxu0 %v369
  %1119 = vmatpush2.msra.mxu0 %v368
  %1120 = vmatprep.mubr.f32.mxu0 %v27
  %1121 = vmatmul.mubr.f32.gmra.mxu0 %v26
  %v1122 = vpop.f32.mrf.mxu0
  %v1123 = vadd.f32 %v1046, %v1122
  %v1124 = vpop.f32.mrf.mxu0
  %v1125 = vadd.f32 %v1048, %v1124
  %1126 = vmatprep.mubr.f32.mxu0 %v40
  %1127 = vmatmul.mubr.f32.gmra.mxu0 %v39
  %v1128 = vpop.f32.mrf.mxu0
  %v1129 = vadd.f32 %v1052, %v1128
  %v1130 = vpop.f32.mrf.mxu0
  %v1131 = vadd.f32 %v1054, %v1130
  %1132 = vdwg.mxu0
  %1133 = vmatprep.subr.mxu0 %v493
  %1134 = vmatpush1.msra.mxu0 %v492
  %1135 = vmatprep.subr.mxu0 %v489
  %1136 = vmatpush1.msra.mxu0 %v488
  %1137 = vmatprep.subr.mxu0 %v485
  %1138 = vmatpush1.msra.mxu0 %v484
  %1139 = vmatprep.subr.mxu0 %v481
  %1140 = vmatpush1.msra.mxu0 %v480
  %1141 = vmatprep.subr.mxu0 %v477
  %1142 = vmatpush1.msra.mxu0 %v476
  %1143 = vmatprep.subr.mxu0 %v473
  %1144 = vmatpush1.msra.mxu0 %v472
  %1145 = vmatprep.subr.mxu0 %v469
  %1146 = vmatpush1.msra.mxu0 %v468
  %1147 = vmatprep.subr.mxu0 %v465
  %1148 = vmatpush1.msra.mxu0 %v464
  %1149 = vmatprep.subr.mxu0 %v461
  %1150 = vmatpush1.msra.mxu0 %v460
  %1151 = vmatprep.subr.mxu0 %v457
  %1152 = vmatpush1.msra.mxu0 %v456
  %1153 = vmatprep.subr.mxu0 %v453
  %1154 = vmatpush1.msra.mxu0 %v452
  %1155 = vmatprep.subr.mxu0 %v449
  %1156 = vmatpush1.msra.mxu0 %v448
  %1157 = vmatprep.subr.mxu0 %v445
  %1158 = vmatpush1.msra.mxu0 %v444
  %1159 = vmatprep.subr.mxu0 %v441
  %1160 = vmatpush1.msra.mxu0 %v440
  %1161 = vmatprep.subr.mxu0 %v437
  %1162 = vmatpush1.msra.mxu0 %v436
  %1163 = vmatprep.subr.mxu0 %v433
  %1164 = vmatpush1.msra.mxu0 %v432
  %1165 = vmatprep.subr.mxu0 %v557
  %1166 = vmatpush2.msra.mxu0 %v556
  %1167 = vmatprep.subr.mxu0 %v553
  %1168 = vmatpush2.msra.mxu0 %v552
  %1169 = vmatprep.subr.mxu0 %v549
  %1170 = vmatpush2.msra.mxu0 %v548
  %1171 = vmatprep.subr.mxu0 %v545
  %1172 = vmatpush2.msra.mxu0 %v544
  %1173 = vmatprep.subr.mxu0 %v541
  %1174 = vmatpush2.msra.mxu0 %v540
  %1175 = vmatprep.subr.mxu0 %v537
  %1176 = vmatpush2.msra.mxu0 %v536
  %1177 = vmatprep.subr.mxu0 %v533
  %1178 = vmatpush2.msra.mxu0 %v532
  %1179 = vmatprep.subr.mxu0 %v529
  %1180 = vmatpush2.msra.mxu0 %v528
  %1181 = vmatprep.subr.mxu0 %v525
  %1182 = vmatpush2.msra.mxu0 %v524
  %1183 = vmatprep.subr.mxu0 %v521
  %1184 = vmatpush2.msra.mxu0 %v520
  %1185 = vmatprep.subr.mxu0 %v517
  %1186 = vmatpush2.msra.mxu0 %v516
  %1187 = vmatprep.subr.mxu0 %v513
  %1188 = vmatpush2.msra.mxu0 %v512
  %1189 = vmatprep.subr.mxu0 %v509
  %1190 = vmatpush2.msra.mxu0 %v508
  %1191 = vmatprep.subr.mxu0 %v505
  %1192 = vmatpush2.msra.mxu0 %v504
  %1193 = vmatprep.subr.mxu0 %v501
  %1194 = vmatpush2.msra.mxu0 %v500
  %1195 = vmatprep.subr.mxu0 %v497
  %1196 = vmatpush2.msra.mxu0 %v496
  %1197 = vmatprep.mubr.f32.mxu0 %v29
  %1198 = vmatmul.mubr.f32.gmra.mxu0 %v28
  %v1199 = vpop.f32.mrf.mxu0
  %v1200 = vadd.f32 %v1123, %v1199
  %v1201 = vpop.f32.mrf.mxu0
  %v1202 = vadd.f32 %v1125, %v1201
  %1203 = vmatprep.mubr.f32.mxu0 %v42
  %1204 = vmatmul.mubr.f32.gmra.mxu0 %v41
  %v1205 = vpop.f32.mrf.mxu0
  %v1206 = vadd.f32 %v1129, %v1205
  %v1207 = vpop.f32.mrf.mxu0
  %v1208 = vadd.f32 %v1131, %v1207
  %1209 = vdwg.mxu0
  %1210 = vmatprep.subr.mxu0 %v621
  %1211 = vmatpush1.msra.mxu0 %v620
  %1212 = vmatprep.subr.mxu0 %v617
  %1213 = vmatpush1.msra.mxu0 %v616
  %1214 = vmatprep.subr.mxu0 %v613
  %1215 = vmatpush1.msra.mxu0 %v612
  %1216 = vmatprep.subr.mxu0 %v609
  %1217 = vmatpush1.msra.mxu0 %v608
  %1218 = vmatprep.subr.mxu0 %v605
  %1219 = vmatpush1.msra.mxu0 %v604
  %1220 = vmatprep.subr.mxu0 %v601
  %1221 = vmatpush1.msra.mxu0 %v600
  %1222 = vmatprep.subr.mxu0 %v597
  %1223 = vmatpush1.msra.mxu0 %v596
  %1224 = vmatprep.subr.mxu0 %v593
  %1225 = vmatpush1.msra.mxu0 %v592
  %1226 = vmatprep.subr.mxu0 %v589
  %1227 = vmatpush1.msra.mxu0 %v588
  %1228 = vmatprep.subr.mxu0 %v585
  %1229 = vmatpush1.msra.mxu0 %v584
  %1230 = vmatprep.subr.mxu0 %v581
  %1231 = vmatpush1.msra.mxu0 %v580
  %1232 = vmatprep.subr.mxu0 %v577
  %1233 = vmatpush1.msra.mxu0 %v576
  %1234 = vmatprep.subr.mxu0 %v573
  %1235 = vmatpush1.msra.mxu0 %v572
  %1236 = vmatprep.subr.mxu0 %v569
  %1237 = vmatpush1.msra.mxu0 %v568
  %1238 = vmatprep.subr.mxu0 %v565
  %1239 = vmatpush1.msra.mxu0 %v564
  %1240 = vmatprep.subr.mxu0 %v561
  %1241 = vmatpush1.msra.mxu0 %v560
  %1242 = vmatprep.subr.mxu0 %v685
  %1243 = vmatpush2.msra.mxu0 %v684
  %1244 = vmatprep.subr.mxu0 %v681
  %1245 = vmatpush2.msra.mxu0 %v680
  %1246 = vmatprep.subr.mxu0 %v677
  %1247 = vmatpush2.msra.mxu0 %v676
  %1248 = vmatprep.subr.mxu0 %v673
  %1249 = vmatpush2.msra.mxu0 %v672
  %1250 = vmatprep.subr.mxu0 %v669
  %1251 = vmatpush2.msra.mxu0 %v668
  %1252 = vmatprep.subr.mxu0 %v665
  %1253 = vmatpush2.msra.mxu0 %v664
  %1254 = vmatprep.subr.mxu0 %v661
  %1255 = vmatpush2.msra.mxu0 %v660
  %1256 = vmatprep.subr.mxu0 %v657
  %1257 = vmatpush2.msra.mxu0 %v656
  %1258 = vmatprep.subr.mxu0 %v653
  %1259 = vmatpush2.msra.mxu0 %v652
  %1260 = vmatprep.subr.mxu0 %v649
  %1261 = vmatpush2.msra.mxu0 %v648
  %1262 = vmatprep.subr.mxu0 %v645
  %1263 = vmatpush2.msra.mxu0 %v644
  %1264 = vmatprep.subr.mxu0 %v641
  %1265 = vmatpush2.msra.mxu0 %v640
  %1266 = vmatprep.subr.mxu0 %v637
  %1267 = vmatpush2.msra.mxu0 %v636
  %1268 = vmatprep.subr.mxu0 %v633
  %1269 = vmatpush2.msra.mxu0 %v632
  %1270 = vmatprep.subr.mxu0 %v629
  %1271 = vmatpush2.msra.mxu0 %v628
  %1272 = vmatprep.subr.mxu0 %v625
  %1273 = vmatpush2.msra.mxu0 %v624
  %1274 = vmatprep.mubr.f32.mxu0 %v31
  %1275 = vmatmul.mubr.f32.gmra.mxu0 %v30
  %v1276 = vpop.f32.mrf.mxu0
  %v1277 = vadd.f32 %v1200, %v1276
  %v1278 = vpop.f32.mrf.mxu0
  %v1279 = vadd.f32 %v1202, %v1278
  %1280 = vmatprep.mubr.f32.mxu0 %v44
  %1281 = vmatmul.mubr.f32.gmra.mxu0 %v43
  %v1282 = vpop.f32.mrf.mxu0
  %v1283 = vadd.f32 %v1206, %v1282
  %v1284 = vpop.f32.mrf.mxu0
  %v1285 = vadd.f32 %v1208, %v1284
  %1286 = vdwg.mxu0
  %1287 = vmatprep.subr.mxu0 %v749
  %1288 = vmatpush1.msra.mxu0 %v748
  %1289 = vmatprep.subr.mxu0 %v745
  %1290 = vmatpush1.msra.mxu0 %v744
  %1291 = vmatprep.subr.mxu0 %v741
  %1292 = vmatpush1.msra.mxu0 %v740
  %1293 = vmatprep.subr.mxu0 %v737
  %1294 = vmatpush1.msra.mxu0 %v736
  %1295 = vmatprep.subr.mxu0 %v733
  %1296 = vmatpush1.msra.mxu0 %v732
  %1297 = vmatprep.subr.mxu0 %v729
  %1298 = vmatpush1.msra.mxu0 %v728
  %1299 = vmatprep.subr.mxu0 %v725
  %1300 = vmatpush1.msra.mxu0 %v724
  %1301 = vmatprep.subr.mxu0 %v721
  %1302 = vmatpush1.msra.mxu0 %v720
  %1303 = vmatprep.subr.mxu0 %v717
  %1304 = vmatpush1.msra.mxu0 %v716
  %1305 = vmatprep.subr.mxu0 %v713
  %1306 = vmatpush1.msra.mxu0 %v712
  %1307 = vmatprep.subr.mxu0 %v709
  %1308 = vmatpush1.msra.mxu0 %v708
  %1309 = vmatprep.subr.mxu0 %v705
  %1310 = vmatpush1.msra.mxu0 %v704
  %1311 = vmatprep.subr.mxu0 %v701
  %1312 = vmatpush1.msra.mxu0 %v700
  %1313 = vmatprep.subr.mxu0 %v697
  %1314 = vmatpush1.msra.mxu0 %v696
  %1315 = vmatprep.subr.mxu0 %v693
  %1316 = vmatpush1.msra.mxu0 %v692
  %1317 = vmatprep.subr.mxu0 %v689
  %1318 = vmatpush1.msra.mxu0 %v688
  %1319 = vmatprep.subr.mxu0 %v813
  %1320 = vmatpush2.msra.mxu0 %v812
  %1321 = vmatprep.subr.mxu0 %v809
  %1322 = vmatpush2.msra.mxu0 %v808
  %1323 = vmatprep.subr.mxu0 %v805
  %1324 = vmatpush2.msra.mxu0 %v804
  %1325 = vmatprep.subr.mxu0 %v801
  %1326 = vmatpush2.msra.mxu0 %v800
  %1327 = vmatprep.subr.mxu0 %v797
  %1328 = vmatpush2.msra.mxu0 %v796
  %1329 = vmatprep.subr.mxu0 %v793
  %1330 = vmatpush2.msra.mxu0 %v792
  %1331 = vmatprep.subr.mxu0 %v789
  %1332 = vmatpush2.msra.mxu0 %v788
  %1333 = vmatprep.subr.mxu0 %v785
  %1334 = vmatpush2.msra.mxu0 %v784
  %1335 = vmatprep.subr.mxu0 %v781
  %1336 = vmatpush2.msra.mxu0 %v780
  %1337 = vmatprep.subr.mxu0 %v777
  %1338 = vmatpush2.msra.mxu0 %v776
  %1339 = vmatprep.subr.mxu0 %v773
  %1340 = vmatpush2.msra.mxu0 %v772
  %1341 = vmatprep.subr.mxu0 %v769
  %1342 = vmatpush2.msra.mxu0 %v768
  %1343 = vmatprep.subr.mxu0 %v765
  %1344 = vmatpush2.msra.mxu0 %v764
  %1345 = vmatprep.subr.mxu0 %v761
  %1346 = vmatpush2.msra.mxu0 %v760
  %1347 = vmatprep.subr.mxu0 %v757
  %1348 = vmatpush2.msra.mxu0 %v756
  %1349 = vmatprep.subr.mxu0 %v753
  %1350 = vmatpush2.msra.mxu0 %v752
  %1351 = vmatprep.mubr.f32.mxu0 %v33
  %1352 = vmatmul.mubr.f32.gmra.mxu0 %v32
  %v1353 = vpop.f32.mrf.mxu0
  %v1354 = vadd.f32 %v1277, %v1353
  %v1355 = vpop.f32.mrf.mxu0
  %v1356 = vadd.f32 %v1279, %v1355
  %1357 = vmatprep.mubr.f32.mxu0 %v46
  %1358 = vmatmul.mubr.f32.gmra.mxu0 %v45
  %v1359 = vpop.f32.mrf.mxu0
  %v1360 = vadd.f32 %v1283, %v1359
  %v1361 = vpop.f32.mrf.mxu0
  %v1362 = vadd.f32 %v1285, %v1361
  %1363 = vdwg.mxu0
  %1364 = vmatprep.subr.mxu0 %v877
  %1365 = vmatpush1.msra.mxu0 %v876
  %1366 = vmatprep.subr.mxu0 %v873
  %1367 = vmatpush1.msra.mxu0 %v872
  %1368 = vmatprep.subr.mxu0 %v869
  %1369 = vmatpush1.msra.mxu0 %v868
  %1370 = vmatprep.subr.mxu0 %v865
  %1371 = vmatpush1.msra.mxu0 %v864
  %1372 = vmatprep.subr.mxu0 %v861
  %1373 = vmatpush1.msra.mxu0 %v860
  %1374 = vmatprep.subr.mxu0 %v857
  %1375 = vmatpush1.msra.mxu0 %v856
  %1376 = vmatprep.subr.mxu0 %v853
  %1377 = vmatpush1.msra.mxu0 %v852
  %1378 = vmatprep.subr.mxu0 %v849
  %1379 = vmatpush1.msra.mxu0 %v848
  %1380 = vmatprep.subr.mxu0 %v845
  %1381 = vmatpush1.msra.mxu0 %v844
  %1382 = vmatprep.subr.mxu0 %v841
  %1383 = vmatpush1.msra.mxu0 %v840
  %1384 = vmatprep.subr.mxu0 %v837
  %1385 = vmatpush1.msra.mxu0 %v836
  %1386 = vmatprep.subr.mxu0 %v833
  %1387 = vmatpush1.msra.mxu0 %v832
  %1388 = vmatprep.subr.mxu0 %v829
  %1389 = vmatpush1.msra.mxu0 %v828
  %1390 = vmatprep.subr.mxu0 %v825
  %1391 = vmatpush1.msra.mxu0 %v824
  %1392 = vmatprep.subr.mxu0 %v821
  %1393 = vmatpush1.msra.mxu0 %v820
  %1394 = vmatprep.subr.mxu0 %v817
  %1395 = vmatpush1.msra.mxu0 %v816
  %1396 = vmatprep.subr.mxu0 0.0
  %1397 = vmatpush2.msra.mxu0 0.0
  %1398 = vmatprep.subr.mxu0 0.0
  %1399 = vmatpush2.msra.mxu0 0.0
  %1400 = vmatprep.subr.mxu0 0.0
  %1401 = vmatpush2.msra.mxu0 0.0
  %1402 = vmatprep.subr.mxu0 0.0
  %1403 = vmatpush2.msra.mxu0 0.0
  %1404 = vmatprep.subr.mxu0 0.0
  %1405 = vmatpush2.msra.mxu0 0.0
  %1406 = vmatprep.subr.mxu0 0.0
  %1407 = vmatpush2.msra.mxu0 0.0
  %1408 = vmatprep.subr.mxu0 0.0
  %1409 = vmatpush2.msra.mxu0 0.0
  %1410 = vmatprep.subr.mxu0 0.0
  %1411 = vmatpush2.msra.mxu0 0.0
  %1412 = vmatprep.subr.mxu0 0.0
  %1413 = vmatpush2.msra.mxu0 0.0
  %1414 = vmatprep.subr.mxu0 0.0
  %1415 = vmatpush2.msra.mxu0 0.0
  %1416 = vmatprep.subr.mxu0 0.0
  %1417 = vmatpush2.msra.mxu0 0.0
  %1418 = vmatprep.subr.mxu0 0.0
  %1419 = vmatpush2.msra.mxu0 0.0
  %1420 = vmatprep.subr.mxu0 0.0
  %1421 = vmatpush2.msra.mxu0 0.0
  %1422 = vmatprep.subr.mxu0 0.0
  %1423 = vmatpush2.msra.mxu0 0.0
  %1424 = vmatprep.subr.mxu0 0.0
  %1425 = vmatpush2.msra.mxu0 0.0
  %1426 = vmatprep.subr.mxu0 0.0
  %1427 = vmatpush2.msra.mxu0 0.0
  %1428 = vmatprep.mubr.f32.mxu0 0.0
  %1429 = vmatmul.mubr.f32.gmra.mxu0 %v34
  %v1430 = vpop.f32.mrf.mxu0
  %v1431 = vadd.f32 %v1354, %v1430
  %v1432 = vpop.f32.mrf.mxu0
  %v1433 = vadd.f32 %v1356, %v1432
  %1434 = vmatprep.mubr.f32.mxu0 0.0
  %1435 = vmatmul.mubr.f32.gmra.mxu0 %v47
  %v1436 = vpop.f32.mrf.mxu0
  %v1437 = vadd.f32 %v1360, %v1436
  %v1438 = vpop.f32.mrf.mxu0
  %v1439 = vadd.f32 %v1362, %v1438
  %1440 = vdwg.mxu0
  %1441 = vmatprep.subr.mxu0 %v111
  %1442 = vmatpush1.msra.mxu0 %v110
  %1443 = vmatprep.subr.mxu0 %v107
  %1444 = vmatpush1.msra.mxu0 %v106
  %1445 = vmatprep.subr.mxu0 %v103
  %1446 = vmatpush1.msra.mxu0 %v102
  %1447 = vmatprep.subr.mxu0 %v99
  %1448 = vmatpush1.msra.mxu0 %v98
  %1449 = vmatprep.subr.mxu0 %v95
  %1450 = vmatpush1.msra.mxu0 %v94
  %1451 = vmatprep.subr.mxu0 %v91
  %1452 = vmatpush1.msra.mxu0 %v90
  %1453 = vmatprep.subr.mxu0 %v87
  %1454 = vmatpush1.msra.mxu0 %v86
  %1455 = vmatprep.subr.mxu0 %v83
  %1456 = vmatpush1.msra.mxu0 %v82
  %1457 = vmatprep.subr.mxu0 %v79
  %1458 = vmatpush1.msra.mxu0 %v78
  %1459 = vmatprep.subr.mxu0 %v75
  %1460 = vmatpush1.msra.mxu0 %v74
  %1461 = vmatprep.subr.mxu0 %v71
  %1462 = vmatpush1.msra.mxu0 %v70
  %1463 = vmatprep.subr.mxu0 %v67
  %1464 = vmatpush1.msra.mxu0 %v66
  %1465 = vmatprep.subr.mxu0 %v63
  %1466 = vmatpush1.msra.mxu0 %v62
  %1467 = vmatprep.subr.mxu0 %v59
  %1468 = vmatpush1.msra.mxu0 %v58
  %1469 = vmatprep.subr.mxu0 %v55
  %1470 = vmatpush1.msra.mxu0 %v54
  %1471 = vmatprep.subr.mxu0 %v51
  %1472 = vmatpush1.msra.mxu0 %v50
  %1473 = vmatprep.subr.mxu0 %v175
  %1474 = vmatpush2.msra.mxu0 %v174
  %1475 = vmatprep.subr.mxu0 %v171
  %1476 = vmatpush2.msra.mxu0 %v170
  %1477 = vmatprep.subr.mxu0 %v167
  %1478 = vmatpush2.msra.mxu0 %v166
  %1479 = vmatprep.subr.mxu0 %v163
  %1480 = vmatpush2.msra.mxu0 %v162
  %1481 = vmatprep.subr.mxu0 %v159
  %1482 = vmatpush2.msra.mxu0 %v158
  %1483 = vmatprep.subr.mxu0 %v155
  %1484 = vmatpush2.msra.mxu0 %v154
  %1485 = vmatprep.subr.mxu0 %v151
  %1486 = vmatpush2.msra.mxu0 %v150
  %1487 = vmatprep.subr.mxu0 %v147
  %1488 = vmatpush2.msra.mxu0 %v146
  %1489 = vmatprep.subr.mxu0 %v143
  %1490 = vmatpush2.msra.mxu0 %v142
  %1491 = vmatprep.subr.mxu0 %v139
  %1492 = vmatpush2.msra.mxu0 %v138
  %1493 = vmatprep.subr.mxu0 %v135
  %1494 = vmatpush2.msra.mxu0 %v134
  %1495 = vmatprep.subr.mxu0 %v131
  %1496 = vmatpush2.msra.mxu0 %v130
  %1497 = vmatprep.subr.mxu0 %v127
  %1498 = vmatpush2.msra.mxu0 %v126
  %1499 = vmatprep.subr.mxu0 %v123
  %1500 = vmatpush2.msra.mxu0 %v122
  %1501 = vmatprep.subr.mxu0 %v119
  %1502 = vmatpush2.msra.mxu0 %v118
  %1503 = vmatprep.subr.mxu0 %v115
  %1504 = vmatpush2.msra.mxu0 %v114
  %1505 = vmatprep.mubr.f32.mxu0 %v23
  %1506 = vmatmul.mubr.f32.gmra.mxu0 %v22
  %v1507 = vpop.f32.mrf.mxu0
  %v1508 = vadd.f32 %v893, %v1507
  %v1509 = vpop.f32.mrf.mxu0
  %v1510 = vadd.f32 %v897, %v1509
  %1511 = vmatprep.mubr.f32.mxu0 %v36
  %1512 = vmatmul.mubr.f32.gmra.mxu0 %v35
  %v1513 = vpop.f32.mrf.mxu0
  %v1514 = vadd.f32 %v893, %v1513
  %v1515 = vpop.f32.mrf.mxu0
  %v1516 = vadd.f32 %v897, %v1515
  %1517 = vdwg.mxu0
  %1518 = vmatprep.subr.mxu0 %v239
  %1519 = vmatpush1.msra.mxu0 %v238
  %1520 = vmatprep.subr.mxu0 %v235
  %1521 = vmatpush1.msra.mxu0 %v234
  %1522 = vmatprep.subr.mxu0 %v231
  %1523 = vmatpush1.msra.mxu0 %v230
  %1524 = vmatprep.subr.mxu0 %v227
  %1525 = vmatpush1.msra.mxu0 %v226
  %1526 = vmatprep.subr.mxu0 %v223
  %1527 = vmatpush1.msra.mxu0 %v222
  %1528 = vmatprep.subr.mxu0 %v219
  %1529 = vmatpush1.msra.mxu0 %v218
  %1530 = vmatprep.subr.mxu0 %v215
  %1531 = vmatpush1.msra.mxu0 %v214
  %1532 = vmatprep.subr.mxu0 %v211
  %1533 = vmatpush1.msra.mxu0 %v210
  %1534 = vmatprep.subr.mxu0 %v207
  %1535 = vmatpush1.msra.mxu0 %v206
  %1536 = vmatprep.subr.mxu0 %v203
  %1537 = vmatpush1.msra.mxu0 %v202
  %1538 = vmatprep.subr.mxu0 %v199
  %1539 = vmatpush1.msra.mxu0 %v198
  %1540 = vmatprep.subr.mxu0 %v195
  %1541 = vmatpush1.msra.mxu0 %v194
  %1542 = vmatprep.subr.mxu0 %v191
  %1543 = vmatpush1.msra.mxu0 %v190
  %1544 = vmatprep.subr.mxu0 %v187
  %1545 = vmatpush1.msra.mxu0 %v186
  %1546 = vmatprep.subr.mxu0 %v183
  %1547 = vmatpush1.msra.mxu0 %v182
  %1548 = vmatprep.subr.mxu0 %v179
  %1549 = vmatpush1.msra.mxu0 %v178
  %1550 = vmatprep.subr.mxu0 %v303
  %1551 = vmatpush2.msra.mxu0 %v302
  %1552 = vmatprep.subr.mxu0 %v299
  %1553 = vmatpush2.msra.mxu0 %v298
  %1554 = vmatprep.subr.mxu0 %v295
  %1555 = vmatpush2.msra.mxu0 %v294
  %1556 = vmatprep.subr.mxu0 %v291
  %1557 = vmatpush2.msra.mxu0 %v290
  %1558 = vmatprep.subr.mxu0 %v287
  %1559 = vmatpush2.msra.mxu0 %v286
  %1560 = vmatprep.subr.mxu0 %v283
  %1561 = vmatpush2.msra.mxu0 %v282
  %1562 = vmatprep.subr.mxu0 %v279
  %1563 = vmatpush2.msra.mxu0 %v278
  %1564 = vmatprep.subr.mxu0 %v275
  %1565 = vmatpush2.msra.mxu0 %v274
  %1566 = vmatprep.subr.mxu0 %v271
  %1567 = vmatpush2.msra.mxu0 %v270
  %1568 = vmatprep.subr.mxu0 %v267
  %1569 = vmatpush2.msra.mxu0 %v266
  %1570 = vmatprep.subr.mxu0 %v263
  %1571 = vmatpush2.msra.mxu0 %v262
  %1572 = vmatprep.subr.mxu0 %v259
  %1573 = vmatpush2.msra.mxu0 %v258
  %1574 = vmatprep.subr.mxu0 %v255
  %1575 = vmatpush2.msra.mxu0 %v254
  %1576 = vmatprep.subr.mxu0 %v251
  %1577 = vmatpush2.msra.mxu0 %v250
  %1578 = vmatprep.subr.mxu0 %v247
  %1579 = vmatpush2.msra.mxu0 %v246
  %1580 = vmatprep.subr.mxu0 %v243
  %1581 = vmatpush2.msra.mxu0 %v242
  %1582 = vmatprep.mubr.f32.mxu0 %v25
  %1583 = vmatmul.mubr.f32.gmra.mxu0 %v24
  %v1584 = vpop.f32.mrf.mxu0
  %v1585 = vadd.f32 %v1508, %v1584
  %v1586 = vpop.f32.mrf.mxu0
  %v1587 = vadd.f32 %v1510, %v1586
  %1588 = vmatprep.mubr.f32.mxu0 %v38
  %1589 = vmatmul.mubr.f32.gmra.mxu0 %v37
  %v1590 = vpop.f32.mrf.mxu0
  %v1591 = vadd.f32 %v1514, %v1590
  %v1592 = vpop.f32.mrf.mxu0
  %v1593 = vadd.f32 %v1516, %v1592
  %1594 = vdwg.mxu0
  %1595 = vmatprep.subr.mxu0 %v367
  %1596 = vmatpush1.msra.mxu0 %v366
  %1597 = vmatprep.subr.mxu0 %v363
  %1598 = vmatpush1.msra.mxu0 %v362
  %1599 = vmatprep.subr.mxu0 %v359
  %1600 = vmatpush1.msra.mxu0 %v358
  %1601 = vmatprep.subr.mxu0 %v355
  %1602 = vmatpush1.msra.mxu0 %v354
  %1603 = vmatprep.subr.mxu0 %v351
  %1604 = vmatpush1.msra.mxu0 %v350
  %1605 = vmatprep.subr.mxu0 %v347
  %1606 = vmatpush1.msra.mxu0 %v346
  %1607 = vmatprep.subr.mxu0 %v343
  %1608 = vmatpush1.msra.mxu0 %v342
  %1609 = vmatprep.subr.mxu0 %v339
  %1610 = vmatpush1.msra.mxu0 %v338
  %1611 = vmatprep.subr.mxu0 %v335
  %1612 = vmatpush1.msra.mxu0 %v334
  %1613 = vmatprep.subr.mxu0 %v331
  %1614 = vmatpush1.msra.mxu0 %v330
  %1615 = vmatprep.subr.mxu0 %v327
  %1616 = vmatpush1.msra.mxu0 %v326
  %1617 = vmatprep.subr.mxu0 %v323
  %1618 = vmatpush1.msra.mxu0 %v322
  %1619 = vmatprep.subr.mxu0 %v319
  %1620 = vmatpush1.msra.mxu0 %v318
  %1621 = vmatprep.subr.mxu0 %v315
  %1622 = vmatpush1.msra.mxu0 %v314
  %1623 = vmatprep.subr.mxu0 %v311
  %1624 = vmatpush1.msra.mxu0 %v310
  %1625 = vmatprep.subr.mxu0 %v307
  %1626 = vmatpush1.msra.mxu0 %v306
  %1627 = vmatprep.subr.mxu0 %v431
  %1628 = vmatpush2.msra.mxu0 %v430
  %1629 = vmatprep.subr.mxu0 %v427
  %1630 = vmatpush2.msra.mxu0 %v426
  %1631 = vmatprep.subr.mxu0 %v423
  %1632 = vmatpush2.msra.mxu0 %v422
  %1633 = vmatprep.subr.mxu0 %v419
  %1634 = vmatpush2.msra.mxu0 %v418
  %1635 = vmatprep.subr.mxu0 %v415
  %1636 = vmatpush2.msra.mxu0 %v414
  %1637 = vmatprep.subr.mxu0 %v411
  %1638 = vmatpush2.msra.mxu0 %v410
  %1639 = vmatprep.subr.mxu0 %v407
  %1640 = vmatpush2.msra.mxu0 %v406
  %1641 = vmatprep.subr.mxu0 %v403
  %1642 = vmatpush2.msra.mxu0 %v402
  %1643 = vmatprep.subr.mxu0 %v399
  %1644 = vmatpush2.msra.mxu0 %v398
  %1645 = vmatprep.subr.mxu0 %v395
  %1646 = vmatpush2.msra.mxu0 %v394
  %1647 = vmatprep.subr.mxu0 %v391
  %1648 = vmatpush2.msra.mxu0 %v390
  %1649 = vmatprep.subr.mxu0 %v387
  %1650 = vmatpush2.msra.mxu0 %v386
  %1651 = vmatprep.subr.mxu0 %v383
  %1652 = vmatpush2.msra.mxu0 %v382
  %1653 = vmatprep.subr.mxu0 %v379
  %1654 = vmatpush2.msra.mxu0 %v378
  %1655 = vmatprep.subr.mxu0 %v375
  %1656 = vmatpush2.msra.mxu0 %v374
  %1657 = vmatprep.subr.mxu0 %v371
  %1658 = vmatpush2.msra.mxu0 %v370
  %1659 = vmatprep.mubr.f32.mxu0 %v27
  %1660 = vmatmul.mubr.f32.gmra.mxu0 %v26
  %v1661 = vpop.f32.mrf.mxu0
  %v1662 = vadd.f32 %v1585, %v1661
  %v1663 = vpop.f32.mrf.mxu0
  %v1664 = vadd.f32 %v1587, %v1663
  %1665 = vmatprep.mubr.f32.mxu0 %v40
  %1666 = vmatmul.mubr.f32.gmra.mxu0 %v39
  %v1667 = vpop.f32.mrf.mxu0
  %v1668 = vadd.f32 %v1591, %v1667
  %v1669 = vpop.f32.mrf.mxu0
  %v1670 = vadd.f32 %v1593, %v1669
  %1671 = vdwg.mxu0
  %1672 = vmatprep.subr.mxu0 %v495
  %1673 = vmatpush1.msra.mxu0 %v494
  %1674 = vmatprep.subr.mxu0 %v491
  %1675 = vmatpush1.msra.mxu0 %v490
  %1676 = vmatprep.subr.mxu0 %v487
  %1677 = vmatpush1.msra.mxu0 %v486
  %1678 = vmatprep.subr.mxu0 %v483
  %1679 = vmatpush1.msra.mxu0 %v482
  %1680 = vmatprep.subr.mxu0 %v479
  %1681 = vmatpush1.msra.mxu0 %v478
  %1682 = vmatprep.subr.mxu0 %v475
  %1683 = vmatpush1.msra.mxu0 %v474
  %1684 = vmatprep.subr.mxu0 %v471
  %1685 = vmatpush1.msra.mxu0 %v470
  %1686 = vmatprep.subr.mxu0 %v467
  %1687 = vmatpush1.msra.mxu0 %v466
  %1688 = vmatprep.subr.mxu0 %v463
  %1689 = vmatpush1.msra.mxu0 %v462
  %1690 = vmatprep.subr.mxu0 %v459
  %1691 = vmatpush1.msra.mxu0 %v458
  %1692 = vmatprep.subr.mxu0 %v455
  %1693 = vmatpush1.msra.mxu0 %v454
  %1694 = vmatprep.subr.mxu0 %v451
  %1695 = vmatpush1.msra.mxu0 %v450
  %1696 = vmatprep.subr.mxu0 %v447
  %1697 = vmatpush1.msra.mxu0 %v446
  %1698 = vmatprep.subr.mxu0 %v443
  %1699 = vmatpush1.msra.mxu0 %v442
  %1700 = vmatprep.subr.mxu0 %v439
  %1701 = vmatpush1.msra.mxu0 %v438
  %1702 = vmatprep.subr.mxu0 %v435
  %1703 = vmatpush1.msra.mxu0 %v434
  %1704 = vmatprep.subr.mxu0 %v559
  %1705 = vmatpush2.msra.mxu0 %v558
  %1706 = vmatprep.subr.mxu0 %v555
  %1707 = vmatpush2.msra.mxu0 %v554
  %1708 = vmatprep.subr.mxu0 %v551
  %1709 = vmatpush2.msra.mxu0 %v550
  %1710 = vmatprep.subr.mxu0 %v547
  %1711 = vmatpush2.msra.mxu0 %v546
  %1712 = vmatprep.subr.mxu0 %v543
  %1713 = vmatpush2.msra.mxu0 %v542
  %1714 = vmatprep.subr.mxu0 %v539
  %1715 = vmatpush2.msra.mxu0 %v538
  %1716 = vmatprep.subr.mxu0 %v535
  %1717 = vmatpush2.msra.mxu0 %v534
  %1718 = vmatprep.subr.mxu0 %v531
  %1719 = vmatpush2.msra.mxu0 %v530
  %1720 = vmatprep.subr.mxu0 %v527
  %1721 = vmatpush2.msra.mxu0 %v526
  %1722 = vmatprep.subr.mxu0 %v523
  %1723 = vmatpush2.msra.mxu0 %v522
  %1724 = vmatprep.subr.mxu0 %v519
  %1725 = vmatpush2.msra.mxu0 %v518
  %1726 = vmatprep.subr.mxu0 %v515
  %1727 = vmatpush2.msra.mxu0 %v514
  %1728 = vmatprep.subr.mxu0 %v511
  %1729 = vmatpush2.msra.mxu0 %v510
  %1730 = vmatprep.subr.mxu0 %v507
  %1731 = vmatpush2.msra.mxu0 %v506
  %1732 = vmatprep.subr.mxu0 %v503
  %1733 = vmatpush2.msra.mxu0 %v502
  %1734 = vmatprep.subr.mxu0 %v499
  %1735 = vmatpush2.msra.mxu0 %v498
  %1736 = vmatprep.mubr.f32.mxu0 %v29
  %1737 = vmatmul.mubr.f32.gmra.mxu0 %v28
  %v1738 = vpop.f32.mrf.mxu0
  %v1739 = vadd.f32 %v1662, %v1738
  %v1740 = vpop.f32.mrf.mxu0
  %v1741 = vadd.f32 %v1664, %v1740
  %1742 = vmatprep.mubr.f32.mxu0 %v42
  %1743 = vmatmul.mubr.f32.gmra.mxu0 %v41
  %v1744 = vpop.f32.mrf.mxu0
  %v1745 = vadd.f32 %v1668, %v1744
  %v1746 = vpop.f32.mrf.mxu0
  %v1747 = vadd.f32 %v1670, %v1746
  %1748 = vdwg.mxu0
  %1749 = vmatprep.subr.mxu0 %v623
  %1750 = vmatpush1.msra.mxu0 %v622
  %1751 = vmatprep.subr.mxu0 %v619
  %1752 = vmatpush1.msra.mxu0 %v618
  %1753 = vmatprep.subr.mxu0 %v615
  %1754 = vmatpush1.msra.mxu0 %v614
  %1755 = vmatprep.subr.mxu0 %v611
  %1756 = vmatpush1.msra.mxu0 %v610
  %1757 = vmatprep.subr.mxu0 %v607
  %1758 = vmatpush1.msra.mxu0 %v606
  %1759 = vmatprep.subr.mxu0 %v603
  %1760 = vmatpush1.msra.mxu0 %v602
  %1761 = vmatprep.subr.mxu0 %v599
  %1762 = vmatpush1.msra.mxu0 %v598
  %1763 = vmatprep.subr.mxu0 %v595
  %1764 = vmatpush1.msra.mxu0 %v594
  %1765 = vmatprep.subr.mxu0 %v591
  %1766 = vmatpush1.msra.mxu0 %v590
  %1767 = vmatprep.subr.mxu0 %v587
  %1768 = vmatpush1.msra.mxu0 %v586
  %1769 = vmatprep.subr.mxu0 %v583
  %1770 = vmatpush1.msra.mxu0 %v582
  %1771 = vmatprep.subr.mxu0 %v579
  %1772 = vmatpush1.msra.mxu0 %v578
  %1773 = vmatprep.subr.mxu0 %v575
  %1774 = vmatpush1.msra.mxu0 %v574
  %1775 = vmatprep.subr.mxu0 %v571
  %1776 = vmatpush1.msra.mxu0 %v570
  %1777 = vmatprep.subr.mxu0 %v567
  %1778 = vmatpush1.msra.mxu0 %v566
  %1779 = vmatprep.subr.mxu0 %v563
  %1780 = vmatpush1.msra.mxu0 %v562
  %1781 = vmatprep.subr.mxu0 %v687
  %1782 = vmatpush2.msra.mxu0 %v686
  %1783 = vmatprep.subr.mxu0 %v683
  %1784 = vmatpush2.msra.mxu0 %v682
  %1785 = vmatprep.subr.mxu0 %v679
  %1786 = vmatpush2.msra.mxu0 %v678
  %1787 = vmatprep.subr.mxu0 %v675
  %1788 = vmatpush2.msra.mxu0 %v674
  %1789 = vmatprep.subr.mxu0 %v671
  %1790 = vmatpush2.msra.mxu0 %v670
  %1791 = vmatprep.subr.mxu0 %v667
  %1792 = vmatpush2.msra.mxu0 %v666
  %1793 = vmatprep.subr.mxu0 %v663
  %1794 = vmatpush2.msra.mxu0 %v662
  %1795 = vmatprep.subr.mxu0 %v659
  %1796 = vmatpush2.msra.mxu0 %v658
  %1797 = vmatprep.subr.mxu0 %v655
  %1798 = vmatpush2.msra.mxu0 %v654
  %1799 = vmatprep.subr.mxu0 %v651
  %1800 = vmatpush2.msra.mxu0 %v650
  %1801 = vmatprep.subr.mxu0 %v647
  %1802 = vmatpush2.msra.mxu0 %v646
  %1803 = vmatprep.subr.mxu0 %v643
  %1804 = vmatpush2.msra.mxu0 %v642
  %1805 = vmatprep.subr.mxu0 %v639
  %1806 = vmatpush2.msra.mxu0 %v638
  %1807 = vmatprep.subr.mxu0 %v635
  %1808 = vmatpush2.msra.mxu0 %v634
  %1809 = vmatprep.subr.mxu0 %v631
  %1810 = vmatpush2.msra.mxu0 %v630
  %1811 = vmatprep.subr.mxu0 %v627
  %1812 = vmatpush2.msra.mxu0 %v626
  %1813 = vmatprep.mubr.f32.mxu0 %v31
  %1814 = vmatmul.mubr.f32.gmra.mxu0 %v30
  %v1815 = vpop.f32.mrf.mxu0
  %v1816 = vadd.f32 %v1739, %v1815
  %v1817 = vpop.f32.mrf.mxu0
  %v1818 = vadd.f32 %v1741, %v1817
  %1819 = vmatprep.mubr.f32.mxu0 %v44
  %1820 = vmatmul.mubr.f32.gmra.mxu0 %v43
  %v1821 = vpop.f32.mrf.mxu0
  %v1822 = vadd.f32 %v1745, %v1821
  %v1823 = vpop.f32.mrf.mxu0
  %v1824 = vadd.f32 %v1747, %v1823
  %1825 = vdwg.mxu0
  %1826 = vmatprep.subr.mxu0 %v751
  %1827 = vmatpush1.msra.mxu0 %v750
  %1828 = vmatprep.subr.mxu0 %v747
  %1829 = vmatpush1.msra.mxu0 %v746
  %1830 = vmatprep.subr.mxu0 %v743
  %1831 = vmatpush1.msra.mxu0 %v742
  %1832 = vmatprep.subr.mxu0 %v739
  %1833 = vmatpush1.msra.mxu0 %v738
  %1834 = vmatprep.subr.mxu0 %v735
  %1835 = vmatpush1.msra.mxu0 %v734
  %1836 = vmatprep.subr.mxu0 %v731
  %1837 = vmatpush1.msra.mxu0 %v730
  %1838 = vmatprep.subr.mxu0 %v727
  %1839 = vmatpush1.msra.mxu0 %v726
  %1840 = vmatprep.subr.mxu0 %v723
  %1841 = vmatpush1.msra.mxu0 %v722
  %1842 = vmatprep.subr.mxu0 %v719
  %1843 = vmatpush1.msra.mxu0 %v718
  %1844 = vmatprep.subr.mxu0 %v715
  %1845 = vmatpush1.msra.mxu0 %v714
  %1846 = vmatprep.subr.mxu0 %v711
  %1847 = vmatpush1.msra.mxu0 %v710
  %1848 = vmatprep.subr.mxu0 %v707
  %1849 = vmatpush1.msra.mxu0 %v706
  %1850 = vmatprep.subr.mxu0 %v703
  %1851 = vmatpush1.msra.mxu0 %v702
  %1852 = vmatprep.subr.mxu0 %v699
  %1853 = vmatpush1.msra.mxu0 %v698
  %1854 = vmatprep.subr.mxu0 %v695
  %1855 = vmatpush1.msra.mxu0 %v694
  %1856 = vmatprep.subr.mxu0 %v691
  %1857 = vmatpush1.msra.mxu0 %v690
  %1858 = vmatprep.subr.mxu0 %v815
  %1859 = vmatpush2.msra.mxu0 %v814
  %1860 = vmatprep.subr.mxu0 %v811
  %1861 = vmatpush2.msra.mxu0 %v810
  %1862 = vmatprep.subr.mxu0 %v807
  %1863 = vmatpush2.msra.mxu0 %v806
  %1864 = vmatprep.subr.mxu0 %v803
  %1865 = vmatpush2.msra.mxu0 %v802
  %1866 = vmatprep.subr.mxu0 %v799
  %1867 = vmatpush2.msra.mxu0 %v798
  %1868 = vmatprep.subr.mxu0 %v795
  %1869 = vmatpush2.msra.mxu0 %v794
  %1870 = vmatprep.subr.mxu0 %v791
  %1871 = vmatpush2.msra.mxu0 %v790
  %1872 = vmatprep.subr.mxu0 %v787
  %1873 = vmatpush2.msra.mxu0 %v786
  %1874 = vmatprep.subr.mxu0 %v783
  %1875 = vmatpush2.msra.mxu0 %v782
  %1876 = vmatprep.subr.mxu0 %v779
  %1877 = vmatpush2.msra.mxu0 %v778
  %1878 = vmatprep.subr.mxu0 %v775
  %1879 = vmatpush2.msra.mxu0 %v774
  %1880 = vmatprep.subr.mxu0 %v771
  %1881 = vmatpush2.msra.mxu0 %v770
  %1882 = vmatprep.subr.mxu0 %v767
  %1883 = vmatpush2.msra.mxu0 %v766
  %1884 = vmatprep.subr.mxu0 %v763
  %1885 = vmatpush2.msra.mxu0 %v762
  %1886 = vmatprep.subr.mxu0 %v759
  %1887 = vmatpush2.msra.mxu0 %v758
  %1888 = vmatprep.subr.mxu0 %v755
  %1889 = vmatpush2.msra.mxu0 %v754
  %1890 = vmatprep.mubr.f32.mxu0 %v33
  %1891 = vmatmul.mubr.f32.gmra.mxu0 %v32
  %v1892 = vpop.f32.mrf.mxu0
  %v1893 = vadd.f32 %v1816, %v1892
  %v1894 = vpop.f32.mrf.mxu0
  %v1895 = vadd.f32 %v1818, %v1894
  %1896 = vmatprep.mubr.f32.mxu0 %v46
  %1897 = vmatmul.mubr.f32.gmra.mxu0 %v45
  %v1898 = vpop.f32.mrf.mxu0
  %v1899 = vadd.f32 %v1822, %v1898
  %v1900 = vpop.f32.mrf.mxu0
  %v1901 = vadd.f32 %v1824, %v1900
  %1902 = vdwg.mxu0
  %1903 = vmatprep.subr.mxu0 %v879
  %1904 = vmatpush1.msra.mxu0 %v878
  %1905 = vmatprep.subr.mxu0 %v875
  %1906 = vmatpush1.msra.mxu0 %v874
  %1907 = vmatprep.subr.mxu0 %v871
  %1908 = vmatpush1.msra.mxu0 %v870
  %1909 = vmatprep.subr.mxu0 %v867
  %1910 = vmatpush1.msra.mxu0 %v866
  %1911 = vmatprep.subr.mxu0 %v863
  %1912 = vmatpush1.msra.mxu0 %v862
  %1913 = vmatprep.subr.mxu0 %v859
  %1914 = vmatpush1.msra.mxu0 %v858
  %1915 = vmatprep.subr.mxu0 %v855
  %1916 = vmatpush1.msra.mxu0 %v854
  %1917 = vmatprep.subr.mxu0 %v851
  %1918 = vmatpush1.msra.mxu0 %v850
  %1919 = vmatprep.subr.mxu0 %v847
  %1920 = vmatpush1.msra.mxu0 %v846
  %1921 = vmatprep.subr.mxu0 %v843
  %1922 = vmatpush1.msra.mxu0 %v842
  %1923 = vmatprep.subr.mxu0 %v839
  %1924 = vmatpush1.msra.mxu0 %v838
  %1925 = vmatprep.subr.mxu0 %v835
  %1926 = vmatpush1.msra.mxu0 %v834
  %1927 = vmatprep.subr.mxu0 %v831
  %1928 = vmatpush1.msra.mxu0 %v830
  %1929 = vmatprep.subr.mxu0 %v827
  %1930 = vmatpush1.msra.mxu0 %v826
  %1931 = vmatprep.subr.mxu0 %v823
  %1932 = vmatpush1.msra.mxu0 %v822
  %1933 = vmatprep.subr.mxu0 %v819
  %1934 = vmatpush1.msra.mxu0 %v818
  %1935 = vmatprep.subr.mxu0 0.0
  %1936 = vmatpush2.msra.mxu0 0.0
  %1937 = vmatprep.subr.mxu0 0.0
  %1938 = vmatpush2.msra.mxu0 0.0
  %1939 = vmatprep.subr.mxu0 0.0
  %1940 = vmatpush2.msra.mxu0 0.0
  %1941 = vmatprep.subr.mxu0 0.0
  %1942 = vmatpush2.msra.mxu0 0.0
  %1943 = vmatprep.subr.mxu0 0.0
  %1944 = vmatpush2.msra.mxu0 0.0
  %1945 = vmatprep.subr.mxu0 0.0
  %1946 = vmatpush2.msra.mxu0 0.0
  %1947 = vmatprep.subr.mxu0 0.0
  %1948 = vmatpush2.msra.mxu0 0.0
  %1949 = vmatprep.subr.mxu0 0.0
  %1950 = vmatpush2.msra.mxu0 0.0
  %1951 = vmatprep.subr.mxu0 0.0
  %1952 = vmatpush2.msra.mxu0 0.0
  %1953 = vmatprep.subr.mxu0 0.0
  %1954 = vmatpush2.msra.mxu0 0.0
  %1955 = vmatprep.subr.mxu0 0.0
  %1956 = vmatpush2.msra.mxu0 0.0
  %1957 = vmatprep.subr.mxu0 0.0
  %1958 = vmatpush2.msra.mxu0 0.0
  %1959 = vmatprep.subr.mxu0 0.0
  %1960 = vmatpush2.msra.mxu0 0.0
  %1961 = vmatprep.subr.mxu0 0.0
  %1962 = vmatpush2.msra.mxu0 0.0
  %1963 = vmatprep.subr.mxu0 0.0
  %1964 = vmatpush2.msra.mxu0 0.0
  %1965 = vmatprep.subr.mxu0 0.0
  %1966 = vmatpush2.msra.mxu0 0.0
  %1967 = vmatprep.mubr.f32.mxu0 0.0
  %1968 = vmatmul.mubr.f32.gmra.mxu0 %v34
  %v1969 = vpop.f32.mrf.mxu0
  %v1970 = vadd.f32 %v1893, %v1969
  %v1971 = vpop.f32.mrf.mxu0
  %v1972 = vadd.f32 %v1895, %v1971
  %1973 = vmatprep.mubr.f32.mxu0 0.0
  %1974 = vmatmul.mubr.f32.gmra.mxu0 %v47
  %v1975 = vpop.f32.mrf.mxu0
  %v1976 = vadd.f32 %v1899, %v1975
  %v1977 = vpop.f32.mrf.mxu0
  %v1978 = vadd.f32 %v1901, %v1977
  %1979 = vdwg.mxu0
  %1980 = vst [vmem:[%s5] sm:$0xff] %v1431
  %1981 = vst [vmem:[%s5 + $0x8] sm:$0xff] %v1433
  %1982 = vst [vmem:[%s5 + $0x10] sm:$0xff] %v1970
  %1983 = vst [vmem:[%s5 + $0x18] sm:$0xff] %v1972
  %1984 = vst [vmem:[%s5 + $0x20] sm:$0xff] %v1437
  %1985 = vst [vmem:[%s5 + $0x28] sm:$0xff] %v1439
  %1986 = vst [vmem:[%s5 + $0x30] sm:$0xff] %v1976
  %1987 = vst [vmem:[%s5 + $0x38] sm:$0xff] %v1978
  %v1988 = vmax.f32 %v1431, 0.0
  %v1989 = vmax.f32 %v1433, 0.0
  %v1990 = vmax.f32 %v1970, 0.0
  %v1991 = vmax.f32 %v1972, 0.0
  %v1992 = vmax.f32 %v1437, 0.0
  %v1993 = vmax.f32 %v1439, 0.0
  %v1994 = vmax.f32 %v1976, 0.0
  %v1995 = vmax.f32 %v1978, 0.0
  %v1996 = vld [vmem:[%s3] sm:$0xff]
  %v1997 = vld [vmem:[%s3 + $0x8] sm:$0xff]
  %v1998 = vld [vmem:[%s3 + $0x10] sm:$0xff]
  %v1999 = vld [vmem:[%s3 + $0x18] sm:$0xff]
  %v2000 = vld [vmem:[%s3 + $0x20] sm:$0xff]
  %v2001 = vld [vmem:[%s3 + $0x28] sm:$0xff]
  %v2002 = vld [vmem:[%s3 + $0x30] sm:$0xff]
  %v2003 = vld [vmem:[%s3 + $0x38] sm:$0xff]
  %v2004 = vld [vmem:[%s3 + $0x40] sm:$0xff]
  %v2005 = vld [vmem:[%s3 + $0x48] sm:$0xff]
  %v2006 = vld [vmem:[%s3 + $0x50] sm:$0xff]
  %v2007 = vld [vmem:[%s3 + $0x58] sm:$0xff]
  %v2008 = vld [vmem:[%s3 + $0x60] sm:$0xff]
  %v2009 = vld [vmem:[%s3 + $0x68] sm:$0xff]
  %v2010 = vld [vmem:[%s3 + $0x70] sm:$0xff]
  %v2011 = vld [vmem:[%s3 + $0x78] sm:$0xff]
  %v2012 = vld [vmem:[%s3 + $0x80] sm:$0xff]
  %v2013 = vld [vmem:[%s3 + $0x88] sm:$0xff]
  %v2014 = vld [vmem:[%s3 + $0x90] sm:$0xff]
  %v2015 = vld [vmem:[%s3 + $0x98] sm:$0xff]
  %v2016 = vld [vmem:[%s3 + $0xa0] sm:$0xff]
  %v2017 = vld [vmem:[%s3 + $0xa8] sm:$0xff]
  %v2018 = vld [vmem:[%s3 + $0xb0] sm:$0xff]
  %v2019 = vld [vmem:[%s3 + $0xb8] sm:$0xff]
  %v2020 = vld [vmem:[%s3 + $0xc0] sm:$0xff]
  %v2021 = vld [vmem:[%s3 + $0xc8] sm:$0xff]
  %v2022 = vld [vmem:[%s3 + $0xd0] sm:$0xff]
  %v2023 = vld [vmem:[%s3 + $0xd8] sm:$0xff]
  %v2024 = vld [vmem:[%s3 + $0xe0] sm:$0xff]
  %v2025 = vld [vmem:[%s3 + $0xe8] sm:$0xff]
  %v2026 = vld [vmem:[%s3 + $0xf0] sm:$0xff]
  %v2027 = vld [vmem:[%s3 + $0xf8] sm:$0xff]
  %v2028 = vld [vmem:[%s3 + $0x100] sm:$0xff]
  %v2029 = vld [vmem:[%s3 + $0x108] sm:$0xff]
  %v2030 = vld [vmem:[%s3 + $0x110] sm:$0xff]
  %v2031 = vld [vmem:[%s3 + $0x118] sm:$0xff]
  %v2032 = vld [vmem:[%s3 + $0x120] sm:$0xff]
  %v2033 = vld [vmem:[%s3 + $0x128] sm:$0xff]
  %v2034 = vld [vmem:[%s3 + $0x130] sm:$0xff]
  %v2035 = vld [vmem:[%s3 + $0x138] sm:$0xff]
  %v2036 = vld [vmem:[%s3 + $0x140] sm:$0xff]
  %v2037 = vld [vmem:[%s3 + $0x148] sm:$0xff]
  %v2038 = vld [vmem:[%s3 + $0x150] sm:$0xff]
  %v2039 = vld [vmem:[%s3 + $0x158] sm:$0xff]
  %v2040 = vld [vmem:[%s3 + $0x160] sm:$0xff]
  %v2041 = vld [vmem:[%s3 + $0x168] sm:$0xff]
  %v2042 = vld [vmem:[%s3 + $0x170] sm:$0xff]
  %v2043 = vld [vmem:[%s3 + $0x178] sm:$0xff]
  %v2044 = vld [vmem:[%s3 + $0x180] sm:$0xff]
  %v2045 = vld [vmem:[%s3 + $0x188] sm:$0xff]
  %v2046 = vld [vmem:[%s3 + $0x190] sm:$0xff]
  %v2047 = vld [vmem:[%s3 + $0x198] sm:$0xff]
  %v2048 = vld [vmem:[%s3 + $0x1a0] sm:$0xff]
  %v2049 = vld [vmem:[%s3 + $0x1a8] sm:$0xff]
  %v2050 = vld [vmem:[%s3 + $0x1b0] sm:$0xff]
  %v2051 = vld [vmem:[%s3 + $0x1b8] sm:$0xff]
  %v2052 = vld [vmem:[%s3 + $0x1c0] sm:$0xff]
  %v2053 = vld [vmem:[%s3 + $0x1c8] sm:$0xff]
  %v2054 = vld [vmem:[%s3 + $0x1d0] sm:$0xff]
  %v2055 = vld [vmem:[%s3 + $0x1d8] sm:$0xff]
  %v2056 = vld [vmem:[%s3 + $0x1e0] sm:$0xff]
  %v2057 = vld [vmem:[%s3 + $0x1e8] sm:$0xff]
  %v2058 = vld [vmem:[%s3 + $0x1f0] sm:$0xff]
  %v2059 = vld [vmem:[%s3 + $0x1f8] sm:$0xff]
  %v2060 = vld [vmem:[%s4] sm:$0x1]
  %v2062 = vlaneseq
  %v2063 = vshrl.u32 %v2062, 7
  %v2064 = vsub.s32 0, %v2063
  %v2065 = vrot.slane %v2060, %v2064
  %2067 = vmatprep.subr.mxu0 0.0
  %2068 = vmatpush1.msra.mxu0 %v2011
  %2069 = vmatprep.subr.mxu0 0.0
  %2070 = vmatpush1.msra.mxu0 %v2010
  %2071 = vmatprep.subr.mxu0 0.0
  %2072 = vmatpush1.msra.mxu0 %v2009
  %2073 = vmatprep.subr.mxu0 0.0
  %2074 = vmatpush1.msra.mxu0 %v2008
  %2075 = vmatprep.subr.mxu0 0.0
  %2076 = vmatpush1.msra.mxu0 %v2007
  %2077 = vmatprep.subr.mxu0 0.0
  %2078 = vmatpush1.msra.mxu0 %v2006
  %2079 = vmatprep.subr.mxu0 0.0
  %2080 = vmatpush1.msra.mxu0 %v2005
  %2081 = vmatprep.subr.mxu0 0.0
  %2082 = vmatpush1.msra.mxu0 %v2004
  %2083 = vmatprep.subr.mxu0 0.0
  %2084 = vmatpush1.msra.mxu0 %v2003
  %2085 = vmatprep.subr.mxu0 0.0
  %2086 = vmatpush1.msra.mxu0 %v2002
  %2087 = vmatprep.subr.mxu0 0.0
  %2088 = vmatpush1.msra.mxu0 %v2001
  %2089 = vmatprep.subr.mxu0 0.0
  %2090 = vmatpush1.msra.mxu0 %v2000
  %2091 = vmatprep.subr.mxu0 0.0
  %2092 = vmatpush1.msra.mxu0 %v1999
  %2093 = vmatprep.subr.mxu0 0.0
  %2094 = vmatpush1.msra.mxu0 %v1998
  %2095 = vmatprep.subr.mxu0 0.0
  %2096 = vmatpush1.msra.mxu0 %v1997
  %2097 = vmatprep.subr.mxu0 0.0
  %2098 = vmatpush1.msra.mxu0 %v1996
  %2099 = vmatprep.subr.mxu0 0.0
  %2100 = vmatpush2.msra.mxu0 %v2027
  %2101 = vmatprep.subr.mxu0 0.0
  %2102 = vmatpush2.msra.mxu0 %v2026
  %2103 = vmatprep.subr.mxu0 0.0
  %2104 = vmatpush2.msra.mxu0 %v2025
  %2105 = vmatprep.subr.mxu0 0.0
  %2106 = vmatpush2.msra.mxu0 %v2024
  %2107 = vmatprep.subr.mxu0 0.0
  %2108 = vmatpush2.msra.mxu0 %v2023
  %2109 = vmatprep.subr.mxu0 0.0
  %2110 = vmatpush2.msra.mxu0 %v2022
  %2111 = vmatprep.subr.mxu0 0.0
  %2112 = vmatpush2.msra.mxu0 %v2021
  %2113 = vmatprep.subr.mxu0 0.0
  %2114 = vmatpush2.msra.mxu0 %v2020
  %2115 = vmatprep.subr.mxu0 0.0
  %2116 = vmatpush2.msra.mxu0 %v2019
  %2117 = vmatprep.subr.mxu0 0.0
  %2118 = vmatpush2.msra.mxu0 %v2018
  %2119 = vmatprep.subr.mxu0 0.0
  %2120 = vmatpush2.msra.mxu0 %v2017
  %2121 = vmatprep.subr.mxu0 0.0
  %2122 = vmatpush2.msra.mxu0 %v2016
  %2123 = vmatprep.subr.mxu0 0.0
  %2124 = vmatpush2.msra.mxu0 %v2015
  %2125 = vmatprep.subr.mxu0 0.0
  %2126 = vmatpush2.msra.mxu0 %v2014
  %2127 = vmatprep.subr.mxu0 0.0
  %2128 = vmatpush2.msra.mxu0 %v2013
  %2129 = vmatprep.subr.mxu0 0.0
  %2130 = vmatpush2.msra.mxu0 %v2012
  %2131 = vmatprep.mubr.f32.mxu0 %v1989
  %2132 = vmatmul.mubr.f32.gmra.mxu0 %v1988
  %v2133 = vpop.f32.mrf.mxu0
  %v2134 = vadd.f32 %v2065, %v2133
  %v2135 = vpop.f32.mrf.mxu0
  %2136 = vmatprep.mubr.f32.mxu0 %v1993
  %2137 = vmatmul.mubr.f32.gmra.mxu0 %v1992
  %v2138 = vpop.f32.mrf.mxu0
  %v2139 = vadd.f32 %v2065, %v2138
  %v2140 = vpop.f32.mrf.mxu0
  %2141 = vdwg.mxu0
  %2142 = vmatprep.subr.mxu0 0.0
  %2143 = vmatpush1.msra.mxu0 %v2043
  %2144 = vmatprep.subr.mxu0 0.0
  %2145 = vmatpush1.msra.mxu0 %v2042
  %2146 = vmatprep.subr.mxu0 0.0
  %2147 = vmatpush1.msra.mxu0 %v2041
  %2148 = vmatprep.subr.mxu0 0.0
  %2149 = vmatpush1.msra.mxu0 %v2040
  %2150 = vmatprep.subr.mxu0 0.0
  %2151 = vmatpush1.msra.mxu0 %v2039
  %2152 = vmatprep.subr.mxu0 0.0
  %2153 = vmatpush1.msra.mxu0 %v2038
  %2154 = vmatprep.subr.mxu0 0.0
  %2155 = vmatpush1.msra.mxu0 %v2037
  %2156 = vmatprep.subr.mxu0 0.0
  %2157 = vmatpush1.msra.mxu0 %v2036
  %2158 = vmatprep.subr.mxu0 0.0
  %2159 = vmatpush1.msra.mxu0 %v2035
  %2160 = vmatprep.subr.mxu0 0.0
  %2161 = vmatpush1.msra.mxu0 %v2034
  %2162 = vmatprep.subr.mxu0 0.0
  %2163 = vmatpush1.msra.mxu0 %v2033
  %2164 = vmatprep.subr.mxu0 0.0
  %2165 = vmatpush1.msra.mxu0 %v2032
  %2166 = vmatprep.subr.mxu0 0.0
  %2167 = vmatpush1.msra.mxu0 %v2031
  %2168 = vmatprep.subr.mxu0 0.0
  %2169 = vmatpush1.msra.mxu0 %v2030
  %2170 = vmatprep.subr.mxu0 0.0
  %2171 = vmatpush1.msra.mxu0 %v2029
  %2172 = vmatprep.subr.mxu0 0.0
  %2173 = vmatpush1.msra.mxu0 %v2028
  %2174 = vmatprep.subr.mxu0 0.0
  %2175 = vmatpush2.msra.mxu0 %v2059
  %2176 = vmatprep.subr.mxu0 0.0
  %2177 = vmatpush2.msra.mxu0 %v2058
  %2178 = vmatprep.subr.mxu0 0.0
  %2179 = vmatpush2.msra.mxu0 %v2057
  %2180 = vmatprep.subr.mxu0 0.0
  %2181 = vmatpush2.msra.mxu0 %v2056
  %2182 = vmatprep.subr.mxu0 0.0
  %2183 = vmatpush2.msra.mxu0 %v2055
  %2184 = vmatprep.subr.mxu0 0.0
  %2185 = vmatpush2.msra.mxu0 %v2054
  %2186 = vmatprep.subr.mxu0 0.0
  %2187 = vmatpush2.msra.mxu0 %v2053
  %2188 = vmatprep.subr.mxu0 0.0
  %2189 = vmatpush2.msra.mxu0 %v2052
  %2190 = vmatprep.subr.mxu0 0.0
  %2191 = vmatpush2.msra.mxu0 %v2051
  %2192 = vmatprep.subr.mxu0 0.0
  %2193 = vmatpush2.msra.mxu0 %v2050
  %2194 = vmatprep.subr.mxu0 0.0
  %2195 = vmatpush2.msra.mxu0 %v2049
  %2196 = vmatprep.subr.mxu0 0.0
  %2197 = vmatpush2.msra.mxu0 %v2048
  %2198 = vmatprep.subr.mxu0 0.0
  %2199 = vmatpush2.msra.mxu0 %v2047
  %2200 = vmatprep.subr.mxu0 0.0
  %2201 = vmatpush2.msra.mxu0 %v2046
  %2202 = vmatprep.subr.mxu0 0.0
  %2203 = vmatpush2.msra.mxu0 %v2045
  %2204 = vmatprep.subr.mxu0 0.0
  %2205 = vmatpush2.msra.mxu0 %v2044
  %2206 = vmatprep.mubr.f32.mxu0 %v1991
  %2207 = vmatmul.mubr.f32.gmra.mxu0 %v1990
  %v2208 = vpop.f32.mrf.mxu0
  %v2209 = vadd.f32 %v2134, %v2208
  %v2210 = vpop.f32.mrf.mxu0
  %2211 = vmatprep.mubr.f32.mxu0 %v1995
  %2212 = vmatmul.mubr.f32.gmra.mxu0 %v1994
  %v2213 = vpop.f32.mrf.mxu0
  %v2214 = vadd.f32 %v2139, %v2213
  %v2215 = vpop.f32.mrf.mxu0
  %2216 = vdwg.mxu0
  %2217 = vst [vmem:[%s6] sm:$0xff] %v2209
  %2218 = vst [vmem:[%s6 + $0x8] sm:$0xff] %v2214
  // Predicated region
  $region22: #{convnet_forward.7} parent=0 // pred_check
    _
  $region23: #{convnet_forward.7} parent=0 // pred_check_branch
    %2220 = sbr.rel (0) target = $region25
  $region24: #{convnet_forward.7} parent=0 // pred_region
    _
  $region25: #{convnet_forward.7} parent=0 // pred_fallthru
    _
  // Predicated region
  $region26: #{convnet_forward.7} parent=0 // pred_check
    _
  $region27: #{convnet_forward.7} parent=0 // pred_check_branch
    %2222 = sbr.rel (0) target = $region29
  $region28: #{convnet_forward.7} parent=0 // pred_region
    _
  $region29: #{convnet_forward.7} parent=0 // pred_fallthru
    _
  // Predicated region
  $region30: #{convnet_forward.7} parent=0 // pred_check
    _
  $region31: #{convnet_forward.7} parent=0 // pred_check_branch
    %2224 = sbr.rel (0) target = $region33
  $region32: #{convnet_forward.7} parent=0 // pred_region
    _
  $region33: #{convnet_forward.7} parent=0 // pred_fallthru
    _
  // Predicated region
  $region34: #{convnet_forward.7} parent=0 // pred_check
    _
  $region35: #{convnet_forward.7} parent=0 // pred_check_branch
    %2226 = sbr.rel (0) target = $region37
  $region36: #{convnet_forward.7} parent=0 // pred_region
    _
  $region37: #{convnet_forward.7} parent=0 // pred_fallthru
    _

</llo_original>
